<compile_context>
chip_gen: v5e
topology: v5e:2x2
jax: 0.10.0
libtpu: 0.0.40
codegen_flags: <defaults>
</compile_context>

<pallas_src>
import jax
import jax.numpy as jnp
from jax.experimental import pallas as pl
from jax.experimental.pallas import tpu as pltpu


# ----------------------------- model config ---------------------------------
NUM_NODES = 8                               # len(nx_graph.nodes)
NUM_FEATURES = 4                            # len(nx_graph.nodes[0])
LIN0_IN = NUM_NODES * (1 + NUM_FEATURES)    # 8 * 5 = 40
K_PAD = 128                                 # padded first-layer contraction dim
H0, H1, H2 = 512, 1024, 128                 # hidden sizes (lin_0, lin_1, lin_2)
N_SUB = 2                                   # row sub-chunks per tile (MXU/EUP overlap)


# ------------------------------ Pallas kernel --------------------------------
def _critic_kernel(x_ref,
                   w0_ref, b0_ref,
                   w1_ref, b1_ref,
                   w2_ref, b2_ref,
                   wf_ref, bf_ref,
                   out_ref):
    # x_ref: (TILE_R, K_PAD) bf16 (zero cols 40..127); out_ref: (TILE_R, 1) f32
    tile_r = x_ref.shape[0]
    sub = tile_r // N_SUB

    w0, w1, w2, wf = w0_ref[...], w1_ref[...], w2_ref[...], wf_ref[...]
    b0, b1, b2 = b0_ref[...], b1_ref[...], b2_ref[...]
    b_tail = bf_ref[0, 0]

    # Static unroll over independent row sub-chunks: the VLIW scheduler can run
    # sub-chunk c+1's matmuls (MXU slot) under sub-chunk c's tanh (EUP slot).
    for c in range(N_SUB):
        rs = pl.ds(c * sub, sub)

        # dqn_lin_0 + ReLU
        h = jnp.dot(x_ref[rs, :], w0,
                    preferred_element_type=jnp.float32) + b0
        h = jnp.maximum(h, 0.0)

        # dqn_lin_1 + sigmoid (single EUP tanh pass: sigmoid(x)=0.5*tanh(x/2)+0.5)
        h = jnp.dot(h.astype(jnp.bfloat16), w1,
                    preferred_element_type=jnp.float32) + b1
        h = 0.5 * jnp.tanh(0.5 * h) + 0.5

        # dqn_lin_2 + ReLU
        h = jnp.dot(h.astype(jnp.bfloat16), w2,
                    preferred_element_type=jnp.float32) + b2
        h = jnp.maximum(h, 0.0)                                  # (sub, H2) f32

        # folded tail (dqn_lin_3 @ dqn_lin_4 @ dqn_lin_out): (sub, H2)@(H2, 1)
        v = jnp.dot(h.astype(jnp.bfloat16), wf,
                    preferred_element_type=jnp.float32)
        out_ref[rs, :] = v + b_tail


# ------------------------------ tile selection -------------------------------
def _select_tile_r(rows: int) -> int:
    """Batch-aware row-tile size.

    * Large row counts -> bigger tiles to amortize the ~0.35us per-grid-step
      overhead (matters most on single-TC v5e/v6e).
    * Moderate row counts -> keep >= 2 grid steps so both of v7x's TensorCores
      get work via the "parallel" grid axis.
    * Tiny row counts -> a single small tile.
    """
    for tile in (1024, 512, 256, 128):
        if rows >= 2 * tile:
            return tile
    return 128


# ------------------------------ wrapper --------------------------------------
@jax.jit
def critic_forward(critic_input, params):
    """critic_input: (batch, num_nodes, 1 + num_features) float32."""
    batch = critic_input.shape[0]
    x2d = critic_input.reshape(-1, LIN0_IN)
    rows = x2d.shape[0]
    tile_r = _select_tile_r(rows)
    num_tiles = pl.cdiv(rows, tile_r)

    # Single fused cast+pad: only the contraction dim is padded 40 -> 128.
    # No row padding: Pallas masks the partial last row tile; garbage rows in
    # the edge block only produce garbage in output rows that are dropped.
    x_pad = jnp.pad(x2d.astype(jnp.bfloat16), ((0, 0), (0, K_PAD - LIN0_IN)))

    w0 = jnp.pad(params["w0"].astype(jnp.bfloat16),
                 ((0, K_PAD - LIN0_IN), (0, 0)))                  # (K_PAD, H0)
    w1 = params["w1"].astype(jnp.bfloat16)                        # (H0, H1)
    w2 = params["w2"].astype(jnp.bfloat16)                        # (H1, H2)
    b0 = params["b0"].astype(jnp.float32)                         # (1, H0)
    b1 = params["b1"].astype(jnp.float32)                         # (1, H1)
    b2 = params["b2"].astype(jnp.float32)                         # (1, H2)

    # Fold lin_3 (128->1), lin_4 (1->1), lin_out (1->1) into one vector + scalar.
    w_fold = params["w3"] @ params["w4"] @ params["wo"]                       # (H2, 1)
    b_fold = (params["b3"] @ params["w4"] + params["b4"]) @ params["wo"] \
        + params["bo"]                                                        # (1, 1)
    wf = w_fold.astype(jnp.bfloat16)                                          # (H2, 1)
    bf = b_fold.astype(jnp.float32)                                           # (1, 1)

    const2 = lambda r: (0, 0)   # weights/biases: DMA'd once, resident across grid

    rows_work = num_tiles * tile_r
    flops = 2 * rows_work * (K_PAD * H0 + H0 * H1 + H1 * H2 + H2)
    bytes_accessed = (x_pad.size * 2
                      + (w0.size + w1.size + w2.size + wf.size) * 2
                      + (b0.size + b1.size + b2.size + 1) * 4
                      + rows * 4)

    out = pl.pallas_call(
        _critic_kernel,
        out_shape=jax.ShapeDtypeStruct((rows, 1), jnp.float32),
        grid=(num_tiles,),
        in_specs=[
            pl.BlockSpec((tile_r, K_PAD), lambda r: (r, 0)),     # x row tile
            pl.BlockSpec((K_PAD, H0), const2),                   # w0
            pl.BlockSpec((1, H0), const2),                       # b0
            pl.BlockSpec((H0, H1), const2),                      # w1
            pl.BlockSpec((1, H1), const2),                       # b1
            pl.BlockSpec((H1, H2), const2),                      # w2
            pl.BlockSpec((1, H2), const2),                       # b2
            pl.BlockSpec((H2, 1), const2),                       # folded tail weight
            pl.BlockSpec(memory_space=pltpu.MemorySpace.SMEM),   # folded tail bias
        ],
        out_specs=pl.BlockSpec((tile_r, 1), lambda r: (r, 0)),
        compiler_params=pltpu.CompilerParams(
            dimension_semantics=("parallel",),
            vmem_limit_bytes=32 * 1024 * 1024,
        ),
        cost_estimate=pl.CostEstimate(
            flops=flops,
            transcendentals=rows_work * H1,   # one tanh per (row, H1) element
            bytes_accessed=bytes_accessed,
        ),
    )(x_pad, w0, b0, w1, b1, w2, b2, wf, bf)

    return out.reshape(batch, -1, 1)


# --------------------------- parameter init ----------------------------------
def _linear_params(key, fan_in, fan_out):
    """torch.nn.Linear-style init, stored as (in, out) / (1, out)."""
    kw, kb = jax.random.split(key)
    bound = 1.0 / jnp.sqrt(jnp.float32(fan_in))
    w = jax.random.uniform(kw, (fan_in, fan_out), jnp.float32, -bound, bound)
    b = jax.random.uniform(kb, (1, fan_out), jnp.float32, -bound, bound)
    return w, b


def init_params(key):
    keys = jax.random.split(key, 6)
    w0, b0 = _linear_params(keys[0], LIN0_IN, H0)
    w1, b1 = _linear_params(keys[1], H0, H1)
    w2, b2 = _linear_params(keys[2], H1, H2)
    w3, b3 = _linear_params(keys[3], H2, 1)
    w4, b4 = _linear_params(keys[4], 1, 1)
    wo, bo = _linear_params(keys[5], 1, 1)
    return dict(w0=w0, b0=b0, w1=w1, b1=b1, w2=w2, b2=b2,
                w3=w3, b3=b3, w4=w4, b4=b4, wo=wo, bo=bo)


# ------------------------------ reference ------------------------------------
def critic_forward_ref(critic_input, params):
    batch = critic_input.shape[0]
    x = critic_input.reshape(-1, LIN0_IN).astype(jnp.float32)
    h = jax.nn.relu(x @ params["w0"] + params["b0"])
    h = jax.nn.sigmoid(h @ params["w1"] + params["b1"])
    h = jax.nn.relu(h @ params["w2"] + params["b2"])
    h = h @ params["w3"] + params["b3"]
    h = h @ params["w4"] + params["b4"]
    h = h @ params["wo"] + params["bo"]
    return h.reshape(batch, -1, 1)


# --------------------------------- main ---------------------------------------
if __name__ == "__main__":
    key = jax.random.PRNGKey(0)
    k_in, k_in2, k_par = jax.random.split(key, 3)
    params = init_params(k_par)

    # Small shape consistent with the module (single, partial row tile).
    batch = 2
    x = jax.random.normal(k_in, (batch, NUM_NODES, 1 + NUM_FEATURES), jnp.float32)
    values = jax.block_until_ready(critic_forward(x, params))
    ref = critic_forward_ref(x, params)
    assert values.shape == (batch, 1, 1), values.shape
    # Tolerance covers bf16 MXU inputs (f32 accumulation).
    assert jnp.allclose(values, ref, atol=2e-2, rtol=2e-2), (
        f"max abs err {jnp.max(jnp.abs(values - ref))}")

    # Exercise the multi-tile path with a partial last tile.
    batch2 = 700
    x2 = jax.random.normal(k_in2, (batch2, NUM_NODES, 1 + NUM_FEATURES), jnp.float32)
    v2 = jax.block_until_ready(critic_forward(x2, params))
    r2 = critic_forward_ref(x2, params)
    assert v2.shape == (batch2, 1, 1), v2.shape
    assert jnp.allclose(v2, r2, atol=2e-2, rtol=2e-2), (
        f"max abs err {jnp.max(jnp.abs(v2 - r2))}")

    print("KERNEL_OK")
</pallas_src>

<mosaic_0001>
module attributes {stable_mosaic.version = 11 : i64} {
  func.func @_critic_kernel(%arg0: i32, %arg1: memref<128x128xbf16, #tpu.memory_space<vmem>>, %arg2: memref<128x512xbf16, #tpu.memory_space<vmem>>, %arg3: memref<1x512xf32, #tpu.memory_space<vmem>>, %arg4: memref<512x1024xbf16, #tpu.memory_space<vmem>>, %arg5: memref<1x1024xf32, #tpu.memory_space<vmem>>, %arg6: memref<1024x128xbf16, #tpu.memory_space<vmem>>, %arg7: memref<1x128xf32, #tpu.memory_space<vmem>>, %arg8: memref<128x1xbf16, #tpu.memory_space<vmem>>, %arg9: memref<1x1xf32, #tpu.memory_space<smem>>, %arg10: memref<128x1xf32, #tpu.memory_space<vmem>>) attributes {dimension_semantics = [#tpu.dimension_semantics<parallel>], iteration_bounds = array<i64: 1>, scalar_prefetch = 0 : i64, scratch_operands = 0 : i64, tpu.core_type = #tpu.core_type<tc>, window_params = [{transform_indices = @transform_0, window_bounds = array<i64: 128, 128>}, {pipeline_mode = #tpu.pipeline_mode<synchronous>, transform_indices = @transform_1, window_bounds = array<i64: 128, 512>}, {pipeline_mode = #tpu.pipeline_mode<synchronous>, transform_indices = @transform_2, window_bounds = array<i64: 1, 512>}, {pipeline_mode = #tpu.pipeline_mode<synchronous>, transform_indices = @transform_3, window_bounds = array<i64: 512, 1024>}, {pipeline_mode = #tpu.pipeline_mode<synchronous>, transform_indices = @transform_4, window_bounds = array<i64: 1, 1024>}, {pipeline_mode = #tpu.pipeline_mode<synchronous>, transform_indices = @transform_5, window_bounds = array<i64: 1024, 128>}, {pipeline_mode = #tpu.pipeline_mode<synchronous>, transform_indices = @transform_6, window_bounds = array<i64: 1, 128>}, {pipeline_mode = #tpu.pipeline_mode<synchronous>, transform_indices = @transform_7, window_bounds = array<i64: 128, 1>}, {transform_indices = @transform_8, window_bounds = array<i64: 1, 1>}, {transform_indices = @transform_9, window_bounds = array<i64: 128, 1>}]} {
    %c0 = arith.constant 0 : index
    %c0_0 = arith.constant 0 : index
    %0 = vector.load %arg2[%c0, %c0_0] : memref<128x512xbf16, #tpu.memory_space<vmem>>, vector<128x512xbf16>
    %c0_1 = arith.constant 0 : index
    %c0_2 = arith.constant 0 : index
    %1 = vector.load %arg4[%c0_1, %c0_2] : memref<512x1024xbf16, #tpu.memory_space<vmem>>, vector<512x1024xbf16>
    %c0_3 = arith.constant 0 : index
    %c0_4 = arith.constant 0 : index
    %2 = vector.load %arg6[%c0_3, %c0_4] : memref<1024x128xbf16, #tpu.memory_space<vmem>>, vector<1024x128xbf16>
    %c0_5 = arith.constant 0 : index
    %c0_6 = arith.constant 0 : index
    %3 = vector.load %arg8[%c0_5, %c0_6] : memref<128x1xbf16, #tpu.memory_space<vmem>>, vector<128x1xbf16>
    %c0_7 = arith.constant 0 : index
    %c0_8 = arith.constant 0 : index
    %4 = vector.load %arg3[%c0_7, %c0_8] : memref<1x512xf32, #tpu.memory_space<vmem>>, vector<1x512xf32>
    %c0_9 = arith.constant 0 : index
    %c0_10 = arith.constant 0 : index
    %5 = vector.load %arg5[%c0_9, %c0_10] : memref<1x1024xf32, #tpu.memory_space<vmem>>, vector<1x1024xf32>
    %c0_11 = arith.constant 0 : index
    %c0_12 = arith.constant 0 : index
    %6 = vector.load %arg7[%c0_11, %c0_12] : memref<1x128xf32, #tpu.memory_space<vmem>>, vector<1x128xf32>
    %c0_13 = arith.constant 0 : index
    %c0_14 = arith.constant 0 : index
    %7 = memref.load %arg9[%c0_13, %c0_14] : memref<1x1xf32, #tpu.memory_space<smem>>
    %c0_15 = arith.constant 0 : index
    %c0_16 = arith.constant 0 : index
    %8 = vector.load %arg1[%c0_15, %c0_16] : memref<128x128xbf16, #tpu.memory_space<vmem>>, vector<64x128xbf16>
    %cst = arith.constant dense<0.000000e+00> : vector<64x512xf32>
    %9 = tpu.matmul %8, %0, %cst {dimension_numbers = #tpu.dot_dimension_numbers<[1], [0], [0], [1], [0, 0, 1, 1], [], []>} : vector<64x128xbf16>, vector<128x512xbf16>, vector<64x512xf32> -> vector<64x512xf32>
    %10 = vector.broadcast %4 : vector<1x512xf32> to vector<64x512xf32>
    %11 = arith.addf %9, %10 : vector<64x512xf32>
    %cst_17 = arith.constant 0.000000e+00 : f32
    %12 = vector.broadcast %cst_17 : f32 to vector<64x512xf32>
    %13 = arith.maximumf %11, %12 : vector<64x512xf32>
    %14 = arith.truncf %13 : vector<64x512xf32> to vector<64x512xbf16>
    %cst_18 = arith.constant dense<0.000000e+00> : vector<64x1024xf32>
    %15 = tpu.matmul %14, %1, %cst_18 {dimension_numbers = #tpu.dot_dimension_numbers<[1], [0], [0], [1], [0, 0, 1, 1], [], []>} : vector<64x512xbf16>, vector<512x1024xbf16>, vector<64x1024xf32> -> vector<64x1024xf32>
    %16 = vector.broadcast %5 : vector<1x1024xf32> to vector<64x1024xf32>
    %17 = arith.addf %15, %16 : vector<64x1024xf32>
    %cst_19 = arith.constant 5.000000e-01 : f32
    %18 = vector.broadcast %cst_19 : f32 to vector<64x1024xf32>
    %19 = arith.mulf %18, %17 : vector<64x1024xf32>
    %20 = math.tanh %19 : vector<64x1024xf32>
    %cst_20 = arith.constant 5.000000e-01 : f32
    %21 = vector.broadcast %cst_20 : f32 to vector<64x1024xf32>
    %22 = arith.mulf %21, %20 : vector<64x1024xf32>
    %cst_21 = arith.constant 5.000000e-01 : f32
    %23 = vector.broadcast %cst_21 : f32 to vector<64x1024xf32>
    %24 = arith.addf %22, %23 : vector<64x1024xf32>
    %25 = arith.truncf %24 : vector<64x1024xf32> to vector<64x1024xbf16>
    %cst_22 = arith.constant dense<0.000000e+00> : vector<64x128xf32>
    %26 = tpu.matmul %25, %2, %cst_22 {dimension_numbers = #tpu.dot_dimension_numbers<[1], [0], [0], [1], [0, 0, 1, 1], [], []>} : vector<64x1024xbf16>, vector<1024x128xbf16>, vector<64x128xf32> -> vector<64x128xf32>
    %27 = vector.broadcast %6 : vector<1x128xf32> to vector<64x128xf32>
    %28 = arith.addf %26, %27 : vector<64x128xf32>
    %cst_23 = arith.constant 0.000000e+00 : f32
    %29 = vector.broadcast %cst_23 : f32 to vector<64x128xf32>
    %30 = arith.maximumf %28, %29 : vector<64x128xf32>
    %31 = arith.truncf %30 : vector<64x128xf32> to vector<64x128xbf16>
    %cst_24 = arith.constant dense<0.000000e+00> : vector<64x1xf32>
    %32 = tpu.matmul %31, %3, %cst_24 {dimension_numbers = #tpu.dot_dimension_numbers<[1], [0], [0], [1], [0, 0, 1, 1], [], []>} : vector<64x128xbf16>, vector<128x1xbf16>, vector<64x1xf32> -> vector<64x1xf32>
    %33 = vector.broadcast %7 : f32 to vector<64x1xf32>
    %34 = arith.addf %32, %33 : vector<64x1xf32>
    %c0_25 = arith.constant 0 : index
    %c0_26 = arith.constant 0 : index
    %35 = vector.load %arg10[%c0_25, %c0_26] : memref<128x1xf32, #tpu.memory_space<vmem>>, vector<64x1xf32>
    tpu.vector_store %arg10[%c0_25, %c0_26], %34 {strides = array<i32>} : memref<128x1xf32, #tpu.memory_space<vmem>>, vector<64x1xf32>,
    %c64 = arith.constant 64 : index
    %c0_27 = arith.constant 0 : index
    %36 = vector.load %arg1[%c64, %c0_27] : memref<128x128xbf16, #tpu.memory_space<vmem>>, vector<64x128xbf16>
    %cst_28 = arith.constant dense<0.000000e+00> : vector<64x512xf32>
    %37 = tpu.matmul %36, %0, %cst_28 {dimension_numbers = #tpu.dot_dimension_numbers<[1], [0], [0], [1], [0, 0, 1, 1], [], []>} : vector<64x128xbf16>, vector<128x512xbf16>, vector<64x512xf32> -> vector<64x512xf32>
    %38 = vector.broadcast %4 : vector<1x512xf32> to vector<64x512xf32>
    %39 = arith.addf %37, %38 : vector<64x512xf32>
    %cst_29 = arith.constant 0.000000e+00 : f32
    %40 = vector.broadcast %cst_29 : f32 to vector<64x512xf32>
    %41 = arith.maximumf %39, %40 : vector<64x512xf32>
    %42 = arith.truncf %41 : vector<64x512xf32> to vector<64x512xbf16>
    %cst_30 = arith.constant dense<0.000000e+00> : vector<64x1024xf32>
    %43 = tpu.matmul %42, %1, %cst_30 {dimension_numbers = #tpu.dot_dimension_numbers<[1], [0], [0], [1], [0, 0, 1, 1], [], []>} : vector<64x512xbf16>, vector<512x1024xbf16>, vector<64x1024xf32> -> vector<64x1024xf32>
    %44 = vector.broadcast %5 : vector<1x1024xf32> to vector<64x1024xf32>
    %45 = arith.addf %43, %44 : vector<64x1024xf32>
    %cst_31 = arith.constant 5.000000e-01 : f32
    %46 = vector.broadcast %cst_31 : f32 to vector<64x1024xf32>
    %47 = arith.mulf %46, %45 : vector<64x1024xf32>
    %48 = math.tanh %47 : vector<64x1024xf32>
    %cst_32 = arith.constant 5.000000e-01 : f32
    %49 = vector.broadcast %cst_32 : f32 to vector<64x1024xf32>
    %50 = arith.mulf %49, %48 : vector<64x1024xf32>
    %cst_33 = arith.constant 5.000000e-01 : f32
    %51 = vector.broadcast %cst_33 : f32 to vector<64x1024xf32>
    %52 = arith.addf %50, %51 : vector<64x1024xf32>
    %53 = arith.truncf %52 : vector<64x1024xf32> to vector<64x1024xbf16>
    %cst_34 = arith.constant dense<0.000000e+00> : vector<64x128xf32>
    %54 = tpu.matmul %53, %2, %cst_34 {dimension_numbers = #tpu.dot_dimension_numbers<[1], [0], [0], [1], [0, 0, 1, 1], [], []>} : vector<64x1024xbf16>, vector<1024x128xbf16>, vector<64x128xf32> -> vector<64x128xf32>
    %55 = vector.broadcast %6 : vector<1x128xf32> to vector<64x128xf32>
    %56 = arith.addf %54, %55 : vector<64x128xf32>
    %cst_35 = arith.constant 0.000000e+00 : f32
    %57 = vector.broadcast %cst_35 : f32 to vector<64x128xf32>
    %58 = arith.maximumf %56, %57 : vector<64x128xf32>
    %59 = arith.truncf %58 : vector<64x128xf32> to vector<64x128xbf16>
    %cst_36 = arith.constant dense<0.000000e+00> : vector<64x1xf32>
    %60 = tpu.matmul %59, %3, %cst_36 {dimension_numbers = #tpu.dot_dimension_numbers<[1], [0], [0], [1], [0, 0, 1, 1], [], []>} : vector<64x128xbf16>, vector<128x1xbf16>, vector<64x1xf32> -> vector<64x1xf32>
    %61 = vector.broadcast %7 : f32 to vector<64x1xf32>
    %62 = arith.addf %60, %61 : vector<64x1xf32>
    %c64_37 = arith.constant 64 : index
    %c0_38 = arith.constant 0 : index
    %63 = vector.load %arg10[%c64_37, %c0_38] : memref<128x1xf32, #tpu.memory_space<vmem>>, vector<64x1xf32>
    tpu.vector_store %arg10[%c64_37, %c0_38], %62 {strides = array<i32>} : memref<128x1xf32, #tpu.memory_space<vmem>>, vector<64x1xf32>,
    return
  }
  func.func @transform_0(%arg0: i32) -> (i32, i32) {
    %c0_i32 = arith.constant 0 : i32
    %c0_i32_0 = arith.constant 0 : i32
    return %arg0, %c0_i32 : i32, i32
  }
  func.func @transform_1(%arg0: i32) -> (i32, i32) {
    %c0_i32 = arith.constant 0 : i32
    %c0_i32_0 = arith.constant 0 : i32
    %c0_i32_1 = arith.constant 0 : i32
    return %c0_i32, %c0_i32_0 : i32, i32
  }
  func.func @transform_2(%arg0: i32) -> (i32, i32) {
    %c0_i32 = arith.constant 0 : i32
    %c0_i32_0 = arith.constant 0 : i32
    %c0_i32_1 = arith.constant 0 : i32
    return %c0_i32, %c0_i32_0 : i32, i32
  }
  func.func @transform_3(%arg0: i32) -> (i32, i32) {
    %c0_i32 = arith.constant 0 : i32
    %c0_i32_0 = arith.constant 0 : i32
    %c0_i32_1 = arith.constant 0 : i32
    return %c0_i32, %c0_i32_0 : i32, i32
  }
  func.func @transform_4(%arg0: i32) -> (i32, i32) {
    %c0_i32 = arith.constant 0 : i32
    %c0_i32_0 = arith.constant 0 : i32
    %c0_i32_1 = arith.constant 0 : i32
    return %c0_i32, %c0_i32_0 : i32, i32
  }
  func.func @transform_5(%arg0: i32) -> (i32, i32) {
    %c0_i32 = arith.constant 0 : i32
    %c0_i32_0 = arith.constant 0 : i32
    %c0_i32_1 = arith.constant 0 : i32
    return %c0_i32, %c0_i32_0 : i32, i32
  }
  func.func @transform_6(%arg0: i32) -> (i32, i32) {
    %c0_i32 = arith.constant 0 : i32
    %c0_i32_0 = arith.constant 0 : i32
    %c0_i32_1 = arith.constant 0 : i32
    return %c0_i32, %c0_i32_0 : i32, i32
  }
  func.func @transform_7(%arg0: i32) -> (i32, i32) {
    %c0_i32 = arith.constant 0 : i32
    %c0_i32_0 = arith.constant 0 : i32
    %c0_i32_1 = arith.constant 0 : i32
    return %c0_i32, %c0_i32_0 : i32, i32
  }
  func.func @transform_8(%arg0: i32) -> (i32, i32) {
    %c0_i32 = arith.constant 0 : i32
    %c0_i32_0 = arith.constant 0 : i32
    %c0_i32_1 = arith.constant 0 : i32
    return %c0_i32, %c0_i32_0 : i32, i32
  }
  func.func @transform_9(%arg0: i32) -> (i32, i32) {
    %c0_i32 = arith.constant 0 : i32
    %c0_i32_0 = arith.constant 0 : i32
    return %arg0, %c0_i32 : i32, i32
  }
}

</mosaic_0001>

<llo_original>
// kernel: critic_forward.1
$region0: #{critic_forward.1}
  #allocation0 [shape = 'u32[]', space=smem, size = 0x4, offset = 0x4, fixed_abs, tag = 'smem constant byte address 0x4 - core index']
  #allocation1 [shape = 'u32[72,128]{1,0:T(1,128)}', space=vmem, size = 0x9000, scoped, tag = 'internal scratch']
  #allocation2 [shape = 'f32[1,1]{1,0:T(1,128)S(6)}', space=smem, size = 0x200, scoped, tag = 'scoped memory for critic_forward.1']
  %s0 = inlined_call_operand.vmem [shape: bf16[2,128], index: 0, kind: input, shape index: {}]
  %s1 = inlined_call_operand.vmem [shape: bf16[128,512], index: 1, kind: input, shape index: {}]
  %s2 = inlined_call_operand.vmem [shape: f32[1,512], index: 2, kind: input, shape index: {}]
  %s3 = inlined_call_operand.vmem [shape: bf16[512,1024], index: 3, kind: input, shape index: {}]
  %s4 = inlined_call_operand.vmem [shape: f32[1,1024], index: 4, kind: input, shape index: {}]
  %s5 = inlined_call_operand.vmem [shape: bf16[1024,128], index: 5, kind: input, shape index: {}]
  %s6 = inlined_call_operand.vmem [shape: f32[1,128], index: 6, kind: input, shape index: {}]
  %s7 = inlined_call_operand.vmem [shape: bf16[128,1], index: 7, kind: input, shape index: {}]
  %s8 = inlined_call_operand.<no memory space> [shape: f32[1,1], index: 8, kind: input, shape index: {}]
  %s9 = inlined_call_operand.vmem [shape: f32[2,1], index: 9, kind: output, shape index: {}]
  %s10 = sld [smem:[#allocation0]]
  $region76: #{critic_forward.1} parent=0
    _
  %s12 = ssub.s32 1, %s10
  %s13 = scalar_select 0, %s12, %s10
  %14 = sst [smem:[#allocation2]] %s8
  $region1: #{critic_forward.1} parent=0
    #allocation3 [shape = 'u8[65536]{0}', space=vmem, size = 0x10000, scoped, tag = 'output window, operand 0, single buffered']
    // Predicated region
    $region2: #{critic_forward.1} parent=1 // pred_check
      _
    $region3: #{critic_forward.1} parent=1 // pred_check_branch
      %16 = sbr.rel (0) target = $region5
    $region4: #{critic_forward.1} parent=1 // pred_region
      _
    $region5: #{critic_forward.1} parent=1 // pred_fallthru
      _
    // Predicated region
    $region6: #{critic_forward.1} parent=1 // pred_check
      _
    $region7: #{critic_forward.1} parent=1 // pred_check_branch
      %18 = sbr.rel (0) target = $region9
    $region8: #{critic_forward.1} parent=1 // pred_region
      _
    $region9: #{critic_forward.1} parent=1 // pred_fallthru
      _
    // Predicated region
    $region10: #{critic_forward.1} parent=1 // pred_check
      _
    $region11: #{critic_forward.1} parent=1 // pred_check_branch
      %20 = sbr.rel (0) target = $region13
    $region12: #{critic_forward.1} parent=1 // pred_region
      _
    $region13: #{critic_forward.1} parent=1 // pred_fallthru
      _
    // Predicated region
    $region14: #{critic_forward.1} parent=1 // pred_check
      _
    $region15: #{critic_forward.1} parent=1 // pred_check_branch
      %22 = sbr.rel (0) target = $region17
    $region16: #{critic_forward.1} parent=1 // pred_region
      _
    $region17: #{critic_forward.1} parent=1 // pred_fallthru
      _
    // Predicated region
    $region18: #{critic_forward.1} parent=1 // pred_check
      _
    $region19: #{critic_forward.1} parent=1 // pred_check_branch
      %24 = sbr.rel (0) target = $region21
    $region20: #{critic_forward.1} parent=1 // pred_region
      _
    $region21: #{critic_forward.1} parent=1 // pred_fallthru
      _
    // Predicated region
    $region22: #{critic_forward.1} parent=1 // pred_check
      _
    $region23: #{critic_forward.1} parent=1 // pred_check_branch
      %26 = sbr.rel (0) target = $region25
    $region24: #{critic_forward.1} parent=1 // pred_region
      _
    $region25: #{critic_forward.1} parent=1 // pred_fallthru
      _
    // Predicated region
    $region26: #{critic_forward.1} parent=1 // pred_check
      _
    $region27: #{critic_forward.1} parent=1 // pred_check_branch
      %28 = sbr.rel (0) target = $region29
    $region28: #{critic_forward.1} parent=1 // pred_region
      _
    $region29: #{critic_forward.1} parent=1 // pred_fallthru
      _
    // Predicated region
    $region30: #{critic_forward.1} parent=1 // pred_check
      _
    $region31: #{critic_forward.1} parent=1 // pred_check_branch
      %30 = sbr.rel (0) target = $region33
    $region32: #{critic_forward.1} parent=1 // pred_region
      _
    $region33: #{critic_forward.1} parent=1 // pred_fallthru
      _
    // Predicated region
    $region34: #{critic_forward.1} parent=1 // pred_check
      _
    $region35: #{critic_forward.1} parent=1 // pred_check_branch
      %32 = sbr.rel (0) target = $region37
    $region36: #{critic_forward.1} parent=1 // pred_region
      _
    $region37: #{critic_forward.1} parent=1 // pred_fallthru
      _
    %v33 = vld [vmem:[%s1] sm:$0xff]
    %v34 = vld [vmem:[%s1 + $0x8] sm:$0xff]
    %v35 = vld [vmem:[%s1 + $0x10] sm:$0xff]
    %v36 = vld [vmem:[%s1 + $0x18] sm:$0xff]
    %v37 = vld [vmem:[%s1 + $0x20] sm:$0xff]
    %v38 = vld [vmem:[%s1 + $0x28] sm:$0xff]
    %v39 = vld [vmem:[%s1 + $0x30] sm:$0xff]
    %v40 = vld [vmem:[%s1 + $0x38] sm:$0xff]
    %v41 = vld [vmem:[%s1 + $0x40] sm:$0xff]
    %v42 = vld [vmem:[%s1 + $0x48] sm:$0xff]
    %v43 = vld [vmem:[%s1 + $0x50] sm:$0xff]
    %v44 = vld [vmem:[%s1 + $0x58] sm:$0xff]
    %v45 = vld [vmem:[%s1 + $0x60] sm:$0xff]
    %v46 = vld [vmem:[%s1 + $0x68] sm:$0xff]
    %v47 = vld [vmem:[%s1 + $0x70] sm:$0xff]
    %v48 = vld [vmem:[%s1 + $0x78] sm:$0xff]
    %v49 = vld [vmem:[%s1 + $0x80] sm:$0xff]
    %v50 = vld [vmem:[%s1 + $0x88] sm:$0xff]
    %v51 = vld [vmem:[%s1 + $0x90] sm:$0xff]
    %v52 = vld [vmem:[%s1 + $0x98] sm:$0xff]
    %v53 = vld [vmem:[%s1 + $0xa0] sm:$0xff]
    %v54 = vld [vmem:[%s1 + $0xa8] sm:$0xff]
    %v55 = vld [vmem:[%s1 + $0xb0] sm:$0xff]
    %v56 = vld [vmem:[%s1 + $0xb8] sm:$0xff]
    %v57 = vld [vmem:[%s1 + $0xc0] sm:$0xff]
    %v58 = vld [vmem:[%s1 + $0xc8] sm:$0xff]
    %v59 = vld [vmem:[%s1 + $0xd0] sm:$0xff]
    %v60 = vld [vmem:[%s1 + $0xd8] sm:$0xff]
    %v61 = vld [vmem:[%s1 + $0xe0] sm:$0xff]
    %v62 = vld [vmem:[%s1 + $0xe8] sm:$0xff]
    %v63 = vld [vmem:[%s1 + $0xf0] sm:$0xff]
    %v64 = vld [vmem:[%s1 + $0xf8] sm:$0xff]
    %v65 = vld [vmem:[%s3] sm:$0xff]
    %v66 = vld [vmem:[%s3 + $0x8] sm:$0xff]
    %v67 = vld [vmem:[%s3 + $0x10] sm:$0xff]
    %v68 = vld [vmem:[%s3 + $0x18] sm:$0xff]
    %v69 = vld [vmem:[%s3 + $0x20] sm:$0xff]
    %v70 = vld [vmem:[%s3 + $0x28] sm:$0xff]
    %v71 = vld [vmem:[%s3 + $0x30] sm:$0xff]
    %v72 = vld [vmem:[%s3 + $0x38] sm:$0xff]
    %v73 = vld [vmem:[%s3 + $0x40] sm:$0xff]
    %v74 = vld [vmem:[%s3 + $0x48] sm:$0xff]
    %v75 = vld [vmem:[%s3 + $0x50] sm:$0xff]
    %v76 = vld [vmem:[%s3 + $0x58] sm:$0xff]
    %v77 = vld [vmem:[%s3 + $0x60] sm:$0xff]
    %v78 = vld [vmem:[%s3 + $0x68] sm:$0xff]
    %v79 = vld [vmem:[%s3 + $0x70] sm:$0xff]
    %v80 = vld [vmem:[%s3 + $0x78] sm:$0xff]
    %v81 = vld [vmem:[%s3 + $0x80] sm:$0xff]
    %v82 = vld [vmem:[%s3 + $0x88] sm:$0xff]
    %v83 = vld [vmem:[%s3 + $0x90] sm:$0xff]
    %v84 = vld [vmem:[%s3 + $0x98] sm:$0xff]
    %v85 = vld [vmem:[%s3 + $0xa0] sm:$0xff]
    %v86 = vld [vmem:[%s3 + $0xa8] sm:$0xff]
    %v87 = vld [vmem:[%s3 + $0xb0] sm:$0xff]
    %v88 = vld [vmem:[%s3 + $0xb8] sm:$0xff]
    %v89 = vld [vmem:[%s3 + $0xc0] sm:$0xff]
    %v90 = vld [vmem:[%s3 + $0xc8] sm:$0xff]
    %v91 = vld [vmem:[%s3 + $0xd0] sm:$0xff]
    %v92 = vld [vmem:[%s3 + $0xd8] sm:$0xff]
    %v93 = vld [vmem:[%s3 + $0xe0] sm:$0xff]
    %v94 = vld [vmem:[%s3 + $0xe8] sm:$0xff]
    %v95 = vld [vmem:[%s3 + $0xf0] sm:$0xff]
    %v96 = vld [vmem:[%s3 + $0xf8] sm:$0xff]
    %v97 = vld [vmem:[%s3 + $0x100] sm:$0xff]
    %v98 = vld [vmem:[%s3 + $0x108] sm:$0xff]
    %v99 = vld [vmem:[%s3 + $0x110] sm:$0xff]
    %v100 = vld [vmem:[%s3 + $0x118] sm:$0xff]
    %v101 = vld [vmem:[%s3 + $0x120] sm:$0xff]
    %v102 = vld [vmem:[%s3 + $0x128] sm:$0xff]
    %v103 = vld [vmem:[%s3 + $0x130] sm:$0xff]
    %v104 = vld [vmem:[%s3 + $0x138] sm:$0xff]
    %v105 = vld [vmem:[%s3 + $0x140] sm:$0xff]
    %v106 = vld [vmem:[%s3 + $0x148] sm:$0xff]
    %v107 = vld [vmem:[%s3 + $0x150] sm:$0xff]
    %v108 = vld [vmem:[%s3 + $0x158] sm:$0xff]
    %v109 = vld [vmem:[%s3 + $0x160] sm:$0xff]
    %v110 = vld [vmem:[%s3 + $0x168] sm:$0xff]
    %v111 = vld [vmem:[%s3 + $0x170] sm:$0xff]
    %v112 = vld [vmem:[%s3 + $0x178] sm:$0xff]
    %v113 = vld [vmem:[%s3 + $0x180] sm:$0xff]
    %v114 = vld [vmem:[%s3 + $0x188] sm:$0xff]
    %v115 = vld [vmem:[%s3 + $0x190] sm:$0xff]
    %v116 = vld [vmem:[%s3 + $0x198] sm:$0xff]
    %v117 = vld [vmem:[%s3 + $0x1a0] sm:$0xff]
    %v118 = vld [vmem:[%s3 + $0x1a8] sm:$0xff]
    %v119 = vld [vmem:[%s3 + $0x1b0] sm:$0xff]
    %v120 = vld [vmem:[%s3 + $0x1b8] sm:$0xff]
    %v121 = vld [vmem:[%s3 + $0x1c0] sm:$0xff]
    %v122 = vld [vmem:[%s3 + $0x1c8] sm:$0xff]
    %v123 = vld [vmem:[%s3 + $0x1d0] sm:$0xff]
    %v124 = vld [vmem:[%s3 + $0x1d8] sm:$0xff]
    %v125 = vld [vmem:[%s3 + $0x1e0] sm:$0xff]
    %v126 = vld [vmem:[%s3 + $0x1e8] sm:$0xff]
    %v127 = vld [vmem:[%s3 + $0x1f0] sm:$0xff]
    %v128 = vld [vmem:[%s3 + $0x1f8] sm:$0xff]
    %v129 = vld [vmem:[%s3 + $0x200] sm:$0xff]
    %v130 = vld [vmem:[%s3 + $0x208] sm:$0xff]
    %v131 = vld [vmem:[%s3 + $0x210] sm:$0xff]
    %v132 = vld [vmem:[%s3 + $0x218] sm:$0xff]
    %v133 = vld [vmem:[%s3 + $0x220] sm:$0xff]
    %v134 = vld [vmem:[%s3 + $0x228] sm:$0xff]
    %v135 = vld [vmem:[%s3 + $0x230] sm:$0xff]
    %v136 = vld [vmem:[%s3 + $0x238] sm:$0xff]
    %v137 = vld [vmem:[%s3 + $0x240] sm:$0xff]
    %v138 = vld [vmem:[%s3 + $0x248] sm:$0xff]
    %v139 = vld [vmem:[%s3 + $0x250] sm:$0xff]
    %v140 = vld [vmem:[%s3 + $0x258] sm:$0xff]
    %v141 = vld [vmem:[%s3 + $0x260] sm:$0xff]
    %v142 = vld [vmem:[%s3 + $0x268] sm:$0xff]
    %v143 = vld [vmem:[%s3 + $0x270] sm:$0xff]
    %v144 = vld [vmem:[%s3 + $0x278] sm:$0xff]
    %v145 = vld [vmem:[%s3 + $0x280] sm:$0xff]
    %v146 = vld [vmem:[%s3 + $0x288] sm:$0xff]
    %v147 = vld [vmem:[%s3 + $0x290] sm:$0xff]
    %v148 = vld [vmem:[%s3 + $0x298] sm:$0xff]
    %v149 = vld [vmem:[%s3 + $0x2a0] sm:$0xff]
    %v150 = vld [vmem:[%s3 + $0x2a8] sm:$0xff]
    %v151 = vld [vmem:[%s3 + $0x2b0] sm:$0xff]
    %v152 = vld [vmem:[%s3 + $0x2b8] sm:$0xff]
    %v153 = vld [vmem:[%s3 + $0x2c0] sm:$0xff]
    %v154 = vld [vmem:[%s3 + $0x2c8] sm:$0xff]
    %v155 = vld [vmem:[%s3 + $0x2d0] sm:$0xff]
    %v156 = vld [vmem:[%s3 + $0x2d8] sm:$0xff]
    %v157 = vld [vmem:[%s3 + $0x2e0] sm:$0xff]
    %v158 = vld [vmem:[%s3 + $0x2e8] sm:$0xff]
    %v159 = vld [vmem:[%s3 + $0x2f0] sm:$0xff]
    %v160 = vld [vmem:[%s3 + $0x2f8] sm:$0xff]
    %v161 = vld [vmem:[%s3 + $0x300] sm:$0xff]
    %v162 = vld [vmem:[%s3 + $0x308] sm:$0xff]
    %v163 = vld [vmem:[%s3 + $0x310] sm:$0xff]
    %v164 = vld [vmem:[%s3 + $0x318] sm:$0xff]
    %v165 = vld [vmem:[%s3 + $0x320] sm:$0xff]
    %v166 = vld [vmem:[%s3 + $0x328] sm:$0xff]
    %v167 = vld [vmem:[%s3 + $0x330] sm:$0xff]
    %v168 = vld [vmem:[%s3 + $0x338] sm:$0xff]
    %v169 = vld [vmem:[%s3 + $0x340] sm:$0xff]
    %v170 = vld [vmem:[%s3 + $0x348] sm:$0xff]
    %v171 = vld [vmem:[%s3 + $0x350] sm:$0xff]
    %v172 = vld [vmem:[%s3 + $0x358] sm:$0xff]
    %v173 = vld [vmem:[%s3 + $0x360] sm:$0xff]
    %v174 = vld [vmem:[%s3 + $0x368] sm:$0xff]
    %v175 = vld [vmem:[%s3 + $0x370] sm:$0xff]
    %v176 = vld [vmem:[%s3 + $0x378] sm:$0xff]
    %v177 = vld [vmem:[%s3 + $0x380] sm:$0xff]
    %v178 = vld [vmem:[%s3 + $0x388] sm:$0xff]
    %v179 = vld [vmem:[%s3 + $0x390] sm:$0xff]
    %v180 = vld [vmem:[%s3 + $0x398] sm:$0xff]
    %v181 = vld [vmem:[%s3 + $0x3a0] sm:$0xff]
    %v182 = vld [vmem:[%s3 + $0x3a8] sm:$0xff]
    %v183 = vld [vmem:[%s3 + $0x3b0] sm:$0xff]
    %v184 = vld [vmem:[%s3 + $0x3b8] sm:$0xff]
    %v185 = vld [vmem:[%s3 + $0x3c0] sm:$0xff]
    %v186 = vld [vmem:[%s3 + $0x3c8] sm:$0xff]
    %v187 = vld [vmem:[%s3 + $0x3d0] sm:$0xff]
    %v188 = vld [vmem:[%s3 + $0x3d8] sm:$0xff]
    %v189 = vld [vmem:[%s3 + $0x3e0] sm:$0xff]
    %v190 = vld [vmem:[%s3 + $0x3e8] sm:$0xff]
    %v191 = vld [vmem:[%s3 + $0x3f0] sm:$0xff]
    %v192 = vld [vmem:[%s3 + $0x3f8] sm:$0xff]
    %v193 = vld [vmem:[%s3 + $0x400] sm:$0xff]
    %v194 = vld [vmem:[%s3 + $0x408] sm:$0xff]
    %v195 = vld [vmem:[%s3 + $0x410] sm:$0xff]
    %v196 = vld [vmem:[%s3 + $0x418] sm:$0xff]
    %v197 = vld [vmem:[%s3 + $0x420] sm:$0xff]
    %v198 = vld [vmem:[%s3 + $0x428] sm:$0xff]
    %v199 = vld [vmem:[%s3 + $0x430] sm:$0xff]
    %v200 = vld [vmem:[%s3 + $0x438] sm:$0xff]
    %v201 = vld [vmem:[%s3 + $0x440] sm:$0xff]
    %v202 = vld [vmem:[%s3 + $0x448] sm:$0xff]
    %v203 = vld [vmem:[%s3 + $0x450] sm:$0xff]
    %v204 = vld [vmem:[%s3 + $0x458] sm:$0xff]
    %v205 = vld [vmem:[%s3 + $0x460] sm:$0xff]
    %v206 = vld [vmem:[%s3 + $0x468] sm:$0xff]
    %v207 = vld [vmem:[%s3 + $0x470] sm:$0xff]
    %v208 = vld [vmem:[%s3 + $0x478] sm:$0xff]
    %v209 = vld [vmem:[%s3 + $0x480] sm:$0xff]
    %v210 = vld [vmem:[%s3 + $0x488] sm:$0xff]
    %v211 = vld [vmem:[%s3 + $0x490] sm:$0xff]
    %v212 = vld [vmem:[%s3 + $0x498] sm:$0xff]
    %v213 = vld [vmem:[%s3 + $0x4a0] sm:$0xff]
    %v214 = vld [vmem:[%s3 + $0x4a8] sm:$0xff]
    %v215 = vld [vmem:[%s3 + $0x4b0] sm:$0xff]
    %v216 = vld [vmem:[%s3 + $0x4b8] sm:$0xff]
    %v217 = vld [vmem:[%s3 + $0x4c0] sm:$0xff]
    %v218 = vld [vmem:[%s3 + $0x4c8] sm:$0xff]
    %v219 = vld [vmem:[%s3 + $0x4d0] sm:$0xff]
    %v220 = vld [vmem:[%s3 + $0x4d8] sm:$0xff]
    %v221 = vld [vmem:[%s3 + $0x4e0] sm:$0xff]
    %v222 = vld [vmem:[%s3 + $0x4e8] sm:$0xff]
    %v223 = vld [vmem:[%s3 + $0x4f0] sm:$0xff]
    %v224 = vld [vmem:[%s3 + $0x4f8] sm:$0xff]
    %v225 = vld [vmem:[%s3 + $0x500] sm:$0xff]
    %v226 = vld [vmem:[%s3 + $0x508] sm:$0xff]
    %v227 = vld [vmem:[%s3 + $0x510] sm:$0xff]
    %v228 = vld [vmem:[%s3 + $0x518] sm:$0xff]
    %v229 = vld [vmem:[%s3 + $0x520] sm:$0xff]
    %v230 = vld [vmem:[%s3 + $0x528] sm:$0xff]
    %v231 = vld [vmem:[%s3 + $0x530] sm:$0xff]
    %v232 = vld [vmem:[%s3 + $0x538] sm:$0xff]
    %v233 = vld [vmem:[%s3 + $0x540] sm:$0xff]
    %v234 = vld [vmem:[%s3 + $0x548] sm:$0xff]
    %v235 = vld [vmem:[%s3 + $0x550] sm:$0xff]
    %v236 = vld [vmem:[%s3 + $0x558] sm:$0xff]
    %v237 = vld [vmem:[%s3 + $0x560] sm:$0xff]
    %v238 = vld [vmem:[%s3 + $0x568] sm:$0xff]
    %v239 = vld [vmem:[%s3 + $0x570] sm:$0xff]
    %v240 = vld [vmem:[%s3 + $0x578] sm:$0xff]
    %v241 = vld [vmem:[%s3 + $0x580] sm:$0xff]
    %v242 = vld [vmem:[%s3 + $0x588] sm:$0xff]
    %v243 = vld [vmem:[%s3 + $0x590] sm:$0xff]
    %v244 = vld [vmem:[%s3 + $0x598] sm:$0xff]
    %v245 = vld [vmem:[%s3 + $0x5a0] sm:$0xff]
    %v246 = vld [vmem:[%s3 + $0x5a8] sm:$0xff]
    %v247 = vld [vmem:[%s3 + $0x5b0] sm:$0xff]
    %v248 = vld [vmem:[%s3 + $0x5b8] sm:$0xff]
    %v249 = vld [vmem:[%s3 + $0x5c0] sm:$0xff]
    %v250 = vld [vmem:[%s3 + $0x5c8] sm:$0xff]
    %v251 = vld [vmem:[%s3 + $0x5d0] sm:$0xff]
    %v252 = vld [vmem:[%s3 + $0x5d8] sm:$0xff]
    %v253 = vld [vmem:[%s3 + $0x5e0] sm:$0xff]
    %v254 = vld [vmem:[%s3 + $0x5e8] sm:$0xff]
    %v255 = vld [vmem:[%s3 + $0x5f0] sm:$0xff]
    %v256 = vld [vmem:[%s3 + $0x5f8] sm:$0xff]
    %v257 = vld [vmem:[%s3 + $0x600] sm:$0xff]
    %v258 = vld [vmem:[%s3 + $0x608] sm:$0xff]
    %v259 = vld [vmem:[%s3 + $0x610] sm:$0xff]
    %v260 = vld [vmem:[%s3 + $0x618] sm:$0xff]
    %v261 = vld [vmem:[%s3 + $0x620] sm:$0xff]
    %v262 = vld [vmem:[%s3 + $0x628] sm:$0xff]
    %v263 = vld [vmem:[%s3 + $0x630] sm:$0xff]
    %v264 = vld [vmem:[%s3 + $0x638] sm:$0xff]
    %v265 = vld [vmem:[%s3 + $0x640] sm:$0xff]
    %v266 = vld [vmem:[%s3 + $0x648] sm:$0xff]
    %v267 = vld [vmem:[%s3 + $0x650] sm:$0xff]
    %v268 = vld [vmem:[%s3 + $0x658] sm:$0xff]
    %v269 = vld [vmem:[%s3 + $0x660] sm:$0xff]
    %v270 = vld [vmem:[%s3 + $0x668] sm:$0xff]
    %v271 = vld [vmem:[%s3 + $0x670] sm:$0xff]
    %v272 = vld [vmem:[%s3 + $0x678] sm:$0xff]
    %v273 = vld [vmem:[%s3 + $0x680] sm:$0xff]
    %v274 = vld [vmem:[%s3 + $0x688] sm:$0xff]
    %v275 = vld [vmem:[%s3 + $0x690] sm:$0xff]
    %v276 = vld [vmem:[%s3 + $0x698] sm:$0xff]
    %v277 = vld [vmem:[%s3 + $0x6a0] sm:$0xff]
    %v278 = vld [vmem:[%s3 + $0x6a8] sm:$0xff]
    %v279 = vld [vmem:[%s3 + $0x6b0] sm:$0xff]
    %v280 = vld [vmem:[%s3 + $0x6b8] sm:$0xff]
    %v281 = vld [vmem:[%s3 + $0x6c0] sm:$0xff]
    %v282 = vld [vmem:[%s3 + $0x6c8] sm:$0xff]
    %v283 = vld [vmem:[%s3 + $0x6d0] sm:$0xff]
    %v284 = vld [vmem:[%s3 + $0x6d8] sm:$0xff]
    %v285 = vld [vmem:[%s3 + $0x6e0] sm:$0xff]
    %v286 = vld [vmem:[%s3 + $0x6e8] sm:$0xff]
    %v287 = vld [vmem:[%s3 + $0x6f0] sm:$0xff]
    %v288 = vld [vmem:[%s3 + $0x6f8] sm:$0xff]
    %v289 = vld [vmem:[%s3 + $0x700] sm:$0xff]
    %v290 = vld [vmem:[%s3 + $0x708] sm:$0xff]
    %v291 = vld [vmem:[%s3 + $0x710] sm:$0xff]
    %v292 = vld [vmem:[%s3 + $0x718] sm:$0xff]
    %v293 = vld [vmem:[%s3 + $0x720] sm:$0xff]
    %v294 = vld [vmem:[%s3 + $0x728] sm:$0xff]
    %v295 = vld [vmem:[%s3 + $0x730] sm:$0xff]
    %v296 = vld [vmem:[%s3 + $0x738] sm:$0xff]
    %v297 = vld [vmem:[%s3 + $0x740] sm:$0xff]
    %v298 = vld [vmem:[%s3 + $0x748] sm:$0xff]
    %v299 = vld [vmem:[%s3 + $0x750] sm:$0xff]
    %v300 = vld [vmem:[%s3 + $0x758] sm:$0xff]
    %v301 = vld [vmem:[%s3 + $0x760] sm:$0xff]
    %v302 = vld [vmem:[%s3 + $0x768] sm:$0xff]
    %v303 = vld [vmem:[%s3 + $0x770] sm:$0xff]
    %v304 = vld [vmem:[%s3 + $0x778] sm:$0xff]
    %v305 = vld [vmem:[%s3 + $0x780] sm:$0xff]
    %v306 = vld [vmem:[%s3 + $0x788] sm:$0xff]
    %v307 = vld [vmem:[%s3 + $0x790] sm:$0xff]
    %v308 = vld [vmem:[%s3 + $0x798] sm:$0xff]
    %v309 = vld [vmem:[%s3 + $0x7a0] sm:$0xff]
    %v310 = vld [vmem:[%s3 + $0x7a8] sm:$0xff]
    %v311 = vld [vmem:[%s3 + $0x7b0] sm:$0xff]
    %v312 = vld [vmem:[%s3 + $0x7b8] sm:$0xff]
    %v313 = vld [vmem:[%s3 + $0x7c0] sm:$0xff]
    %v314 = vld [vmem:[%s3 + $0x7c8] sm:$0xff]
    %v315 = vld [vmem:[%s3 + $0x7d0] sm:$0xff]
    %v316 = vld [vmem:[%s3 + $0x7d8] sm:$0xff]
    %v317 = vld [vmem:[%s3 + $0x7e0] sm:$0xff]
    %v318 = vld [vmem:[%s3 + $0x7e8] sm:$0xff]
    %v319 = vld [vmem:[%s3 + $0x7f0] sm:$0xff]
    %v320 = vld [vmem:[%s3 + $0x7f8] sm:$0xff]
    %v321 = vld [vmem:[%s5] sm:$0xf]
    %v322 = vld [vmem:[%s5 + $0x4] sm:$0xf]
    %v323 = vld [vmem:[%s5 + $0x8] sm:$0xf]
    %v324 = vld [vmem:[%s5 + $0xc] sm:$0xf]
    %v325 = vld [vmem:[%s5 + $0x10] sm:$0xf]
    %v326 = vld [vmem:[%s5 + $0x14] sm:$0xf]
    %v327 = vld [vmem:[%s5 + $0x18] sm:$0xf]
    %v328 = vld [vmem:[%s5 + $0x1c] sm:$0xf]
    %v329 = vld [vmem:[%s5 + $0x20] sm:$0xf]
    %v330 = vld [vmem:[%s5 + $0x24] sm:$0xf]
    %v331 = vld [vmem:[%s5 + $0x28] sm:$0xf]
    %v332 = vld [vmem:[%s5 + $0x2c] sm:$0xf]
    %v333 = vld [vmem:[%s5 + $0x30] sm:$0xf]
    %v334 = vld [vmem:[%s5 + $0x34] sm:$0xf]
    %v335 = vld [vmem:[%s5 + $0x38] sm:$0xf]
    %v336 = vld [vmem:[%s5 + $0x3c] sm:$0xf]
    %v337 = vld [vmem:[%s5 + $0x40] sm:$0xf]
    %v338 = vld [vmem:[%s5 + $0x44] sm:$0xf]
    %v339 = vld [vmem:[%s5 + $0x48] sm:$0xf]
    %v340 = vld [vmem:[%s5 + $0x4c] sm:$0xf]
    %v341 = vld [vmem:[%s5 + $0x50] sm:$0xf]
    %v342 = vld [vmem:[%s5 + $0x54] sm:$0xf]
    %v343 = vld [vmem:[%s5 + $0x58] sm:$0xf]
    %v344 = vld [vmem:[%s5 + $0x5c] sm:$0xf]
    %v345 = vld [vmem:[%s5 + $0x60] sm:$0xf]
    %v346 = vld [vmem:[%s5 + $0x64] sm:$0xf]
    %v347 = vld [vmem:[%s5 + $0x68] sm:$0xf]
    %v348 = vld [vmem:[%s5 + $0x6c] sm:$0xf]
    %v349 = vld [vmem:[%s5 + $0x70] sm:$0xf]
    %v350 = vld [vmem:[%s5 + $0x74] sm:$0xf]
    %v351 = vld [vmem:[%s5 + $0x78] sm:$0xf]
    %v352 = vld [vmem:[%s5 + $0x7c] sm:$0xf]
    %v353 = vld [vmem:[%s5 + $0x80] sm:$0xf]
    %v354 = vld [vmem:[%s5 + $0x84] sm:$0xf]
    %v355 = vld [vmem:[%s5 + $0x88] sm:$0xf]
    %v356 = vld [vmem:[%s5 + $0x8c] sm:$0xf]
    %v357 = vld [vmem:[%s5 + $0x90] sm:$0xf]
    %v358 = vld [vmem:[%s5 + $0x94] sm:$0xf]
    %v359 = vld [vmem:[%s5 + $0x98] sm:$0xf]
    %v360 = vld [vmem:[%s5 + $0x9c] sm:$0xf]
    %v361 = vld [vmem:[%s5 + $0xa0] sm:$0xf]
    %v362 = vld [vmem:[%s5 + $0xa4] sm:$0xf]
    %v363 = vld [vmem:[%s5 + $0xa8] sm:$0xf]
    %v364 = vld [vmem:[%s5 + $0xac] sm:$0xf]
    %v365 = vld [vmem:[%s5 + $0xb0] sm:$0xf]
    %v366 = vld [vmem:[%s5 + $0xb4] sm:$0xf]
    %v367 = vld [vmem:[%s5 + $0xb8] sm:$0xf]
    %v368 = vld [vmem:[%s5 + $0xbc] sm:$0xf]
    %v369 = vld [vmem:[%s5 + $0xc0] sm:$0xf]
    %v370 = vld [vmem:[%s5 + $0xc4] sm:$0xf]
    %v371 = vld [vmem:[%s5 + $0xc8] sm:$0xf]
    %v372 = vld [vmem:[%s5 + $0xcc] sm:$0xf]
    %v373 = vld [vmem:[%s5 + $0xd0] sm:$0xf]
    %v374 = vld [vmem:[%s5 + $0xd4] sm:$0xf]
    %v375 = vld [vmem:[%s5 + $0xd8] sm:$0xf]
    %v376 = vld [vmem:[%s5 + $0xdc] sm:$0xf]
    %v377 = vld [vmem:[%s5 + $0xe0] sm:$0xf]
    %v378 = vld [vmem:[%s5 + $0xe4] sm:$0xf]
    %v379 = vld [vmem:[%s5 + $0xe8] sm:$0xf]
    %v380 = vld [vmem:[%s5 + $0xec] sm:$0xf]
    %v381 = vld [vmem:[%s5 + $0xf0] sm:$0xf]
    %v382 = vld [vmem:[%s5 + $0xf4] sm:$0xf]
    %v383 = vld [vmem:[%s5 + $0xf8] sm:$0xf]
    %v384 = vld [vmem:[%s5 + $0xfc] sm:$0xf]
    %v385 = vld [vmem:[%s5 + $0x100] sm:$0xf]
    %v386 = vld [vmem:[%s5 + $0x104] sm:$0xf]
    %v387 = vld [vmem:[%s5 + $0x108] sm:$0xf]
    %v388 = vld [vmem:[%s5 + $0x10c] sm:$0xf]
    %v389 = vld [vmem:[%s5 + $0x110] sm:$0xf]
    %v390 = vld [vmem:[%s5 + $0x114] sm:$0xf]
    %v391 = vld [vmem:[%s5 + $0x118] sm:$0xf]
    %v392 = vld [vmem:[%s5 + $0x11c] sm:$0xf]
    %v393 = vld [vmem:[%s5 + $0x120] sm:$0xf]
    %v394 = vld [vmem:[%s5 + $0x124] sm:$0xf]
    %v395 = vld [vmem:[%s5 + $0x128] sm:$0xf]
    %v396 = vld [vmem:[%s5 + $0x12c] sm:$0xf]
    %v397 = vld [vmem:[%s5 + $0x130] sm:$0xf]
    %v398 = vld [vmem:[%s5 + $0x134] sm:$0xf]
    %v399 = vld [vmem:[%s5 + $0x138] sm:$0xf]
    %v400 = vld [vmem:[%s5 + $0x13c] sm:$0xf]
    %v401 = vld [vmem:[%s5 + $0x140] sm:$0xf]
    %v402 = vld [vmem:[%s5 + $0x144] sm:$0xf]
    %v403 = vld [vmem:[%s5 + $0x148] sm:$0xf]
    %v404 = vld [vmem:[%s5 + $0x14c] sm:$0xf]
    %v405 = vld [vmem:[%s5 + $0x150] sm:$0xf]
    %v406 = vld [vmem:[%s5 + $0x154] sm:$0xf]
    %v407 = vld [vmem:[%s5 + $0x158] sm:$0xf]
    %v408 = vld [vmem:[%s5 + $0x15c] sm:$0xf]
    %v409 = vld [vmem:[%s5 + $0x160] sm:$0xf]
    %v410 = vld [vmem:[%s5 + $0x164] sm:$0xf]
    %v411 = vld [vmem:[%s5 + $0x168] sm:$0xf]
    %v412 = vld [vmem:[%s5 + $0x16c] sm:$0xf]
    %v413 = vld [vmem:[%s5 + $0x170] sm:$0xf]
    %v414 = vld [vmem:[%s5 + $0x174] sm:$0xf]
    %v415 = vld [vmem:[%s5 + $0x178] sm:$0xf]
    %v416 = vld [vmem:[%s5 + $0x17c] sm:$0xf]
    %v417 = vld [vmem:[%s5 + $0x180] sm:$0xf]
    %v418 = vld [vmem:[%s5 + $0x184] sm:$0xf]
    %v419 = vld [vmem:[%s5 + $0x188] sm:$0xf]
    %v420 = vld [vmem:[%s5 + $0x18c] sm:$0xf]
    %v421 = vld [vmem:[%s5 + $0x190] sm:$0xf]
    %v422 = vld [vmem:[%s5 + $0x194] sm:$0xf]
    %v423 = vld [vmem:[%s5 + $0x198] sm:$0xf]
    %v424 = vld [vmem:[%s5 + $0x19c] sm:$0xf]
    %v425 = vld [vmem:[%s5 + $0x1a0] sm:$0xf]
    %v426 = vld [vmem:[%s5 + $0x1a4] sm:$0xf]
    %v427 = vld [vmem:[%s5 + $0x1a8] sm:$0xf]
    %v428 = vld [vmem:[%s5 + $0x1ac] sm:$0xf]
    %v429 = vld [vmem:[%s5 + $0x1b0] sm:$0xf]
    %v430 = vld [vmem:[%s5 + $0x1b4] sm:$0xf]
    %v431 = vld [vmem:[%s5 + $0x1b8] sm:$0xf]
    %v432 = vld [vmem:[%s5 + $0x1bc] sm:$0xf]
    %v433 = vld [vmem:[%s5 + $0x1c0] sm:$0xf]
    %v434 = vld [vmem:[%s5 + $0x1c4] sm:$0xf]
    %v435 = vld [vmem:[%s5 + $0x1c8] sm:$0xf]
    %v436 = vld [vmem:[%s5 + $0x1cc] sm:$0xf]
    %v437 = vld [vmem:[%s5 + $0x1d0] sm:$0xf]
    %v438 = vld [vmem:[%s5 + $0x1d4] sm:$0xf]
    %v439 = vld [vmem:[%s5 + $0x1d8] sm:$0xf]
    %v440 = vld [vmem:[%s5 + $0x1dc] sm:$0xf]
    %v441 = vld [vmem:[%s5 + $0x1e0] sm:$0xf]
    %v442 = vld [vmem:[%s5 + $0x1e4] sm:$0xf]
    %v443 = vld [vmem:[%s5 + $0x1e8] sm:$0xf]
    %v444 = vld [vmem:[%s5 + $0x1ec] sm:$0xf]
    %v445 = vld [vmem:[%s5 + $0x1f0] sm:$0xf]
    %v446 = vld [vmem:[%s5 + $0x1f4] sm:$0xf]
    %v447 = vld [vmem:[%s5 + $0x1f8] sm:$0xf]
    %v448 = vld [vmem:[%s5 + $0x1fc] sm:$0xf]
    %v449 = vld [vmem:[%s7] sm:$0xf]
    %v450 = vld [vmem:[%s7 + $0x4] sm:$0xf]
    %v451 = vld [vmem:[%s7 + $0x8] sm:$0xf]
    %v452 = vld [vmem:[%s7 + $0xc] sm:$0xf]
    %v453 = vld [vmem:[%s7 + $0x10] sm:$0xf]
    %v454 = vld [vmem:[%s7 + $0x14] sm:$0xf]
    %v455 = vld [vmem:[%s7 + $0x18] sm:$0xf]
    %v456 = vld [vmem:[%s7 + $0x1c] sm:$0xf]
    %v457 = vld [vmem:[%s7 + $0x20] sm:$0xf]
    %v458 = vld [vmem:[%s7 + $0x24] sm:$0xf]
    %v459 = vld [vmem:[%s7 + $0x28] sm:$0xf]
    %v460 = vld [vmem:[%s7 + $0x2c] sm:$0xf]
    %v461 = vld [vmem:[%s7 + $0x30] sm:$0xf]
    %v462 = vld [vmem:[%s7 + $0x34] sm:$0xf]
    %v463 = vld [vmem:[%s7 + $0x38] sm:$0xf]
    %v464 = vld [vmem:[%s7 + $0x3c] sm:$0xf]
    %v465 = vld [vmem:[%s2] sm:$0xf]
    %v466 = vld [vmem:[%s4] sm:$0xff]
    %v467 = vld [vmem:[%s6] sm:$0x1]
    %s468 = sld [smem:[#allocation2]]
    %v469 = vld [vmem:[%s0] sm:$0x1]
    %v470 = vld [vmem:[%s0 + $0x1] sm:$0x1]
    %v471 = vld [vmem:[%s0 + $0x2] sm:$0x1]
    %v472 = vld [vmem:[%s0 + $0x3] sm:$0x1]
    %v473 = vld [vmem:[%s0 + $0x4] sm:$0x1]
    %v474 = vld [vmem:[%s0 + $0x5] sm:$0x1]
    %v475 = vld [vmem:[%s0 + $0x6] sm:$0x1]
    %v476 = vld [vmem:[%s0 + $0x7] sm:$0x1]
    %v477 = vld [vmem:[%s0 + $0x8] sm:$0x1]
    %v478 = vld [vmem:[%s0 + $0x9] sm:$0x1]
    %v479 = vld [vmem:[%s0 + $0xa] sm:$0x1]
    %v480 = vld [vmem:[%s0 + $0xb] sm:$0x1]
    %v481 = vld [vmem:[%s0 + $0xc] sm:$0x1]
    %v482 = vld [vmem:[%s0 + $0xd] sm:$0x1]
    %v483 = vld [vmem:[%s0 + $0xe] sm:$0x1]
    %v484 = vld [vmem:[%s0 + $0xf] sm:$0x1]
    %v485 = vld [vmem:[%s0 + $0x10] sm:$0x1]
    %v486 = vld [vmem:[%s0 + $0x11] sm:$0x1]
    %v487 = vld [vmem:[%s0 + $0x12] sm:$0x1]
    %v488 = vld [vmem:[%s0 + $0x13] sm:$0x1]
    %v489 = vld [vmem:[%s0 + $0x14] sm:$0x1]
    %v490 = vld [vmem:[%s0 + $0x15] sm:$0x1]
    %v491 = vld [vmem:[%s0 + $0x16] sm:$0x1]
    %v492 = vld [vmem:[%s0 + $0x17] sm:$0x1]
    %v493 = vld [vmem:[%s0 + $0x18] sm:$0x1]
    %v494 = vld [vmem:[%s0 + $0x19] sm:$0x1]
    %v495 = vld [vmem:[%s0 + $0x1a] sm:$0x1]
    %v496 = vld [vmem:[%s0 + $0x1b] sm:$0x1]
    %v497 = vld [vmem:[%s0 + $0x1c] sm:$0x1]
    %v498 = vld [vmem:[%s0 + $0x1d] sm:$0x1]
    %v499 = vld [vmem:[%s0 + $0x1e] sm:$0x1]
    %v500 = vld [vmem:[%s0 + $0x1f] sm:$0x1]
    %v502 = vperm.slane %v465, 0
    %v503 = vperm.slane %v465, 1
    %v504 = vperm.slane %v465, 2
    %v505 = vperm.slane %v465, 3
    %511 = vst [vmem:[#allocation1] ss:$9 sm:$0xff] %v469
    %s513 = scalar_lea.vmem [#allocation1], 1
    %514 = vst [vmem:[%s513] ss:$9 sm:$0xff] %v470
    %s516 = scalar_lea.vmem [#allocation1], 2
    %517 = vst [vmem:[%s516] ss:$9 sm:$0xff] %v471
    %s519 = scalar_lea.vmem [#allocation1], 3
    %520 = vst [vmem:[%s519] ss:$9 sm:$0xff] %v472
    %s522 = scalar_lea.vmem [#allocation1], 4
    %523 = vst [vmem:[%s522] ss:$9 sm:$0xff] %v473
    %s525 = scalar_lea.vmem [#allocation1], 5
    %526 = vst [vmem:[%s525] ss:$9 sm:$0xff] %v474
    %s528 = scalar_lea.vmem [#allocation1], 6
    %529 = vst [vmem:[%s528] ss:$9 sm:$0xff] %v475
    %s531 = scalar_lea.vmem [#allocation1], 7
    %532 = vst [vmem:[%s531] ss:$9 sm:$0xff] %v476
    %v533 = vld [vmem:[#allocation1] sm:$0xff]
    %535 = vst [vmem:[#allocation1] ss:$9 sm:$0xff] %v477
    %537 = vst [vmem:[%s513] ss:$9 sm:$0xff] %v478
    %539 = vst [vmem:[%s516] ss:$9 sm:$0xff] %v479
    %541 = vst [vmem:[%s519] ss:$9 sm:$0xff] %v480
    %543 = vst [vmem:[%s522] ss:$9 sm:$0xff] %v481
    %545 = vst [vmem:[%s525] ss:$9 sm:$0xff] %v482
    %547 = vst [vmem:[%s528] ss:$9 sm:$0xff] %v483
    %549 = vst [vmem:[%s531] ss:$9 sm:$0xff] %v484
    %v550 = vld [vmem:[#allocation1] sm:$0xff]
    %552 = vst [vmem:[#allocation1] ss:$9 sm:$0xff] %v485
    %554 = vst [vmem:[%s513] ss:$9 sm:$0xff] %v486
    %556 = vst [vmem:[%s516] ss:$9 sm:$0xff] %v487
    %558 = vst [vmem:[%s519] ss:$9 sm:$0xff] %v488
    %560 = vst [vmem:[%s522] ss:$9 sm:$0xff] %v489
    %562 = vst [vmem:[%s525] ss:$9 sm:$0xff] %v490
    %564 = vst [vmem:[%s528] ss:$9 sm:$0xff] %v491
    %566 = vst [vmem:[%s531] ss:$9 sm:$0xff] %v492
    %v567 = vld [vmem:[#allocation1] sm:$0xff]
    %569 = vst [vmem:[#allocation1] ss:$9 sm:$0xff] %v493
    %571 = vst [vmem:[%s513] ss:$9 sm:$0xff] %v494
    %573 = vst [vmem:[%s516] ss:$9 sm:$0xff] %v495
    %575 = vst [vmem:[%s519] ss:$9 sm:$0xff] %v496
    %577 = vst [vmem:[%s522] ss:$9 sm:$0xff] %v497
    %579 = vst [vmem:[%s525] ss:$9 sm:$0xff] %v498
    %581 = vst [vmem:[%s528] ss:$9 sm:$0xff] %v499
    %583 = vst [vmem:[%s531] ss:$9 sm:$0xff] %v500
    %v584 = vld [vmem:[#allocation1] sm:$0xff]
    %v621 = vunpack.c.l.b16 %v33
    %v622 = vunpack.c.h.b16 %v33
    %v623 = vunpack.c.l.b16 %v34
    %v624 = vunpack.c.h.b16 %v34
    %v625 = vunpack.c.l.b16 %v35
    %v626 = vunpack.c.h.b16 %v35
    %v627 = vunpack.c.l.b16 %v36
    %v628 = vunpack.c.h.b16 %v36
    %v629 = vunpack.c.l.b16 %v37
    %v630 = vunpack.c.h.b16 %v37
    %v631 = vunpack.c.l.b16 %v38
    %v632 = vunpack.c.h.b16 %v38
    %v633 = vunpack.c.l.b16 %v39
    %v634 = vunpack.c.h.b16 %v39
    %v635 = vunpack.c.l.b16 %v40
    %v636 = vunpack.c.h.b16 %v40
    %v637 = vunpack.c.l.b16 %v41
    %v638 = vunpack.c.h.b16 %v41
    %v639 = vunpack.c.l.b16 %v42
    %v640 = vunpack.c.h.b16 %v42
    %v641 = vunpack.c.l.b16 %v43
    %v642 = vunpack.c.h.b16 %v43
    %v643 = vunpack.c.l.b16 %v44
    %v644 = vunpack.c.h.b16 %v44
    %v645 = vunpack.c.l.b16 %v45
    %v646 = vunpack.c.h.b16 %v45
    %v647 = vunpack.c.l.b16 %v46
    %v648 = vunpack.c.h.b16 %v46
    %v649 = vunpack.c.l.b16 %v47
    %v650 = vunpack.c.h.b16 %v47
    %v651 = vunpack.c.l.b16 %v48
    %v652 = vunpack.c.h.b16 %v48
    %v653 = vunpack.c.l.b16 %v49
    %v654 = vunpack.c.h.b16 %v49
    %v655 = vunpack.c.l.b16 %v50
    %v656 = vunpack.c.h.b16 %v50
    %v657 = vunpack.c.l.b16 %v51
    %v658 = vunpack.c.h.b16 %v51
    %v659 = vunpack.c.l.b16 %v52
    %v660 = vunpack.c.h.b16 %v52
    %v661 = vunpack.c.l.b16 %v53
    %v662 = vunpack.c.h.b16 %v53
    %v663 = vunpack.c.l.b16 %v54
    %v664 = vunpack.c.h.b16 %v54
    %v665 = vunpack.c.l.b16 %v55
    %v666 = vunpack.c.h.b16 %v55
    %v667 = vunpack.c.l.b16 %v56
    %v668 = vunpack.c.h.b16 %v56
    %v669 = vunpack.c.l.b16 %v57
    %v670 = vunpack.c.h.b16 %v57
    %v671 = vunpack.c.l.b16 %v58
    %v672 = vunpack.c.h.b16 %v58
    %v673 = vunpack.c.l.b16 %v59
    %v674 = vunpack.c.h.b16 %v59
    %v675 = vunpack.c.l.b16 %v60
    %v676 = vunpack.c.h.b16 %v60
    %v677 = vunpack.c.l.b16 %v61
    %v678 = vunpack.c.h.b16 %v61
    %v679 = vunpack.c.l.b16 %v62
    %v680 = vunpack.c.h.b16 %v62
    %v681 = vunpack.c.l.b16 %v63
    %v682 = vunpack.c.h.b16 %v63
    %v683 = vunpack.c.l.b16 %v64
    %v684 = vunpack.c.h.b16 %v64
    %v685 = vpack.c.b16 %v625, %v621
    %v686 = vpack.c.b16 %v626, %v622
    %v687 = vpack.c.b16 %v627, %v623
    %v688 = vpack.c.b16 %v628, %v624
    %v689 = vpack.c.b16 %v633, %v629
    %v690 = vpack.c.b16 %v634, %v630
    %v691 = vpack.c.b16 %v635, %v631
    %v692 = vpack.c.b16 %v636, %v632
    %v693 = vpack.c.b16 %v641, %v637
    %v694 = vpack.c.b16 %v642, %v638
    %v695 = vpack.c.b16 %v643, %v639
    %v696 = vpack.c.b16 %v644, %v640
    %v697 = vpack.c.b16 %v649, %v645
    %v698 = vpack.c.b16 %v650, %v646
    %v699 = vpack.c.b16 %v651, %v647
    %v700 = vpack.c.b16 %v652, %v648
    %v701 = vpack.c.b16 %v657, %v653
    %v702 = vpack.c.b16 %v658, %v654
    %v703 = vpack.c.b16 %v659, %v655
    %v704 = vpack.c.b16 %v660, %v656
    %v705 = vpack.c.b16 %v665, %v661
    %v706 = vpack.c.b16 %v666, %v662
    %v707 = vpack.c.b16 %v667, %v663
    %v708 = vpack.c.b16 %v668, %v664
    %v709 = vpack.c.b16 %v673, %v669
    %v710 = vpack.c.b16 %v674, %v670
    %v711 = vpack.c.b16 %v675, %v671
    %v712 = vpack.c.b16 %v676, %v672
    %v713 = vpack.c.b16 %v681, %v677
    %v714 = vpack.c.b16 %v682, %v678
    %v715 = vpack.c.b16 %v683, %v679
    %v716 = vpack.c.b16 %v684, %v680
    %749 = vmatpush.bf16.msra.mxu0 %v713
    %750 = vmatpush.bf16.msra.mxu0 %v709
    %751 = vmatpush.bf16.msra.mxu0 %v705
    %752 = vmatpush.bf16.msra.mxu0 %v701
    %753 = vmatpush.bf16.msra.mxu0 %v697
    %754 = vmatpush.bf16.msra.mxu0 %v693
    %755 = vmatpush.bf16.msra.mxu0 %v689
    %756 = vmatpush.bf16.msra.mxu0 %v685
    %757 = vmatmul.bf16.gmra.mxu0 %v533
    %v758 = vpop.f32.mrf.mxu0
    %v759 = vadd.f32 %v502, %v758
    %v760 = vpop.f32.mrf.mxu0
    %v761 = vadd.f32 %v502, %v760
    %762 = vmatmul.bf16.gmra.mxu0 %v550
    %v763 = vpop.f32.mrf.mxu0
    %v764 = vadd.f32 %v502, %v763
    %v765 = vpop.f32.mrf.mxu0
    %v766 = vadd.f32 %v502, %v765
    %767 = vmatmul.bf16.gmra.mxu0 %v567
    %v768 = vpop.f32.mrf.mxu0
    %v769 = vadd.f32 %v502, %v768
    %v770 = vpop.f32.mrf.mxu0
    %v771 = vadd.f32 %v502, %v770
    %772 = vmatmul.bf16.gmra.mxu0 %v584
    %v773 = vpop.f32.mrf.mxu0
    %v774 = vadd.f32 %v502, %v773
    %v775 = vpop.f32.mrf.mxu0
    %v776 = vadd.f32 %v502, %v775
    %777 = vdwg.mxu0
    %778 = vmatpush.bf16.msra.mxu0 %v714
    %779 = vmatpush.bf16.msra.mxu0 %v710
    %780 = vmatpush.bf16.msra.mxu0 %v706
    %781 = vmatpush.bf16.msra.mxu0 %v702
    %782 = vmatpush.bf16.msra.mxu0 %v698
    %783 = vmatpush.bf16.msra.mxu0 %v694
    %784 = vmatpush.bf16.msra.mxu0 %v690
    %785 = vmatpush.bf16.msra.mxu0 %v686
    %786 = vmatmul.bf16.gmra.mxu0 %v533
    %v787 = vpop.f32.mrf.mxu0
    %v788 = vadd.f32 %v503, %v787
    %v789 = vpop.f32.mrf.mxu0
    %v790 = vadd.f32 %v503, %v789
    %791 = vmatmul.bf16.gmra.mxu0 %v550
    %v792 = vpop.f32.mrf.mxu0
    %v793 = vadd.f32 %v503, %v792
    %v794 = vpop.f32.mrf.mxu0
    %v795 = vadd.f32 %v503, %v794
    %796 = vmatmul.bf16.gmra.mxu0 %v567
    %v797 = vpop.f32.mrf.mxu0
    %v798 = vadd.f32 %v503, %v797
    %v799 = vpop.f32.mrf.mxu0
    %v800 = vadd.f32 %v503, %v799
    %801 = vmatmul.bf16.gmra.mxu0 %v584
    %v802 = vpop.f32.mrf.mxu0
    %v803 = vadd.f32 %v503, %v802
    %v804 = vpop.f32.mrf.mxu0
    %v805 = vadd.f32 %v503, %v804
    %806 = vdwg.mxu0
    %807 = vmatpush.bf16.msra.mxu0 %v715
    %808 = vmatpush.bf16.msra.mxu0 %v711
    %809 = vmatpush.bf16.msra.mxu0 %v707
    %810 = vmatpush.bf16.msra.mxu0 %v703
    %811 = vmatpush.bf16.msra.mxu0 %v699
    %812 = vmatpush.bf16.msra.mxu0 %v695
    %813 = vmatpush.bf16.msra.mxu0 %v691
    %814 = vmatpush.bf16.msra.mxu0 %v687
    %815 = vmatmul.bf16.gmra.mxu0 %v533
    %v816 = vpop.f32.mrf.mxu0
    %v817 = vadd.f32 %v504, %v816
    %v818 = vpop.f32.mrf.mxu0
    %v819 = vadd.f32 %v504, %v818
    %820 = vmatmul.bf16.gmra.mxu0 %v550
    %v821 = vpop.f32.mrf.mxu0
    %v822 = vadd.f32 %v504, %v821
    %v823 = vpop.f32.mrf.mxu0
    %v824 = vadd.f32 %v504, %v823
    %825 = vmatmul.bf16.gmra.mxu0 %v567
    %v826 = vpop.f32.mrf.mxu0
    %v827 = vadd.f32 %v504, %v826
    %v828 = vpop.f32.mrf.mxu0
    %v829 = vadd.f32 %v504, %v828
    %830 = vmatmul.bf16.gmra.mxu0 %v584
    %v831 = vpop.f32.mrf.mxu0
    %v832 = vadd.f32 %v504, %v831
    %v833 = vpop.f32.mrf.mxu0
    %v834 = vadd.f32 %v504, %v833
    %835 = vdwg.mxu0
    %836 = vmatpush.bf16.msra.mxu0 %v716
    %837 = vmatpush.bf16.msra.mxu0 %v712
    %838 = vmatpush.bf16.msra.mxu0 %v708
    %839 = vmatpush.bf16.msra.mxu0 %v704
    %840 = vmatpush.bf16.msra.mxu0 %v700
    %841 = vmatpush.bf16.msra.mxu0 %v696
    %842 = vmatpush.bf16.msra.mxu0 %v692
    %843 = vmatpush.bf16.msra.mxu0 %v688
    %844 = vmatmul.bf16.gmra.mxu0 %v533
    %v845 = vpop.f32.mrf.mxu0
    %v846 = vadd.f32 %v505, %v845
    %v847 = vpop.f32.mrf.mxu0
    %v848 = vadd.f32 %v505, %v847
    %849 = vmatmul.bf16.gmra.mxu0 %v550
    %v850 = vpop.f32.mrf.mxu0
    %v851 = vadd.f32 %v505, %v850
    %v852 = vpop.f32.mrf.mxu0
    %v853 = vadd.f32 %v505, %v852
    %854 = vmatmul.bf16.gmra.mxu0 %v567
    %v855 = vpop.f32.mrf.mxu0
    %v856 = vadd.f32 %v505, %v855
    %v857 = vpop.f32.mrf.mxu0
    %v858 = vadd.f32 %v505, %v857
    %859 = vmatmul.bf16.gmra.mxu0 %v584
    %v860 = vpop.f32.mrf.mxu0
    %v861 = vadd.f32 %v505, %v860
    %v862 = vpop.f32.mrf.mxu0
    %v863 = vadd.f32 %v505, %v862
    %864 = vdwg.mxu0
    %v865 = vmax.f32 %v759, 0.0
    %v866 = vmax.f32 %v788, 0.0
    %v867 = vmax.f32 %v817, 0.0
    %v868 = vmax.f32 %v846, 0.0
    %v869 = vmax.f32 %v761, 0.0
    %v870 = vmax.f32 %v790, 0.0
    %v871 = vmax.f32 %v819, 0.0
    %v872 = vmax.f32 %v848, 0.0
    %v873 = vmax.f32 %v764, 0.0
    %v874 = vmax.f32 %v793, 0.0
    %v875 = vmax.f32 %v822, 0.0
    %v876 = vmax.f32 %v851, 0.0
    %v877 = vmax.f32 %v766, 0.0
    %v878 = vmax.f32 %v795, 0.0
    %v879 = vmax.f32 %v824, 0.0
    %v880 = vmax.f32 %v853, 0.0
    %v881 = vmax.f32 %v769, 0.0
    %v882 = vmax.f32 %v798, 0.0
    %v883 = vmax.f32 %v827, 0.0
    %v884 = vmax.f32 %v856, 0.0
    %v885 = vmax.f32 %v771, 0.0
    %v886 = vmax.f32 %v800, 0.0
    %v887 = vmax.f32 %v829, 0.0
    %v888 = vmax.f32 %v858, 0.0
    %v889 = vmax.f32 %v774, 0.0
    %v890 = vmax.f32 %v803, 0.0
    %v891 = vmax.f32 %v832, 0.0
    %v892 = vmax.f32 %v861, 0.0
    %v893 = vmax.f32 %v776, 0.0
    %v894 = vmax.f32 %v805, 0.0
    %v895 = vmax.f32 %v834, 0.0
    %v896 = vmax.f32 %v863, 0.0
    %v897 = vpack.c.bf16 %v869, %v865
    %v898 = vpack.c.bf16 %v870, %v866
    %v899 = vpack.c.bf16 %v871, %v867
    %v900 = vpack.c.bf16 %v872, %v868
    %v901 = vpack.c.bf16 %v877, %v873
    %v902 = vpack.c.bf16 %v878, %v874
    %v903 = vpack.c.bf16 %v879, %v875
    %v904 = vpack.c.bf16 %v880, %v876
    %v905 = vpack.c.bf16 %v885, %v881
    %v906 = vpack.c.bf16 %v886, %v882
    %v907 = vpack.c.bf16 %v887, %v883
    %v908 = vpack.c.bf16 %v888, %v884
    %v909 = vpack.c.bf16 %v893, %v889
    %v910 = vpack.c.bf16 %v894, %v890
    %v911 = vpack.c.bf16 %v895, %v891
    %v912 = vpack.c.bf16 %v896, %v892
    %v914 = vperm.slane %v466, 0
    %v915 = vperm.slane %v466, 1
    %v916 = vperm.slane %v466, 2
    %v917 = vperm.slane %v466, 3
    %v918 = vperm.slane %v466, 4
    %v919 = vperm.slane %v466, 5
    %v920 = vperm.slane %v466, 6
    %v921 = vperm.slane %v466, 7
    %v1186 = vunpack.c.l.b16 %v65
    %v1187 = vunpack.c.h.b16 %v65
    %v1188 = vunpack.c.l.b16 %v66
    %v1189 = vunpack.c.h.b16 %v66
    %v1190 = vunpack.c.l.b16 %v67
    %v1191 = vunpack.c.h.b16 %v67
    %v1192 = vunpack.c.l.b16 %v68
    %v1193 = vunpack.c.h.b16 %v68
    %v1194 = vunpack.c.l.b16 %v69
    %v1195 = vunpack.c.h.b16 %v69
    %v1196 = vunpack.c.l.b16 %v70
    %v1197 = vunpack.c.h.b16 %v70
    %v1198 = vunpack.c.l.b16 %v71
    %v1199 = vunpack.c.h.b16 %v71
    %v1200 = vunpack.c.l.b16 %v72
    %v1201 = vunpack.c.h.b16 %v72
    %v1202 = vunpack.c.l.b16 %v73
    %v1203 = vunpack.c.h.b16 %v73
    %v1204 = vunpack.c.l.b16 %v74
    %v1205 = vunpack.c.h.b16 %v74
    %v1206 = vunpack.c.l.b16 %v75
    %v1207 = vunpack.c.h.b16 %v75
    %v1208 = vunpack.c.l.b16 %v76
    %v1209 = vunpack.c.h.b16 %v76
    %v1210 = vunpack.c.l.b16 %v77
    %v1211 = vunpack.c.h.b16 %v77
    %v1212 = vunpack.c.l.b16 %v78
    %v1213 = vunpack.c.h.b16 %v78
    %v1214 = vunpack.c.l.b16 %v79
    %v1215 = vunpack.c.h.b16 %v79
    %v1216 = vunpack.c.l.b16 %v80
    %v1217 = vunpack.c.h.b16 %v80
    %v1218 = vunpack.c.l.b16 %v81
    %v1219 = vunpack.c.h.b16 %v81
    %v1220 = vunpack.c.l.b16 %v82
    %v1221 = vunpack.c.h.b16 %v82
    %v1222 = vunpack.c.l.b16 %v83
    %v1223 = vunpack.c.h.b16 %v83
    %v1224 = vunpack.c.l.b16 %v84
    %v1225 = vunpack.c.h.b16 %v84
    %v1226 = vunpack.c.l.b16 %v85
    %v1227 = vunpack.c.h.b16 %v85
    %v1228 = vunpack.c.l.b16 %v86
    %v1229 = vunpack.c.h.b16 %v86
    %v1230 = vunpack.c.l.b16 %v87
    %v1231 = vunpack.c.h.b16 %v87
    %v1232 = vunpack.c.l.b16 %v88
    %v1233 = vunpack.c.h.b16 %v88
    %v1234 = vunpack.c.l.b16 %v89
    %v1235 = vunpack.c.h.b16 %v89
    %v1236 = vunpack.c.l.b16 %v90
    %v1237 = vunpack.c.h.b16 %v90
    %v1238 = vunpack.c.l.b16 %v91
    %v1239 = vunpack.c.h.b16 %v91
    %v1240 = vunpack.c.l.b16 %v92
    %v1241 = vunpack.c.h.b16 %v92
    %v1242 = vunpack.c.l.b16 %v93
    %v1243 = vunpack.c.h.b16 %v93
    %v1244 = vunpack.c.l.b16 %v94
    %v1245 = vunpack.c.h.b16 %v94
    %v1246 = vunpack.c.l.b16 %v95
    %v1247 = vunpack.c.h.b16 %v95
    %v1248 = vunpack.c.l.b16 %v96
    %v1249 = vunpack.c.h.b16 %v96
    %v1250 = vunpack.c.l.b16 %v97
    %v1251 = vunpack.c.h.b16 %v97
    %v1252 = vunpack.c.l.b16 %v98
    %v1253 = vunpack.c.h.b16 %v98
    %v1254 = vunpack.c.l.b16 %v99
    %v1255 = vunpack.c.h.b16 %v99
    %v1256 = vunpack.c.l.b16 %v100
    %v1257 = vunpack.c.h.b16 %v100
    %v1258 = vunpack.c.l.b16 %v101
    %v1259 = vunpack.c.h.b16 %v101
    %v1260 = vunpack.c.l.b16 %v102
    %v1261 = vunpack.c.h.b16 %v102
    %v1262 = vunpack.c.l.b16 %v103
    %v1263 = vunpack.c.h.b16 %v103
    %v1264 = vunpack.c.l.b16 %v104
    %v1265 = vunpack.c.h.b16 %v104
    %v1266 = vunpack.c.l.b16 %v105
    %v1267 = vunpack.c.h.b16 %v105
    %v1268 = vunpack.c.l.b16 %v106
    %v1269 = vunpack.c.h.b16 %v106
    %v1270 = vunpack.c.l.b16 %v107
    %v1271 = vunpack.c.h.b16 %v107
    %v1272 = vunpack.c.l.b16 %v108
    %v1273 = vunpack.c.h.b16 %v108
    %v1274 = vunpack.c.l.b16 %v109
    %v1275 = vunpack.c.h.b16 %v109
    %v1276 = vunpack.c.l.b16 %v110
    %v1277 = vunpack.c.h.b16 %v110
    %v1278 = vunpack.c.l.b16 %v111
    %v1279 = vunpack.c.h.b16 %v111
    %v1280 = vunpack.c.l.b16 %v112
    %v1281 = vunpack.c.h.b16 %v112
    %v1282 = vunpack.c.l.b16 %v113
    %v1283 = vunpack.c.h.b16 %v113
    %v1284 = vunpack.c.l.b16 %v114
    %v1285 = vunpack.c.h.b16 %v114
    %v1286 = vunpack.c.l.b16 %v115
    %v1287 = vunpack.c.h.b16 %v115
    %v1288 = vunpack.c.l.b16 %v116
    %v1289 = vunpack.c.h.b16 %v116
    %v1290 = vunpack.c.l.b16 %v117
    %v1291 = vunpack.c.h.b16 %v117
    %v1292 = vunpack.c.l.b16 %v118
    %v1293 = vunpack.c.h.b16 %v118
    %v1294 = vunpack.c.l.b16 %v119
    %v1295 = vunpack.c.h.b16 %v119
    %v1296 = vunpack.c.l.b16 %v120
    %v1297 = vunpack.c.h.b16 %v120
    %v1298 = vunpack.c.l.b16 %v121
    %v1299 = vunpack.c.h.b16 %v121
    %v1300 = vunpack.c.l.b16 %v122
    %v1301 = vunpack.c.h.b16 %v122
    %v1302 = vunpack.c.l.b16 %v123
    %v1303 = vunpack.c.h.b16 %v123
    %v1304 = vunpack.c.l.b16 %v124
    %v1305 = vunpack.c.h.b16 %v124
    %v1306 = vunpack.c.l.b16 %v125
    %v1307 = vunpack.c.h.b16 %v125
    %v1308 = vunpack.c.l.b16 %v126
    %v1309 = vunpack.c.h.b16 %v126
    %v1310 = vunpack.c.l.b16 %v127
    %v1311 = vunpack.c.h.b16 %v127
    %v1312 = vunpack.c.l.b16 %v128
    %v1313 = vunpack.c.h.b16 %v128
    %v1314 = vunpack.c.l.b16 %v129
    %v1315 = vunpack.c.h.b16 %v129
    %v1316 = vunpack.c.l.b16 %v130
    %v1317 = vunpack.c.h.b16 %v130
    %v1318 = vunpack.c.l.b16 %v131
    %v1319 = vunpack.c.h.b16 %v131
    %v1320 = vunpack.c.l.b16 %v132
    %v1321 = vunpack.c.h.b16 %v132
    %v1322 = vunpack.c.l.b16 %v133
    %v1323 = vunpack.c.h.b16 %v133
    %v1324 = vunpack.c.l.b16 %v134
    %v1325 = vunpack.c.h.b16 %v134
    %v1326 = vunpack.c.l.b16 %v135
    %v1327 = vunpack.c.h.b16 %v135
    %v1328 = vunpack.c.l.b16 %v136
    %v1329 = vunpack.c.h.b16 %v136
    %v1330 = vunpack.c.l.b16 %v137
    %v1331 = vunpack.c.h.b16 %v137
    %v1332 = vunpack.c.l.b16 %v138
    %v1333 = vunpack.c.h.b16 %v138
    %v1334 = vunpack.c.l.b16 %v139
    %v1335 = vunpack.c.h.b16 %v139
    %v1336 = vunpack.c.l.b16 %v140
    %v1337 = vunpack.c.h.b16 %v140
    %v1338 = vunpack.c.l.b16 %v141
    %v1339 = vunpack.c.h.b16 %v141
    %v1340 = vunpack.c.l.b16 %v142
    %v1341 = vunpack.c.h.b16 %v142
    %v1342 = vunpack.c.l.b16 %v143
    %v1343 = vunpack.c.h.b16 %v143
    %v1344 = vunpack.c.l.b16 %v144
    %v1345 = vunpack.c.h.b16 %v144
    %v1346 = vunpack.c.l.b16 %v145
    %v1347 = vunpack.c.h.b16 %v145
    %v1348 = vunpack.c.l.b16 %v146
    %v1349 = vunpack.c.h.b16 %v146
    %v1350 = vunpack.c.l.b16 %v147
    %v1351 = vunpack.c.h.b16 %v147
    %v1352 = vunpack.c.l.b16 %v148
    %v1353 = vunpack.c.h.b16 %v148
    %v1354 = vunpack.c.l.b16 %v149
    %v1355 = vunpack.c.h.b16 %v149
    %v1356 = vunpack.c.l.b16 %v150
    %v1357 = vunpack.c.h.b16 %v150
    %v1358 = vunpack.c.l.b16 %v151
    %v1359 = vunpack.c.h.b16 %v151
    %v1360 = vunpack.c.l.b16 %v152
    %v1361 = vunpack.c.h.b16 %v152
    %v1362 = vunpack.c.l.b16 %v153
    %v1363 = vunpack.c.h.b16 %v153
    %v1364 = vunpack.c.l.b16 %v154
    %v1365 = vunpack.c.h.b16 %v154
    %v1366 = vunpack.c.l.b16 %v155
    %v1367 = vunpack.c.h.b16 %v155
    %v1368 = vunpack.c.l.b16 %v156
    %v1369 = vunpack.c.h.b16 %v156
    %v1370 = vunpack.c.l.b16 %v157
    %v1371 = vunpack.c.h.b16 %v157
    %v1372 = vunpack.c.l.b16 %v158
    %v1373 = vunpack.c.h.b16 %v158
    %v1374 = vunpack.c.l.b16 %v159
    %v1375 = vunpack.c.h.b16 %v159
    %v1376 = vunpack.c.l.b16 %v160
    %v1377 = vunpack.c.h.b16 %v160
    %v1378 = vunpack.c.l.b16 %v161
    %v1379 = vunpack.c.h.b16 %v161
    %v1380 = vunpack.c.l.b16 %v162
    %v1381 = vunpack.c.h.b16 %v162
    %v1382 = vunpack.c.l.b16 %v163
    %v1383 = vunpack.c.h.b16 %v163
    %v1384 = vunpack.c.l.b16 %v164
    %v1385 = vunpack.c.h.b16 %v164
    %v1386 = vunpack.c.l.b16 %v165
    %v1387 = vunpack.c.h.b16 %v165
    %v1388 = vunpack.c.l.b16 %v166
    %v1389 = vunpack.c.h.b16 %v166
    %v1390 = vunpack.c.l.b16 %v167
    %v1391 = vunpack.c.h.b16 %v167
    %v1392 = vunpack.c.l.b16 %v168
    %v1393 = vunpack.c.h.b16 %v168
    %v1394 = vunpack.c.l.b16 %v169
    %v1395 = vunpack.c.h.b16 %v169
    %v1396 = vunpack.c.l.b16 %v170
    %v1397 = vunpack.c.h.b16 %v170
    %v1398 = vunpack.c.l.b16 %v171
    %v1399 = vunpack.c.h.b16 %v171
    %v1400 = vunpack.c.l.b16 %v172
    %v1401 = vunpack.c.h.b16 %v172
    %v1402 = vunpack.c.l.b16 %v173
    %v1403 = vunpack.c.h.b16 %v173
    %v1404 = vunpack.c.l.b16 %v174
    %v1405 = vunpack.c.h.b16 %v174
    %v1406 = vunpack.c.l.b16 %v175
    %v1407 = vunpack.c.h.b16 %v175
    %v1408 = vunpack.c.l.b16 %v176
    %v1409 = vunpack.c.h.b16 %v176
    %v1410 = vunpack.c.l.b16 %v177
    %v1411 = vunpack.c.h.b16 %v177
    %v1412 = vunpack.c.l.b16 %v178
    %v1413 = vunpack.c.h.b16 %v178
    %v1414 = vunpack.c.l.b16 %v179
    %v1415 = vunpack.c.h.b16 %v179
    %v1416 = vunpack.c.l.b16 %v180
    %v1417 = vunpack.c.h.b16 %v180
    %v1418 = vunpack.c.l.b16 %v181
    %v1419 = vunpack.c.h.b16 %v181
    %v1420 = vunpack.c.l.b16 %v182
    %v1421 = vunpack.c.h.b16 %v182
    %v1422 = vunpack.c.l.b16 %v183
    %v1423 = vunpack.c.h.b16 %v183
    %v1424 = vunpack.c.l.b16 %v184
    %v1425 = vunpack.c.h.b16 %v184
    %v1426 = vunpack.c.l.b16 %v185
    %v1427 = vunpack.c.h.b16 %v185
    %v1428 = vunpack.c.l.b16 %v186
    %v1429 = vunpack.c.h.b16 %v186
    %v1430 = vunpack.c.l.b16 %v187
    %v1431 = vunpack.c.h.b16 %v187
    %v1432 = vunpack.c.l.b16 %v188
    %v1433 = vunpack.c.h.b16 %v188
    %v1434 = vunpack.c.l.b16 %v189
    %v1435 = vunpack.c.h.b16 %v189
    %v1436 = vunpack.c.l.b16 %v190
    %v1437 = vunpack.c.h.b16 %v190
    %v1438 = vunpack.c.l.b16 %v191
    %v1439 = vunpack.c.h.b16 %v191
    %v1440 = vunpack.c.l.b16 %v192
    %v1441 = vunpack.c.h.b16 %v192
    %v1442 = vunpack.c.l.b16 %v193
    %v1443 = vunpack.c.h.b16 %v193
    %v1444 = vunpack.c.l.b16 %v194
    %v1445 = vunpack.c.h.b16 %v194
    %v1446 = vunpack.c.l.b16 %v195
    %v1447 = vunpack.c.h.b16 %v195
    %v1448 = vunpack.c.l.b16 %v196
    %v1449 = vunpack.c.h.b16 %v196
    %v1450 = vunpack.c.l.b16 %v197
    %v1451 = vunpack.c.h.b16 %v197
    %v1452 = vunpack.c.l.b16 %v198
    %v1453 = vunpack.c.h.b16 %v198
    %v1454 = vunpack.c.l.b16 %v199
    %v1455 = vunpack.c.h.b16 %v199
    %v1456 = vunpack.c.l.b16 %v200
    %v1457 = vunpack.c.h.b16 %v200
    %v1458 = vunpack.c.l.b16 %v201
    %v1459 = vunpack.c.h.b16 %v201
    %v1460 = vunpack.c.l.b16 %v202
    %v1461 = vunpack.c.h.b16 %v202
    %v1462 = vunpack.c.l.b16 %v203
    %v1463 = vunpack.c.h.b16 %v203
    %v1464 = vunpack.c.l.b16 %v204
    %v1465 = vunpack.c.h.b16 %v204
    %v1466 = vunpack.c.l.b16 %v205
    %v1467 = vunpack.c.h.b16 %v205
    %v1468 = vunpack.c.l.b16 %v206
    %v1469 = vunpack.c.h.b16 %v206
    %v1470 = vunpack.c.l.b16 %v207
    %v1471 = vunpack.c.h.b16 %v207
    %v1472 = vunpack.c.l.b16 %v208
    %v1473 = vunpack.c.h.b16 %v208
    %v1474 = vunpack.c.l.b16 %v209
    %v1475 = vunpack.c.h.b16 %v209
    %v1476 = vunpack.c.l.b16 %v210
    %v1477 = vunpack.c.h.b16 %v210
    %v1478 = vunpack.c.l.b16 %v211
    %v1479 = vunpack.c.h.b16 %v211
    %v1480 = vunpack.c.l.b16 %v212
    %v1481 = vunpack.c.h.b16 %v212
    %v1482 = vunpack.c.l.b16 %v213
    %v1483 = vunpack.c.h.b16 %v213
    %v1484 = vunpack.c.l.b16 %v214
    %v1485 = vunpack.c.h.b16 %v214
    %v1486 = vunpack.c.l.b16 %v215
    %v1487 = vunpack.c.h.b16 %v215
    %v1488 = vunpack.c.l.b16 %v216
    %v1489 = vunpack.c.h.b16 %v216
    %v1490 = vunpack.c.l.b16 %v217
    %v1491 = vunpack.c.h.b16 %v217
    %v1492 = vunpack.c.l.b16 %v218
    %v1493 = vunpack.c.h.b16 %v218
    %v1494 = vunpack.c.l.b16 %v219
    %v1495 = vunpack.c.h.b16 %v219
    %v1496 = vunpack.c.l.b16 %v220
    %v1497 = vunpack.c.h.b16 %v220
    %v1498 = vunpack.c.l.b16 %v221
    %v1499 = vunpack.c.h.b16 %v221
    %v1500 = vunpack.c.l.b16 %v222
    %v1501 = vunpack.c.h.b16 %v222
    %v1502 = vunpack.c.l.b16 %v223
    %v1503 = vunpack.c.h.b16 %v223
    %v1504 = vunpack.c.l.b16 %v224
    %v1505 = vunpack.c.h.b16 %v224
    %v1506 = vunpack.c.l.b16 %v225
    %v1507 = vunpack.c.h.b16 %v225
    %v1508 = vunpack.c.l.b16 %v226
    %v1509 = vunpack.c.h.b16 %v226
    %v1510 = vunpack.c.l.b16 %v227
    %v1511 = vunpack.c.h.b16 %v227
    %v1512 = vunpack.c.l.b16 %v228
    %v1513 = vunpack.c.h.b16 %v228
    %v1514 = vunpack.c.l.b16 %v229
    %v1515 = vunpack.c.h.b16 %v229
    %v1516 = vunpack.c.l.b16 %v230
    %v1517 = vunpack.c.h.b16 %v230
    %v1518 = vunpack.c.l.b16 %v231
    %v1519 = vunpack.c.h.b16 %v231
    %v1520 = vunpack.c.l.b16 %v232
    %v1521 = vunpack.c.h.b16 %v232
    %v1522 = vunpack.c.l.b16 %v233
    %v1523 = vunpack.c.h.b16 %v233
    %v1524 = vunpack.c.l.b16 %v234
    %v1525 = vunpack.c.h.b16 %v234
    %v1526 = vunpack.c.l.b16 %v235
    %v1527 = vunpack.c.h.b16 %v235
    %v1528 = vunpack.c.l.b16 %v236
    %v1529 = vunpack.c.h.b16 %v236
    %v1530 = vunpack.c.l.b16 %v237
    %v1531 = vunpack.c.h.b16 %v237
    %v1532 = vunpack.c.l.b16 %v238
    %v1533 = vunpack.c.h.b16 %v238
    %v1534 = vunpack.c.l.b16 %v239
    %v1535 = vunpack.c.h.b16 %v239
    %v1536 = vunpack.c.l.b16 %v240
    %v1537 = vunpack.c.h.b16 %v240
    %v1538 = vunpack.c.l.b16 %v241
    %v1539 = vunpack.c.h.b16 %v241
    %v1540 = vunpack.c.l.b16 %v242
    %v1541 = vunpack.c.h.b16 %v242
    %v1542 = vunpack.c.l.b16 %v243
    %v1543 = vunpack.c.h.b16 %v243
    %v1544 = vunpack.c.l.b16 %v244
    %v1545 = vunpack.c.h.b16 %v244
    %v1546 = vunpack.c.l.b16 %v245
    %v1547 = vunpack.c.h.b16 %v245
    %v1548 = vunpack.c.l.b16 %v246
    %v1549 = vunpack.c.h.b16 %v246
    %v1550 = vunpack.c.l.b16 %v247
    %v1551 = vunpack.c.h.b16 %v247
    %v1552 = vunpack.c.l.b16 %v248
    %v1553 = vunpack.c.h.b16 %v248
    %v1554 = vunpack.c.l.b16 %v249
    %v1555 = vunpack.c.h.b16 %v249
    %v1556 = vunpack.c.l.b16 %v250
    %v1557 = vunpack.c.h.b16 %v250
    %v1558 = vunpack.c.l.b16 %v251
    %v1559 = vunpack.c.h.b16 %v251
    %v1560 = vunpack.c.l.b16 %v252
    %v1561 = vunpack.c.h.b16 %v252
    %v1562 = vunpack.c.l.b16 %v253
    %v1563 = vunpack.c.h.b16 %v253
    %v1564 = vunpack.c.l.b16 %v254
    %v1565 = vunpack.c.h.b16 %v254
    %v1566 = vunpack.c.l.b16 %v255
    %v1567 = vunpack.c.h.b16 %v255
    %v1568 = vunpack.c.l.b16 %v256
    %v1569 = vunpack.c.h.b16 %v256
    %v1570 = vunpack.c.l.b16 %v257
    %v1571 = vunpack.c.h.b16 %v257
    %v1572 = vunpack.c.l.b16 %v258
    %v1573 = vunpack.c.h.b16 %v258
    %v1574 = vunpack.c.l.b16 %v259
    %v1575 = vunpack.c.h.b16 %v259
    %v1576 = vunpack.c.l.b16 %v260
    %v1577 = vunpack.c.h.b16 %v260
    %v1578 = vunpack.c.l.b16 %v261
    %v1579 = vunpack.c.h.b16 %v261
    %v1580 = vunpack.c.l.b16 %v262
    %v1581 = vunpack.c.h.b16 %v262
    %v1582 = vunpack.c.l.b16 %v263
    %v1583 = vunpack.c.h.b16 %v263
    %v1584 = vunpack.c.l.b16 %v264
    %v1585 = vunpack.c.h.b16 %v264
    %v1586 = vunpack.c.l.b16 %v265
    %v1587 = vunpack.c.h.b16 %v265
    %v1588 = vunpack.c.l.b16 %v266
    %v1589 = vunpack.c.h.b16 %v266
    %v1590 = vunpack.c.l.b16 %v267
    %v1591 = vunpack.c.h.b16 %v267
    %v1592 = vunpack.c.l.b16 %v268
    %v1593 = vunpack.c.h.b16 %v268
    %v1594 = vunpack.c.l.b16 %v269
    %v1595 = vunpack.c.h.b16 %v269
    %v1596 = vunpack.c.l.b16 %v270
    %v1597 = vunpack.c.h.b16 %v270
    %v1598 = vunpack.c.l.b16 %v271
    %v1599 = vunpack.c.h.b16 %v271
    %v1600 = vunpack.c.l.b16 %v272
    %v1601 = vunpack.c.h.b16 %v272
    %v1602 = vunpack.c.l.b16 %v273
    %v1603 = vunpack.c.h.b16 %v273
    %v1604 = vunpack.c.l.b16 %v274
    %v1605 = vunpack.c.h.b16 %v274
    %v1606 = vunpack.c.l.b16 %v275
    %v1607 = vunpack.c.h.b16 %v275
    %v1608 = vunpack.c.l.b16 %v276
    %v1609 = vunpack.c.h.b16 %v276
    %v1610 = vunpack.c.l.b16 %v277
    %v1611 = vunpack.c.h.b16 %v277
    %v1612 = vunpack.c.l.b16 %v278
    %v1613 = vunpack.c.h.b16 %v278
    %v1614 = vunpack.c.l.b16 %v279
    %v1615 = vunpack.c.h.b16 %v279
    %v1616 = vunpack.c.l.b16 %v280
    %v1617 = vunpack.c.h.b16 %v280
    %v1618 = vunpack.c.l.b16 %v281
    %v1619 = vunpack.c.h.b16 %v281
    %v1620 = vunpack.c.l.b16 %v282
    %v1621 = vunpack.c.h.b16 %v282
    %v1622 = vunpack.c.l.b16 %v283
    %v1623 = vunpack.c.h.b16 %v283
    %v1624 = vunpack.c.l.b16 %v284
    %v1625 = vunpack.c.h.b16 %v284
    %v1626 = vunpack.c.l.b16 %v285
    %v1627 = vunpack.c.h.b16 %v285
    %v1628 = vunpack.c.l.b16 %v286
    %v1629 = vunpack.c.h.b16 %v286
    %v1630 = vunpack.c.l.b16 %v287
    %v1631 = vunpack.c.h.b16 %v287
    %v1632 = vunpack.c.l.b16 %v288
    %v1633 = vunpack.c.h.b16 %v288
    %v1634 = vunpack.c.l.b16 %v289
    %v1635 = vunpack.c.h.b16 %v289
    %v1636 = vunpack.c.l.b16 %v290
    %v1637 = vunpack.c.h.b16 %v290
    %v1638 = vunpack.c.l.b16 %v291
    %v1639 = vunpack.c.h.b16 %v291
    %v1640 = vunpack.c.l.b16 %v292
    %v1641 = vunpack.c.h.b16 %v292
    %v1642 = vunpack.c.l.b16 %v293
    %v1643 = vunpack.c.h.b16 %v293
    %v1644 = vunpack.c.l.b16 %v294
    %v1645 = vunpack.c.h.b16 %v294
    %v1646 = vunpack.c.l.b16 %v295
    %v1647 = vunpack.c.h.b16 %v295
    %v1648 = vunpack.c.l.b16 %v296
    %v1649 = vunpack.c.h.b16 %v296
    %v1650 = vunpack.c.l.b16 %v297
    %v1651 = vunpack.c.h.b16 %v297
    %v1652 = vunpack.c.l.b16 %v298
    %v1653 = vunpack.c.h.b16 %v298
    %v1654 = vunpack.c.l.b16 %v299
    %v1655 = vunpack.c.h.b16 %v299
    %v1656 = vunpack.c.l.b16 %v300
    %v1657 = vunpack.c.h.b16 %v300
    %v1658 = vunpack.c.l.b16 %v301
    %v1659 = vunpack.c.h.b16 %v301
    %v1660 = vunpack.c.l.b16 %v302
    %v1661 = vunpack.c.h.b16 %v302
    %v1662 = vunpack.c.l.b16 %v303
    %v1663 = vunpack.c.h.b16 %v303
    %v1664 = vunpack.c.l.b16 %v304
    %v1665 = vunpack.c.h.b16 %v304
    %v1666 = vunpack.c.l.b16 %v305
    %v1667 = vunpack.c.h.b16 %v305
    %v1668 = vunpack.c.l.b16 %v306
    %v1669 = vunpack.c.h.b16 %v306
    %v1670 = vunpack.c.l.b16 %v307
    %v1671 = vunpack.c.h.b16 %v307
    %v1672 = vunpack.c.l.b16 %v308
    %v1673 = vunpack.c.h.b16 %v308
    %v1674 = vunpack.c.l.b16 %v309
    %v1675 = vunpack.c.h.b16 %v309
    %v1676 = vunpack.c.l.b16 %v310
    %v1677 = vunpack.c.h.b16 %v310
    %v1678 = vunpack.c.l.b16 %v311
    %v1679 = vunpack.c.h.b16 %v311
    %v1680 = vunpack.c.l.b16 %v312
    %v1681 = vunpack.c.h.b16 %v312
    %v1682 = vunpack.c.l.b16 %v313
    %v1683 = vunpack.c.h.b16 %v313
    %v1684 = vunpack.c.l.b16 %v314
    %v1685 = vunpack.c.h.b16 %v314
    %v1686 = vunpack.c.l.b16 %v315
    %v1687 = vunpack.c.h.b16 %v315
    %v1688 = vunpack.c.l.b16 %v316
    %v1689 = vunpack.c.h.b16 %v316
    %v1690 = vunpack.c.l.b16 %v317
    %v1691 = vunpack.c.h.b16 %v317
    %v1692 = vunpack.c.l.b16 %v318
    %v1693 = vunpack.c.h.b16 %v318
    %v1694 = vunpack.c.l.b16 %v319
    %v1695 = vunpack.c.h.b16 %v319
    %v1696 = vunpack.c.l.b16 %v320
    %v1697 = vunpack.c.h.b16 %v320
    %v1698 = vpack.c.b16 %v1194, %v1186
    %v1699 = vpack.c.b16 %v1195, %v1187
    %v1700 = vpack.c.b16 %v1196, %v1188
    %v1701 = vpack.c.b16 %v1197, %v1189
    %v1702 = vpack.c.b16 %v1198, %v1190
    %v1703 = vpack.c.b16 %v1199, %v1191
    %v1704 = vpack.c.b16 %v1200, %v1192
    %v1705 = vpack.c.b16 %v1201, %v1193
    %v1706 = vpack.c.b16 %v1210, %v1202
    %v1707 = vpack.c.b16 %v1211, %v1203
    %v1708 = vpack.c.b16 %v1212, %v1204
    %v1709 = vpack.c.b16 %v1213, %v1205
    %v1710 = vpack.c.b16 %v1214, %v1206
    %v1711 = vpack.c.b16 %v1215, %v1207
    %v1712 = vpack.c.b16 %v1216, %v1208
    %v1713 = vpack.c.b16 %v1217, %v1209
    %v1714 = vpack.c.b16 %v1226, %v1218
    %v1715 = vpack.c.b16 %v1227, %v1219
    %v1716 = vpack.c.b16 %v1228, %v1220
    %v1717 = vpack.c.b16 %v1229, %v1221
    %v1718 = vpack.c.b16 %v1230, %v1222
    %v1719 = vpack.c.b16 %v1231, %v1223
    %v1720 = vpack.c.b16 %v1232, %v1224
    %v1721 = vpack.c.b16 %v1233, %v1225
    %v1722 = vpack.c.b16 %v1242, %v1234
    %v1723 = vpack.c.b16 %v1243, %v1235
    %v1724 = vpack.c.b16 %v1244, %v1236
    %v1725 = vpack.c.b16 %v1245, %v1237
    %v1726 = vpack.c.b16 %v1246, %v1238
    %v1727 = vpack.c.b16 %v1247, %v1239
    %v1728 = vpack.c.b16 %v1248, %v1240
    %v1729 = vpack.c.b16 %v1249, %v1241
    %v1730 = vpack.c.b16 %v1258, %v1250
    %v1731 = vpack.c.b16 %v1259, %v1251
    %v1732 = vpack.c.b16 %v1260, %v1252
    %v1733 = vpack.c.b16 %v1261, %v1253
    %v1734 = vpack.c.b16 %v1262, %v1254
    %v1735 = vpack.c.b16 %v1263, %v1255
    %v1736 = vpack.c.b16 %v1264, %v1256
    %v1737 = vpack.c.b16 %v1265, %v1257
    %v1738 = vpack.c.b16 %v1274, %v1266
    %v1739 = vpack.c.b16 %v1275, %v1267
    %v1740 = vpack.c.b16 %v1276, %v1268
    %v1741 = vpack.c.b16 %v1277, %v1269
    %v1742 = vpack.c.b16 %v1278, %v1270
    %v1743 = vpack.c.b16 %v1279, %v1271
    %v1744 = vpack.c.b16 %v1280, %v1272
    %v1745 = vpack.c.b16 %v1281, %v1273
    %v1746 = vpack.c.b16 %v1290, %v1282
    %v1747 = vpack.c.b16 %v1291, %v1283
    %v1748 = vpack.c.b16 %v1292, %v1284
    %v1749 = vpack.c.b16 %v1293, %v1285
    %v1750 = vpack.c.b16 %v1294, %v1286
    %v1751 = vpack.c.b16 %v1295, %v1287
    %v1752 = vpack.c.b16 %v1296, %v1288
    %v1753 = vpack.c.b16 %v1297, %v1289
    %v1754 = vpack.c.b16 %v1306, %v1298
    %v1755 = vpack.c.b16 %v1307, %v1299
    %v1756 = vpack.c.b16 %v1308, %v1300
    %v1757 = vpack.c.b16 %v1309, %v1301
    %v1758 = vpack.c.b16 %v1310, %v1302
    %v1759 = vpack.c.b16 %v1311, %v1303
    %v1760 = vpack.c.b16 %v1312, %v1304
    %v1761 = vpack.c.b16 %v1313, %v1305
    %v1762 = vpack.c.b16 %v1322, %v1314
    %v1763 = vpack.c.b16 %v1323, %v1315
    %v1764 = vpack.c.b16 %v1324, %v1316
    %v1765 = vpack.c.b16 %v1325, %v1317
    %v1766 = vpack.c.b16 %v1326, %v1318
    %v1767 = vpack.c.b16 %v1327, %v1319
    %v1768 = vpack.c.b16 %v1328, %v1320
    %v1769 = vpack.c.b16 %v1329, %v1321
    %v1770 = vpack.c.b16 %v1338, %v1330
    %v1771 = vpack.c.b16 %v1339, %v1331
    %v1772 = vpack.c.b16 %v1340, %v1332
    %v1773 = vpack.c.b16 %v1341, %v1333
    %v1774 = vpack.c.b16 %v1342, %v1334
    %v1775 = vpack.c.b16 %v1343, %v1335
    %v1776 = vpack.c.b16 %v1344, %v1336
    %v1777 = vpack.c.b16 %v1345, %v1337
    %v1778 = vpack.c.b16 %v1354, %v1346
    %v1779 = vpack.c.b16 %v1355, %v1347
    %v1780 = vpack.c.b16 %v1356, %v1348
    %v1781 = vpack.c.b16 %v1357, %v1349
    %v1782 = vpack.c.b16 %v1358, %v1350
    %v1783 = vpack.c.b16 %v1359, %v1351
    %v1784 = vpack.c.b16 %v1360, %v1352
    %v1785 = vpack.c.b16 %v1361, %v1353
    %v1786 = vpack.c.b16 %v1370, %v1362
    %v1787 = vpack.c.b16 %v1371, %v1363
    %v1788 = vpack.c.b16 %v1372, %v1364
    %v1789 = vpack.c.b16 %v1373, %v1365
    %v1790 = vpack.c.b16 %v1374, %v1366
    %v1791 = vpack.c.b16 %v1375, %v1367
    %v1792 = vpack.c.b16 %v1376, %v1368
    %v1793 = vpack.c.b16 %v1377, %v1369
    %v1794 = vpack.c.b16 %v1386, %v1378
    %v1795 = vpack.c.b16 %v1387, %v1379
    %v1796 = vpack.c.b16 %v1388, %v1380
    %v1797 = vpack.c.b16 %v1389, %v1381
    %v1798 = vpack.c.b16 %v1390, %v1382
    %v1799 = vpack.c.b16 %v1391, %v1383
    %v1800 = vpack.c.b16 %v1392, %v1384
    %v1801 = vpack.c.b16 %v1393, %v1385
    %v1802 = vpack.c.b16 %v1402, %v1394
    %v1803 = vpack.c.b16 %v1403, %v1395
    %v1804 = vpack.c.b16 %v1404, %v1396
    %v1805 = vpack.c.b16 %v1405, %v1397
    %v1806 = vpack.c.b16 %v1406, %v1398
    %v1807 = vpack.c.b16 %v1407, %v1399
    %v1808 = vpack.c.b16 %v1408, %v1400
    %v1809 = vpack.c.b16 %v1409, %v1401
    %v1810 = vpack.c.b16 %v1418, %v1410
    %v1811 = vpack.c.b16 %v1419, %v1411
    %v1812 = vpack.c.b16 %v1420, %v1412
    %v1813 = vpack.c.b16 %v1421, %v1413
    %v1814 = vpack.c.b16 %v1422, %v1414
    %v1815 = vpack.c.b16 %v1423, %v1415
    %v1816 = vpack.c.b16 %v1424, %v1416
    %v1817 = vpack.c.b16 %v1425, %v1417
    %v1818 = vpack.c.b16 %v1434, %v1426
    %v1819 = vpack.c.b16 %v1435, %v1427
    %v1820 = vpack.c.b16 %v1436, %v1428
    %v1821 = vpack.c.b16 %v1437, %v1429
    %v1822 = vpack.c.b16 %v1438, %v1430
    %v1823 = vpack.c.b16 %v1439, %v1431
    %v1824 = vpack.c.b16 %v1440, %v1432
    %v1825 = vpack.c.b16 %v1441, %v1433
    %v1826 = vpack.c.b16 %v1450, %v1442
    %v1827 = vpack.c.b16 %v1451, %v1443
    %v1828 = vpack.c.b16 %v1452, %v1444
    %v1829 = vpack.c.b16 %v1453, %v1445
    %v1830 = vpack.c.b16 %v1454, %v1446
    %v1831 = vpack.c.b16 %v1455, %v1447
    %v1832 = vpack.c.b16 %v1456, %v1448
    %v1833 = vpack.c.b16 %v1457, %v1449
    %v1834 = vpack.c.b16 %v1466, %v1458
    %v1835 = vpack.c.b16 %v1467, %v1459
    %v1836 = vpack.c.b16 %v1468, %v1460
    %v1837 = vpack.c.b16 %v1469, %v1461
    %v1838 = vpack.c.b16 %v1470, %v1462
    %v1839 = vpack.c.b16 %v1471, %v1463
    %v1840 = vpack.c.b16 %v1472, %v1464
    %v1841 = vpack.c.b16 %v1473, %v1465
    %v1842 = vpack.c.b16 %v1482, %v1474
    %v1843 = vpack.c.b16 %v1483, %v1475
    %v1844 = vpack.c.b16 %v1484, %v1476
    %v1845 = vpack.c.b16 %v1485, %v1477
    %v1846 = vpack.c.b16 %v1486, %v1478
    %v1847 = vpack.c.b16 %v1487, %v1479
    %v1848 = vpack.c.b16 %v1488, %v1480
    %v1849 = vpack.c.b16 %v1489, %v1481
    %v1850 = vpack.c.b16 %v1498, %v1490
    %v1851 = vpack.c.b16 %v1499, %v1491
    %v1852 = vpack.c.b16 %v1500, %v1492
    %v1853 = vpack.c.b16 %v1501, %v1493
    %v1854 = vpack.c.b16 %v1502, %v1494
    %v1855 = vpack.c.b16 %v1503, %v1495
    %v1856 = vpack.c.b16 %v1504, %v1496
    %v1857 = vpack.c.b16 %v1505, %v1497
    %v1858 = vpack.c.b16 %v1514, %v1506
    %v1859 = vpack.c.b16 %v1515, %v1507
    %v1860 = vpack.c.b16 %v1516, %v1508
    %v1861 = vpack.c.b16 %v1517, %v1509
    %v1862 = vpack.c.b16 %v1518, %v1510
    %v1863 = vpack.c.b16 %v1519, %v1511
    %v1864 = vpack.c.b16 %v1520, %v1512
    %v1865 = vpack.c.b16 %v1521, %v1513
    %v1866 = vpack.c.b16 %v1530, %v1522
    %v1867 = vpack.c.b16 %v1531, %v1523
    %v1868 = vpack.c.b16 %v1532, %v1524
    %v1869 = vpack.c.b16 %v1533, %v1525
    %v1870 = vpack.c.b16 %v1534, %v1526
    %v1871 = vpack.c.b16 %v1535, %v1527
    %v1872 = vpack.c.b16 %v1536, %v1528
    %v1873 = vpack.c.b16 %v1537, %v1529
    %v1874 = vpack.c.b16 %v1546, %v1538
    %v1875 = vpack.c.b16 %v1547, %v1539
    %v1876 = vpack.c.b16 %v1548, %v1540
    %v1877 = vpack.c.b16 %v1549, %v1541
    %v1878 = vpack.c.b16 %v1550, %v1542
    %v1879 = vpack.c.b16 %v1551, %v1543
    %v1880 = vpack.c.b16 %v1552, %v1544
    %v1881 = vpack.c.b16 %v1553, %v1545
    %v1882 = vpack.c.b16 %v1562, %v1554
    %v1883 = vpack.c.b16 %v1563, %v1555
    %v1884 = vpack.c.b16 %v1564, %v1556
    %v1885 = vpack.c.b16 %v1565, %v1557
    %v1886 = vpack.c.b16 %v1566, %v1558
    %v1887 = vpack.c.b16 %v1567, %v1559
    %v1888 = vpack.c.b16 %v1568, %v1560
    %v1889 = vpack.c.b16 %v1569, %v1561
    %v1890 = vpack.c.b16 %v1578, %v1570
    %v1891 = vpack.c.b16 %v1579, %v1571
    %v1892 = vpack.c.b16 %v1580, %v1572
    %v1893 = vpack.c.b16 %v1581, %v1573
    %v1894 = vpack.c.b16 %v1582, %v1574
    %v1895 = vpack.c.b16 %v1583, %v1575
    %v1896 = vpack.c.b16 %v1584, %v1576
    %v1897 = vpack.c.b16 %v1585, %v1577
    %v1898 = vpack.c.b16 %v1594, %v1586
    %v1899 = vpack.c.b16 %v1595, %v1587
    %v1900 = vpack.c.b16 %v1596, %v1588
    %v1901 = vpack.c.b16 %v1597, %v1589
    %v1902 = vpack.c.b16 %v1598, %v1590
    %v1903 = vpack.c.b16 %v1599, %v1591
    %v1904 = vpack.c.b16 %v1600, %v1592
    %v1905 = vpack.c.b16 %v1601, %v1593
    %v1906 = vpack.c.b16 %v1610, %v1602
    %v1907 = vpack.c.b16 %v1611, %v1603
    %v1908 = vpack.c.b16 %v1612, %v1604
    %v1909 = vpack.c.b16 %v1613, %v1605
    %v1910 = vpack.c.b16 %v1614, %v1606
    %v1911 = vpack.c.b16 %v1615, %v1607
    %v1912 = vpack.c.b16 %v1616, %v1608
    %v1913 = vpack.c.b16 %v1617, %v1609
    %v1914 = vpack.c.b16 %v1626, %v1618
    %v1915 = vpack.c.b16 %v1627, %v1619
    %v1916 = vpack.c.b16 %v1628, %v1620
    %v1917 = vpack.c.b16 %v1629, %v1621
    %v1918 = vpack.c.b16 %v1630, %v1622
    %v1919 = vpack.c.b16 %v1631, %v1623
    %v1920 = vpack.c.b16 %v1632, %v1624
    %v1921 = vpack.c.b16 %v1633, %v1625
    %v1922 = vpack.c.b16 %v1642, %v1634
    %v1923 = vpack.c.b16 %v1643, %v1635
    %v1924 = vpack.c.b16 %v1644, %v1636
    %v1925 = vpack.c.b16 %v1645, %v1637
    %v1926 = vpack.c.b16 %v1646, %v1638
    %v1927 = vpack.c.b16 %v1647, %v1639
    %v1928 = vpack.c.b16 %v1648, %v1640
    %v1929 = vpack.c.b16 %v1649, %v1641
    %v1930 = vpack.c.b16 %v1658, %v1650
    %v1931 = vpack.c.b16 %v1659, %v1651
    %v1932 = vpack.c.b16 %v1660, %v1652
    %v1933 = vpack.c.b16 %v1661, %v1653
    %v1934 = vpack.c.b16 %v1662, %v1654
    %v1935 = vpack.c.b16 %v1663, %v1655
    %v1936 = vpack.c.b16 %v1664, %v1656
    %v1937 = vpack.c.b16 %v1665, %v1657
    %v1938 = vpack.c.b16 %v1674, %v1666
    %v1939 = vpack.c.b16 %v1675, %v1667
    %v1940 = vpack.c.b16 %v1676, %v1668
    %v1941 = vpack.c.b16 %v1677, %v1669
    %v1942 = vpack.c.b16 %v1678, %v1670
    %v1943 = vpack.c.b16 %v1679, %v1671
    %v1944 = vpack.c.b16 %v1680, %v1672
    %v1945 = vpack.c.b16 %v1681, %v1673
    %v1946 = vpack.c.b16 %v1690, %v1682
    %v1947 = vpack.c.b16 %v1691, %v1683
    %v1948 = vpack.c.b16 %v1692, %v1684
    %v1949 = vpack.c.b16 %v1693, %v1685
    %v1950 = vpack.c.b16 %v1694, %v1686
    %v1951 = vpack.c.b16 %v1695, %v1687
    %v1952 = vpack.c.b16 %v1696, %v1688
    %v1953 = vpack.c.b16 %v1697, %v1689
    %2210 = vmatpush.bf16.msra.mxu0 %v1754
    %2211 = vmatpush.bf16.msra.mxu0 %v1746
    %2212 = vmatpush.bf16.msra.mxu0 %v1738
    %2213 = vmatpush.bf16.msra.mxu0 %v1730
    %2214 = vmatpush.bf16.msra.mxu0 %v1722
    %2215 = vmatpush.bf16.msra.mxu0 %v1714
    %2216 = vmatpush.bf16.msra.mxu0 %v1706
    %2217 = vmatpush.bf16.msra.mxu0 %v1698
    %2218 = vmatmul.bf16.gmra.mxu0 %v897
    %v2219 = vpop.f32.mrf.mxu0
    %v2220 = vadd.f32 %v914, %v2219
    %v2221 = vpop.f32.mrf.mxu0
    %v2222 = vadd.f32 %v914, %v2221
    %2223 = vmatmul.bf16.gmra.mxu0 %v901
    %v2224 = vpop.f32.mrf.mxu0
    %v2225 = vadd.f32 %v914, %v2224
    %v2226 = vpop.f32.mrf.mxu0
    %v2227 = vadd.f32 %v914, %v2226
    %2228 = vmatmul.bf16.gmra.mxu0 %v905
    %v2229 = vpop.f32.mrf.mxu0
    %v2230 = vadd.f32 %v914, %v2229
    %v2231 = vpop.f32.mrf.mxu0
    %v2232 = vadd.f32 %v914, %v2231
    %2233 = vmatmul.bf16.gmra.mxu0 %v909
    %v2234 = vpop.f32.mrf.mxu0
    %v2235 = vadd.f32 %v914, %v2234
    %v2236 = vpop.f32.mrf.mxu0
    %v2237 = vadd.f32 %v914, %v2236
    %2238 = vdwg.mxu0
    %2239 = vmatpush.bf16.msra.mxu0 %v1818
    %2240 = vmatpush.bf16.msra.mxu0 %v1810
    %2241 = vmatpush.bf16.msra.mxu0 %v1802
    %2242 = vmatpush.bf16.msra.mxu0 %v1794
    %2243 = vmatpush.bf16.msra.mxu0 %v1786
    %2244 = vmatpush.bf16.msra.mxu0 %v1778
    %2245 = vmatpush.bf16.msra.mxu0 %v1770
    %2246 = vmatpush.bf16.msra.mxu0 %v1762
    %2247 = vmatmul.bf16.gmra.mxu0 %v898
    %v2248 = vpop.f32.mrf.mxu0
    %v2249 = vadd.f32 %v2220, %v2248
    %v2250 = vpop.f32.mrf.mxu0
    %v2251 = vadd.f32 %v2222, %v2250
    %2252 = vmatmul.bf16.gmra.mxu0 %v902
    %v2253 = vpop.f32.mrf.mxu0
    %v2254 = vadd.f32 %v2225, %v2253
    %v2255 = vpop.f32.mrf.mxu0
    %v2256 = vadd.f32 %v2227, %v2255
    %2257 = vmatmul.bf16.gmra.mxu0 %v906
    %v2258 = vpop.f32.mrf.mxu0
    %v2259 = vadd.f32 %v2230, %v2258
    %v2260 = vpop.f32.mrf.mxu0
    %v2261 = vadd.f32 %v2232, %v2260
    %2262 = vmatmul.bf16.gmra.mxu0 %v910
    %v2263 = vpop.f32.mrf.mxu0
    %v2264 = vadd.f32 %v2235, %v2263
    %v2265 = vpop.f32.mrf.mxu0
    %v2266 = vadd.f32 %v2237, %v2265
    %2267 = vdwg.mxu0
    %2268 = vmatpush.bf16.msra.mxu0 %v1882
    %2269 = vmatpush.bf16.msra.mxu0 %v1874
    %2270 = vmatpush.bf16.msra.mxu0 %v1866
    %2271 = vmatpush.bf16.msra.mxu0 %v1858
    %2272 = vmatpush.bf16.msra.mxu0 %v1850
    %2273 = vmatpush.bf16.msra.mxu0 %v1842
    %2274 = vmatpush.bf16.msra.mxu0 %v1834
    %2275 = vmatpush.bf16.msra.mxu0 %v1826
    %2276 = vmatmul.bf16.gmra.mxu0 %v899
    %v2277 = vpop.f32.mrf.mxu0
    %v2278 = vadd.f32 %v2249, %v2277
    %v2279 = vpop.f32.mrf.mxu0
    %v2280 = vadd.f32 %v2251, %v2279
    %2281 = vmatmul.bf16.gmra.mxu0 %v903
    %v2282 = vpop.f32.mrf.mxu0
    %v2283 = vadd.f32 %v2254, %v2282
    %v2284 = vpop.f32.mrf.mxu0
    %v2285 = vadd.f32 %v2256, %v2284
    %2286 = vmatmul.bf16.gmra.mxu0 %v907
    %v2287 = vpop.f32.mrf.mxu0
    %v2288 = vadd.f32 %v2259, %v2287
    %v2289 = vpop.f32.mrf.mxu0
    %v2290 = vadd.f32 %v2261, %v2289
    %2291 = vmatmul.bf16.gmra.mxu0 %v911
    %v2292 = vpop.f32.mrf.mxu0
    %v2293 = vadd.f32 %v2264, %v2292
    %v2294 = vpop.f32.mrf.mxu0
    %v2295 = vadd.f32 %v2266, %v2294
    %2296 = vdwg.mxu0
    %2297 = vmatpush.bf16.msra.mxu0 %v1946
    %2298 = vmatpush.bf16.msra.mxu0 %v1938
    %2299 = vmatpush.bf16.msra.mxu0 %v1930
    %2300 = vmatpush.bf16.msra.mxu0 %v1922
    %2301 = vmatpush.bf16.msra.mxu0 %v1914
    %2302 = vmatpush.bf16.msra.mxu0 %v1906
    %2303 = vmatpush.bf16.msra.mxu0 %v1898
    %2304 = vmatpush.bf16.msra.mxu0 %v1890
    %2305 = vmatmul.bf16.gmra.mxu0 %v900
    %v2306 = vpop.f32.mrf.mxu0
    %v2307 = vadd.f32 %v2278, %v2306
    %v2308 = vpop.f32.mrf.mxu0
    %v2309 = vadd.f32 %v2280, %v2308
    %2310 = vmatmul.bf16.gmra.mxu0 %v904
    %v2311 = vpop.f32.mrf.mxu0
    %v2312 = vadd.f32 %v2283, %v2311
    %v2313 = vpop.f32.mrf.mxu0
    %v2314 = vadd.f32 %v2285, %v2313
    %2315 = vmatmul.bf16.gmra.mxu0 %v908
    %v2316 = vpop.f32.mrf.mxu0
    %v2317 = vadd.f32 %v2288, %v2316
    %v2318 = vpop.f32.mrf.mxu0
    %v2319 = vadd.f32 %v2290, %v2318
    %2320 = vmatmul.bf16.gmra.mxu0 %v912
    %v2321 = vpop.f32.mrf.mxu0
    %v2322 = vadd.f32 %v2293, %v2321
    %v2323 = vpop.f32.mrf.mxu0
    %v2324 = vadd.f32 %v2295, %v2323
    %2325 = vdwg.mxu0
    %2326 = vmatpush.bf16.msra.mxu0 %v1755
    %2327 = vmatpush.bf16.msra.mxu0 %v1747
    %2328 = vmatpush.bf16.msra.mxu0 %v1739
    %2329 = vmatpush.bf16.msra.mxu0 %v1731
    %2330 = vmatpush.bf16.msra.mxu0 %v1723
    %2331 = vmatpush.bf16.msra.mxu0 %v1715
    %2332 = vmatpush.bf16.msra.mxu0 %v1707
    %2333 = vmatpush.bf16.msra.mxu0 %v1699
    %2334 = vmatmul.bf16.gmra.mxu0 %v897
    %v2335 = vpop.f32.mrf.mxu0
    %v2336 = vadd.f32 %v915, %v2335
    %v2337 = vpop.f32.mrf.mxu0
    %v2338 = vadd.f32 %v915, %v2337
    %2339 = vmatmul.bf16.gmra.mxu0 %v901
    %v2340 = vpop.f32.mrf.mxu0
    %v2341 = vadd.f32 %v915, %v2340
    %v2342 = vpop.f32.mrf.mxu0
    %v2343 = vadd.f32 %v915, %v2342
    %2344 = vmatmul.bf16.gmra.mxu0 %v905
    %v2345 = vpop.f32.mrf.mxu0
    %v2346 = vadd.f32 %v915, %v2345
    %v2347 = vpop.f32.mrf.mxu0
    %v2348 = vadd.f32 %v915, %v2347
    %2349 = vmatmul.bf16.gmra.mxu0 %v909
    %v2350 = vpop.f32.mrf.mxu0
    %v2351 = vadd.f32 %v915, %v2350
    %v2352 = vpop.f32.mrf.mxu0
    %v2353 = vadd.f32 %v915, %v2352
    %2354 = vdwg.mxu0
    %2355 = vmatpush.bf16.msra.mxu0 %v1819
    %2356 = vmatpush.bf16.msra.mxu0 %v1811
    %2357 = vmatpush.bf16.msra.mxu0 %v1803
    %2358 = vmatpush.bf16.msra.mxu0 %v1795
    %2359 = vmatpush.bf16.msra.mxu0 %v1787
    %2360 = vmatpush.bf16.msra.mxu0 %v1779
    %2361 = vmatpush.bf16.msra.mxu0 %v1771
    %2362 = vmatpush.bf16.msra.mxu0 %v1763
    %2363 = vmatmul.bf16.gmra.mxu0 %v898
    %v2364 = vpop.f32.mrf.mxu0
    %v2365 = vadd.f32 %v2336, %v2364
    %v2366 = vpop.f32.mrf.mxu0
    %v2367 = vadd.f32 %v2338, %v2366
    %2368 = vmatmul.bf16.gmra.mxu0 %v902
    %v2369 = vpop.f32.mrf.mxu0
    %v2370 = vadd.f32 %v2341, %v2369
    %v2371 = vpop.f32.mrf.mxu0
    %v2372 = vadd.f32 %v2343, %v2371
    %2373 = vmatmul.bf16.gmra.mxu0 %v906
    %v2374 = vpop.f32.mrf.mxu0
    %v2375 = vadd.f32 %v2346, %v2374
    %v2376 = vpop.f32.mrf.mxu0
    %v2377 = vadd.f32 %v2348, %v2376
    %2378 = vmatmul.bf16.gmra.mxu0 %v910
    %v2379 = vpop.f32.mrf.mxu0
    %v2380 = vadd.f32 %v2351, %v2379
    %v2381 = vpop.f32.mrf.mxu0
    %v2382 = vadd.f32 %v2353, %v2381
    %2383 = vdwg.mxu0
    %2384 = vmatpush.bf16.msra.mxu0 %v1883
    %2385 = vmatpush.bf16.msra.mxu0 %v1875
    %2386 = vmatpush.bf16.msra.mxu0 %v1867
    %2387 = vmatpush.bf16.msra.mxu0 %v1859
    %2388 = vmatpush.bf16.msra.mxu0 %v1851
    %2389 = vmatpush.bf16.msra.mxu0 %v1843
    %2390 = vmatpush.bf16.msra.mxu0 %v1835
    %2391 = vmatpush.bf16.msra.mxu0 %v1827
    %2392 = vmatmul.bf16.gmra.mxu0 %v899
    %v2393 = vpop.f32.mrf.mxu0
    %v2394 = vadd.f32 %v2365, %v2393
    %v2395 = vpop.f32.mrf.mxu0
    %v2396 = vadd.f32 %v2367, %v2395
    %2397 = vmatmul.bf16.gmra.mxu0 %v903
    %v2398 = vpop.f32.mrf.mxu0
    %v2399 = vadd.f32 %v2370, %v2398
    %v2400 = vpop.f32.mrf.mxu0
    %v2401 = vadd.f32 %v2372, %v2400
    %2402 = vmatmul.bf16.gmra.mxu0 %v907
    %v2403 = vpop.f32.mrf.mxu0
    %v2404 = vadd.f32 %v2375, %v2403
    %v2405 = vpop.f32.mrf.mxu0
    %v2406 = vadd.f32 %v2377, %v2405
    %2407 = vmatmul.bf16.gmra.mxu0 %v911
    %v2408 = vpop.f32.mrf.mxu0
    %v2409 = vadd.f32 %v2380, %v2408
    %v2410 = vpop.f32.mrf.mxu0
    %v2411 = vadd.f32 %v2382, %v2410
    %2412 = vdwg.mxu0
    %2413 = vmatpush.bf16.msra.mxu0 %v1947
    %2414 = vmatpush.bf16.msra.mxu0 %v1939
    %2415 = vmatpush.bf16.msra.mxu0 %v1931
    %2416 = vmatpush.bf16.msra.mxu0 %v1923
    %2417 = vmatpush.bf16.msra.mxu0 %v1915
    %2418 = vmatpush.bf16.msra.mxu0 %v1907
    %2419 = vmatpush.bf16.msra.mxu0 %v1899
    %2420 = vmatpush.bf16.msra.mxu0 %v1891
    %2421 = vmatmul.bf16.gmra.mxu0 %v900
    %v2422 = vpop.f32.mrf.mxu0
    %v2423 = vadd.f32 %v2394, %v2422
    %v2424 = vpop.f32.mrf.mxu0
    %v2425 = vadd.f32 %v2396, %v2424
    %2426 = vmatmul.bf16.gmra.mxu0 %v904
    %v2427 = vpop.f32.mrf.mxu0
    %v2428 = vadd.f32 %v2399, %v2427
    %v2429 = vpop.f32.mrf.mxu0
    %v2430 = vadd.f32 %v2401, %v2429
    %2431 = vmatmul.bf16.gmra.mxu0 %v908
    %v2432 = vpop.f32.mrf.mxu0
    %v2433 = vadd.f32 %v2404, %v2432
    %v2434 = vpop.f32.mrf.mxu0
    %v2435 = vadd.f32 %v2406, %v2434
    %2436 = vmatmul.bf16.gmra.mxu0 %v912
    %v2437 = vpop.f32.mrf.mxu0
    %v2438 = vadd.f32 %v2409, %v2437
    %v2439 = vpop.f32.mrf.mxu0
    %v2440 = vadd.f32 %v2411, %v2439
    %2441 = vdwg.mxu0
    %2442 = vmatpush.bf16.msra.mxu0 %v1756
    %2443 = vmatpush.bf16.msra.mxu0 %v1748
    %2444 = vmatpush.bf16.msra.mxu0 %v1740
    %2445 = vmatpush.bf16.msra.mxu0 %v1732
    %2446 = vmatpush.bf16.msra.mxu0 %v1724
    %2447 = vmatpush.bf16.msra.mxu0 %v1716
    %2448 = vmatpush.bf16.msra.mxu0 %v1708
    %2449 = vmatpush.bf16.msra.mxu0 %v1700
    %2450 = vmatmul.bf16.gmra.mxu0 %v897
    %v2451 = vpop.f32.mrf.mxu0
    %v2452 = vadd.f32 %v916, %v2451
    %v2453 = vpop.f32.mrf.mxu0
    %v2454 = vadd.f32 %v916, %v2453
    %2455 = vmatmul.bf16.gmra.mxu0 %v901
    %v2456 = vpop.f32.mrf.mxu0
    %v2457 = vadd.f32 %v916, %v2456
    %v2458 = vpop.f32.mrf.mxu0
    %v2459 = vadd.f32 %v916, %v2458
    %2460 = vmatmul.bf16.gmra.mxu0 %v905
    %v2461 = vpop.f32.mrf.mxu0
    %v2462 = vadd.f32 %v916, %v2461
    %v2463 = vpop.f32.mrf.mxu0
    %v2464 = vadd.f32 %v916, %v2463
    %2465 = vmatmul.bf16.gmra.mxu0 %v909
    %v2466 = vpop.f32.mrf.mxu0
    %v2467 = vadd.f32 %v916, %v2466
    %v2468 = vpop.f32.mrf.mxu0
    %v2469 = vadd.f32 %v916, %v2468
    %2470 = vdwg.mxu0
    %2471 = vmatpush.bf16.msra.mxu0 %v1820
    %2472 = vmatpush.bf16.msra.mxu0 %v1812
    %2473 = vmatpush.bf16.msra.mxu0 %v1804
    %2474 = vmatpush.bf16.msra.mxu0 %v1796
    %2475 = vmatpush.bf16.msra.mxu0 %v1788
    %2476 = vmatpush.bf16.msra.mxu0 %v1780
    %2477 = vmatpush.bf16.msra.mxu0 %v1772
    %2478 = vmatpush.bf16.msra.mxu0 %v1764
    %2479 = vmatmul.bf16.gmra.mxu0 %v898
    %v2480 = vpop.f32.mrf.mxu0
    %v2481 = vadd.f32 %v2452, %v2480
    %v2482 = vpop.f32.mrf.mxu0
    %v2483 = vadd.f32 %v2454, %v2482
    %2484 = vmatmul.bf16.gmra.mxu0 %v902
    %v2485 = vpop.f32.mrf.mxu0
    %v2486 = vadd.f32 %v2457, %v2485
    %v2487 = vpop.f32.mrf.mxu0
    %v2488 = vadd.f32 %v2459, %v2487
    %2489 = vmatmul.bf16.gmra.mxu0 %v906
    %v2490 = vpop.f32.mrf.mxu0
    %v2491 = vadd.f32 %v2462, %v2490
    %v2492 = vpop.f32.mrf.mxu0
    %v2493 = vadd.f32 %v2464, %v2492
    %2494 = vmatmul.bf16.gmra.mxu0 %v910
    %v2495 = vpop.f32.mrf.mxu0
    %v2496 = vadd.f32 %v2467, %v2495
    %v2497 = vpop.f32.mrf.mxu0
    %v2498 = vadd.f32 %v2469, %v2497
    %2499 = vdwg.mxu0
    %2500 = vmatpush.bf16.msra.mxu0 %v1884
    %2501 = vmatpush.bf16.msra.mxu0 %v1876
    %2502 = vmatpush.bf16.msra.mxu0 %v1868
    %2503 = vmatpush.bf16.msra.mxu0 %v1860
    %2504 = vmatpush.bf16.msra.mxu0 %v1852
    %2505 = vmatpush.bf16.msra.mxu0 %v1844
    %2506 = vmatpush.bf16.msra.mxu0 %v1836
    %2507 = vmatpush.bf16.msra.mxu0 %v1828
    %2508 = vmatmul.bf16.gmra.mxu0 %v899
    %v2509 = vpop.f32.mrf.mxu0
    %v2510 = vadd.f32 %v2481, %v2509
    %v2511 = vpop.f32.mrf.mxu0
    %v2512 = vadd.f32 %v2483, %v2511
    %2513 = vmatmul.bf16.gmra.mxu0 %v903
    %v2514 = vpop.f32.mrf.mxu0
    %v2515 = vadd.f32 %v2486, %v2514
    %v2516 = vpop.f32.mrf.mxu0
    %v2517 = vadd.f32 %v2488, %v2516
    %2518 = vmatmul.bf16.gmra.mxu0 %v907
    %v2519 = vpop.f32.mrf.mxu0
    %v2520 = vadd.f32 %v2491, %v2519
    %v2521 = vpop.f32.mrf.mxu0
    %v2522 = vadd.f32 %v2493, %v2521
    %2523 = vmatmul.bf16.gmra.mxu0 %v911
    %v2524 = vpop.f32.mrf.mxu0
    %v2525 = vadd.f32 %v2496, %v2524
    %v2526 = vpop.f32.mrf.mxu0
    %v2527 = vadd.f32 %v2498, %v2526
    %2528 = vdwg.mxu0
    %2529 = vmatpush.bf16.msra.mxu0 %v1948
    %2530 = vmatpush.bf16.msra.mxu0 %v1940
    %2531 = vmatpush.bf16.msra.mxu0 %v1932
    %2532 = vmatpush.bf16.msra.mxu0 %v1924
    %2533 = vmatpush.bf16.msra.mxu0 %v1916
    %2534 = vmatpush.bf16.msra.mxu0 %v1908
    %2535 = vmatpush.bf16.msra.mxu0 %v1900
    %2536 = vmatpush.bf16.msra.mxu0 %v1892
    %2537 = vmatmul.bf16.gmra.mxu0 %v900
    %v2538 = vpop.f32.mrf.mxu0
    %v2539 = vadd.f32 %v2510, %v2538
    %v2540 = vpop.f32.mrf.mxu0
    %v2541 = vadd.f32 %v2512, %v2540
    %2542 = vmatmul.bf16.gmra.mxu0 %v904
    %v2543 = vpop.f32.mrf.mxu0
    %v2544 = vadd.f32 %v2515, %v2543
    %v2545 = vpop.f32.mrf.mxu0
    %v2546 = vadd.f32 %v2517, %v2545
    %2547 = vmatmul.bf16.gmra.mxu0 %v908
    %v2548 = vpop.f32.mrf.mxu0
    %v2549 = vadd.f32 %v2520, %v2548
    %v2550 = vpop.f32.mrf.mxu0
    %v2551 = vadd.f32 %v2522, %v2550
    %2552 = vmatmul.bf16.gmra.mxu0 %v912
    %v2553 = vpop.f32.mrf.mxu0
    %v2554 = vadd.f32 %v2525, %v2553
    %v2555 = vpop.f32.mrf.mxu0
    %v2556 = vadd.f32 %v2527, %v2555
    %2557 = vdwg.mxu0
    %2558 = vmatpush.bf16.msra.mxu0 %v1757
    %2559 = vmatpush.bf16.msra.mxu0 %v1749
    %2560 = vmatpush.bf16.msra.mxu0 %v1741
    %2561 = vmatpush.bf16.msra.mxu0 %v1733
    %2562 = vmatpush.bf16.msra.mxu0 %v1725
    %2563 = vmatpush.bf16.msra.mxu0 %v1717
    %2564 = vmatpush.bf16.msra.mxu0 %v1709
    %2565 = vmatpush.bf16.msra.mxu0 %v1701
    %2566 = vmatmul.bf16.gmra.mxu0 %v897
    %v2567 = vpop.f32.mrf.mxu0
    %v2568 = vadd.f32 %v917, %v2567
    %v2569 = vpop.f32.mrf.mxu0
    %v2570 = vadd.f32 %v917, %v2569
    %2571 = vmatmul.bf16.gmra.mxu0 %v901
    %v2572 = vpop.f32.mrf.mxu0
    %v2573 = vadd.f32 %v917, %v2572
    %v2574 = vpop.f32.mrf.mxu0
    %v2575 = vadd.f32 %v917, %v2574
    %2576 = vmatmul.bf16.gmra.mxu0 %v905
    %v2577 = vpop.f32.mrf.mxu0
    %v2578 = vadd.f32 %v917, %v2577
    %v2579 = vpop.f32.mrf.mxu0
    %v2580 = vadd.f32 %v917, %v2579
    %2581 = vmatmul.bf16.gmra.mxu0 %v909
    %v2582 = vpop.f32.mrf.mxu0
    %v2583 = vadd.f32 %v917, %v2582
    %v2584 = vpop.f32.mrf.mxu0
    %v2585 = vadd.f32 %v917, %v2584
    %2586 = vdwg.mxu0
    %2587 = vmatpush.bf16.msra.mxu0 %v1821
    %2588 = vmatpush.bf16.msra.mxu0 %v1813
    %2589 = vmatpush.bf16.msra.mxu0 %v1805
    %2590 = vmatpush.bf16.msra.mxu0 %v1797
    %2591 = vmatpush.bf16.msra.mxu0 %v1789
    %2592 = vmatpush.bf16.msra.mxu0 %v1781
    %2593 = vmatpush.bf16.msra.mxu0 %v1773
    %2594 = vmatpush.bf16.msra.mxu0 %v1765
    %2595 = vmatmul.bf16.gmra.mxu0 %v898
    %v2596 = vpop.f32.mrf.mxu0
    %v2597 = vadd.f32 %v2568, %v2596
    %v2598 = vpop.f32.mrf.mxu0
    %v2599 = vadd.f32 %v2570, %v2598
    %2600 = vmatmul.bf16.gmra.mxu0 %v902
    %v2601 = vpop.f32.mrf.mxu0
    %v2602 = vadd.f32 %v2573, %v2601
    %v2603 = vpop.f32.mrf.mxu0
    %v2604 = vadd.f32 %v2575, %v2603
    %2605 = vmatmul.bf16.gmra.mxu0 %v906
    %v2606 = vpop.f32.mrf.mxu0
    %v2607 = vadd.f32 %v2578, %v2606
    %v2608 = vpop.f32.mrf.mxu0
    %v2609 = vadd.f32 %v2580, %v2608
    %2610 = vmatmul.bf16.gmra.mxu0 %v910
    %v2611 = vpop.f32.mrf.mxu0
    %v2612 = vadd.f32 %v2583, %v2611
    %v2613 = vpop.f32.mrf.mxu0
    %v2614 = vadd.f32 %v2585, %v2613
    %2615 = vdwg.mxu0
    %2616 = vmatpush.bf16.msra.mxu0 %v1885
    %2617 = vmatpush.bf16.msra.mxu0 %v1877
    %2618 = vmatpush.bf16.msra.mxu0 %v1869
    %2619 = vmatpush.bf16.msra.mxu0 %v1861
    %2620 = vmatpush.bf16.msra.mxu0 %v1853
    %2621 = vmatpush.bf16.msra.mxu0 %v1845
    %2622 = vmatpush.bf16.msra.mxu0 %v1837
    %2623 = vmatpush.bf16.msra.mxu0 %v1829
    %2624 = vmatmul.bf16.gmra.mxu0 %v899
    %v2625 = vpop.f32.mrf.mxu0
    %v2626 = vadd.f32 %v2597, %v2625
    %v2627 = vpop.f32.mrf.mxu0
    %v2628 = vadd.f32 %v2599, %v2627
    %2629 = vmatmul.bf16.gmra.mxu0 %v903
    %v2630 = vpop.f32.mrf.mxu0
    %v2631 = vadd.f32 %v2602, %v2630
    %v2632 = vpop.f32.mrf.mxu0
    %v2633 = vadd.f32 %v2604, %v2632
    %2634 = vmatmul.bf16.gmra.mxu0 %v907
    %v2635 = vpop.f32.mrf.mxu0
    %v2636 = vadd.f32 %v2607, %v2635
    %v2637 = vpop.f32.mrf.mxu0
    %v2638 = vadd.f32 %v2609, %v2637
    %2639 = vmatmul.bf16.gmra.mxu0 %v911
    %v2640 = vpop.f32.mrf.mxu0
    %v2641 = vadd.f32 %v2612, %v2640
    %v2642 = vpop.f32.mrf.mxu0
    %v2643 = vadd.f32 %v2614, %v2642
    %2644 = vdwg.mxu0
    %2645 = vmatpush.bf16.msra.mxu0 %v1949
    %2646 = vmatpush.bf16.msra.mxu0 %v1941
    %2647 = vmatpush.bf16.msra.mxu0 %v1933
    %2648 = vmatpush.bf16.msra.mxu0 %v1925
    %2649 = vmatpush.bf16.msra.mxu0 %v1917
    %2650 = vmatpush.bf16.msra.mxu0 %v1909
    %2651 = vmatpush.bf16.msra.mxu0 %v1901
    %2652 = vmatpush.bf16.msra.mxu0 %v1893
    %2653 = vmatmul.bf16.gmra.mxu0 %v900
    %v2654 = vpop.f32.mrf.mxu0
    %v2655 = vadd.f32 %v2626, %v2654
    %v2656 = vpop.f32.mrf.mxu0
    %v2657 = vadd.f32 %v2628, %v2656
    %2658 = vmatmul.bf16.gmra.mxu0 %v904
    %v2659 = vpop.f32.mrf.mxu0
    %v2660 = vadd.f32 %v2631, %v2659
    %v2661 = vpop.f32.mrf.mxu0
    %v2662 = vadd.f32 %v2633, %v2661
    %2663 = vmatmul.bf16.gmra.mxu0 %v908
    %v2664 = vpop.f32.mrf.mxu0
    %v2665 = vadd.f32 %v2636, %v2664
    %v2666 = vpop.f32.mrf.mxu0
    %v2667 = vadd.f32 %v2638, %v2666
    %2668 = vmatmul.bf16.gmra.mxu0 %v912
    %v2669 = vpop.f32.mrf.mxu0
    %v2670 = vadd.f32 %v2641, %v2669
    %v2671 = vpop.f32.mrf.mxu0
    %v2672 = vadd.f32 %v2643, %v2671
    %2673 = vdwg.mxu0
    %2674 = vmatpush.bf16.msra.mxu0 %v1758
    %2675 = vmatpush.bf16.msra.mxu0 %v1750
    %2676 = vmatpush.bf16.msra.mxu0 %v1742
    %2677 = vmatpush.bf16.msra.mxu0 %v1734
    %2678 = vmatpush.bf16.msra.mxu0 %v1726
    %2679 = vmatpush.bf16.msra.mxu0 %v1718
    %2680 = vmatpush.bf16.msra.mxu0 %v1710
    %2681 = vmatpush.bf16.msra.mxu0 %v1702
    %2682 = vmatmul.bf16.gmra.mxu0 %v897
    %v2683 = vpop.f32.mrf.mxu0
    %v2684 = vadd.f32 %v918, %v2683
    %v2685 = vpop.f32.mrf.mxu0
    %v2686 = vadd.f32 %v918, %v2685
    %2687 = vmatmul.bf16.gmra.mxu0 %v901
    %v2688 = vpop.f32.mrf.mxu0
    %v2689 = vadd.f32 %v918, %v2688
    %v2690 = vpop.f32.mrf.mxu0
    %v2691 = vadd.f32 %v918, %v2690
    %2692 = vmatmul.bf16.gmra.mxu0 %v905
    %v2693 = vpop.f32.mrf.mxu0
    %v2694 = vadd.f32 %v918, %v2693
    %v2695 = vpop.f32.mrf.mxu0
    %v2696 = vadd.f32 %v918, %v2695
    %2697 = vmatmul.bf16.gmra.mxu0 %v909
    %v2698 = vpop.f32.mrf.mxu0
    %v2699 = vadd.f32 %v918, %v2698
    %v2700 = vpop.f32.mrf.mxu0
    %v2701 = vadd.f32 %v918, %v2700
    %2702 = vdwg.mxu0
    %2703 = vmatpush.bf16.msra.mxu0 %v1822
    %2704 = vmatpush.bf16.msra.mxu0 %v1814
    %2705 = vmatpush.bf16.msra.mxu0 %v1806
    %2706 = vmatpush.bf16.msra.mxu0 %v1798
    %2707 = vmatpush.bf16.msra.mxu0 %v1790
    %2708 = vmatpush.bf16.msra.mxu0 %v1782
    %2709 = vmatpush.bf16.msra.mxu0 %v1774
    %2710 = vmatpush.bf16.msra.mxu0 %v1766
    %2711 = vmatmul.bf16.gmra.mxu0 %v898
    %v2712 = vpop.f32.mrf.mxu0
    %v2713 = vadd.f32 %v2684, %v2712
    %v2714 = vpop.f32.mrf.mxu0
    %v2715 = vadd.f32 %v2686, %v2714
    %2716 = vmatmul.bf16.gmra.mxu0 %v902
    %v2717 = vpop.f32.mrf.mxu0
    %v2718 = vadd.f32 %v2689, %v2717
    %v2719 = vpop.f32.mrf.mxu0
    %v2720 = vadd.f32 %v2691, %v2719
    %2721 = vmatmul.bf16.gmra.mxu0 %v906
    %v2722 = vpop.f32.mrf.mxu0
    %v2723 = vadd.f32 %v2694, %v2722
    %v2724 = vpop.f32.mrf.mxu0
    %v2725 = vadd.f32 %v2696, %v2724
    %2726 = vmatmul.bf16.gmra.mxu0 %v910
    %v2727 = vpop.f32.mrf.mxu0
    %v2728 = vadd.f32 %v2699, %v2727
    %v2729 = vpop.f32.mrf.mxu0
    %v2730 = vadd.f32 %v2701, %v2729
    %2731 = vdwg.mxu0
    %2732 = vmatpush.bf16.msra.mxu0 %v1886
    %2733 = vmatpush.bf16.msra.mxu0 %v1878
    %2734 = vmatpush.bf16.msra.mxu0 %v1870
    %2735 = vmatpush.bf16.msra.mxu0 %v1862
    %2736 = vmatpush.bf16.msra.mxu0 %v1854
    %2737 = vmatpush.bf16.msra.mxu0 %v1846
    %2738 = vmatpush.bf16.msra.mxu0 %v1838
    %2739 = vmatpush.bf16.msra.mxu0 %v1830
    %2740 = vmatmul.bf16.gmra.mxu0 %v899
    %v2741 = vpop.f32.mrf.mxu0
    %v2742 = vadd.f32 %v2713, %v2741
    %v2743 = vpop.f32.mrf.mxu0
    %v2744 = vadd.f32 %v2715, %v2743
    %2745 = vmatmul.bf16.gmra.mxu0 %v903
    %v2746 = vpop.f32.mrf.mxu0
    %v2747 = vadd.f32 %v2718, %v2746
    %v2748 = vpop.f32.mrf.mxu0
    %v2749 = vadd.f32 %v2720, %v2748
    %2750 = vmatmul.bf16.gmra.mxu0 %v907
    %v2751 = vpop.f32.mrf.mxu0
    %v2752 = vadd.f32 %v2723, %v2751
    %v2753 = vpop.f32.mrf.mxu0
    %v2754 = vadd.f32 %v2725, %v2753
    %2755 = vmatmul.bf16.gmra.mxu0 %v911
    %v2756 = vpop.f32.mrf.mxu0
    %v2757 = vadd.f32 %v2728, %v2756
    %v2758 = vpop.f32.mrf.mxu0
    %v2759 = vadd.f32 %v2730, %v2758
    %2760 = vdwg.mxu0
    %2761 = vmatpush.bf16.msra.mxu0 %v1950
    %2762 = vmatpush.bf16.msra.mxu0 %v1942
    %2763 = vmatpush.bf16.msra.mxu0 %v1934
    %2764 = vmatpush.bf16.msra.mxu0 %v1926
    %2765 = vmatpush.bf16.msra.mxu0 %v1918
    %2766 = vmatpush.bf16.msra.mxu0 %v1910
    %2767 = vmatpush.bf16.msra.mxu0 %v1902
    %2768 = vmatpush.bf16.msra.mxu0 %v1894
    %2769 = vmatmul.bf16.gmra.mxu0 %v900
    %v2770 = vpop.f32.mrf.mxu0
    %v2771 = vadd.f32 %v2742, %v2770
    %v2772 = vpop.f32.mrf.mxu0
    %v2773 = vadd.f32 %v2744, %v2772
    %2774 = vmatmul.bf16.gmra.mxu0 %v904
    %v2775 = vpop.f32.mrf.mxu0
    %v2776 = vadd.f32 %v2747, %v2775
    %v2777 = vpop.f32.mrf.mxu0
    %v2778 = vadd.f32 %v2749, %v2777
    %2779 = vmatmul.bf16.gmra.mxu0 %v908
    %v2780 = vpop.f32.mrf.mxu0
    %v2781 = vadd.f32 %v2752, %v2780
    %v2782 = vpop.f32.mrf.mxu0
    %v2783 = vadd.f32 %v2754, %v2782
    %2784 = vmatmul.bf16.gmra.mxu0 %v912
    %v2785 = vpop.f32.mrf.mxu0
    %v2786 = vadd.f32 %v2757, %v2785
    %v2787 = vpop.f32.mrf.mxu0
    %v2788 = vadd.f32 %v2759, %v2787
    %2789 = vdwg.mxu0
    %2790 = vmatpush.bf16.msra.mxu0 %v1759
    %2791 = vmatpush.bf16.msra.mxu0 %v1751
    %2792 = vmatpush.bf16.msra.mxu0 %v1743
    %2793 = vmatpush.bf16.msra.mxu0 %v1735
    %2794 = vmatpush.bf16.msra.mxu0 %v1727
    %2795 = vmatpush.bf16.msra.mxu0 %v1719
    %2796 = vmatpush.bf16.msra.mxu0 %v1711
    %2797 = vmatpush.bf16.msra.mxu0 %v1703
    %2798 = vmatmul.bf16.gmra.mxu0 %v897
    %v2799 = vpop.f32.mrf.mxu0
    %v2800 = vadd.f32 %v919, %v2799
    %v2801 = vpop.f32.mrf.mxu0
    %v2802 = vadd.f32 %v919, %v2801
    %2803 = vmatmul.bf16.gmra.mxu0 %v901
    %v2804 = vpop.f32.mrf.mxu0
    %v2805 = vadd.f32 %v919, %v2804
    %v2806 = vpop.f32.mrf.mxu0
    %v2807 = vadd.f32 %v919, %v2806
    %2808 = vmatmul.bf16.gmra.mxu0 %v905
    %v2809 = vpop.f32.mrf.mxu0
    %v2810 = vadd.f32 %v919, %v2809
    %v2811 = vpop.f32.mrf.mxu0
    %v2812 = vadd.f32 %v919, %v2811
    %2813 = vmatmul.bf16.gmra.mxu0 %v909
    %v2814 = vpop.f32.mrf.mxu0
    %v2815 = vadd.f32 %v919, %v2814
    %v2816 = vpop.f32.mrf.mxu0
    %v2817 = vadd.f32 %v919, %v2816
    %2818 = vdwg.mxu0
    %2819 = vmatpush.bf16.msra.mxu0 %v1823
    %2820 = vmatpush.bf16.msra.mxu0 %v1815
    %2821 = vmatpush.bf16.msra.mxu0 %v1807
    %2822 = vmatpush.bf16.msra.mxu0 %v1799
    %2823 = vmatpush.bf16.msra.mxu0 %v1791
    %2824 = vmatpush.bf16.msra.mxu0 %v1783
    %2825 = vmatpush.bf16.msra.mxu0 %v1775
    %2826 = vmatpush.bf16.msra.mxu0 %v1767
    %2827 = vmatmul.bf16.gmra.mxu0 %v898
    %v2828 = vpop.f32.mrf.mxu0
    %v2829 = vadd.f32 %v2800, %v2828
    %v2830 = vpop.f32.mrf.mxu0
    %v2831 = vadd.f32 %v2802, %v2830
    %2832 = vmatmul.bf16.gmra.mxu0 %v902
    %v2833 = vpop.f32.mrf.mxu0
    %v2834 = vadd.f32 %v2805, %v2833
    %v2835 = vpop.f32.mrf.mxu0
    %v2836 = vadd.f32 %v2807, %v2835
    %2837 = vmatmul.bf16.gmra.mxu0 %v906
    %v2838 = vpop.f32.mrf.mxu0
    %v2839 = vadd.f32 %v2810, %v2838
    %v2840 = vpop.f32.mrf.mxu0
    %v2841 = vadd.f32 %v2812, %v2840
    %2842 = vmatmul.bf16.gmra.mxu0 %v910
    %v2843 = vpop.f32.mrf.mxu0
    %v2844 = vadd.f32 %v2815, %v2843
    %v2845 = vpop.f32.mrf.mxu0
    %v2846 = vadd.f32 %v2817, %v2845
    %2847 = vdwg.mxu0
    %2848 = vmatpush.bf16.msra.mxu0 %v1887
    %2849 = vmatpush.bf16.msra.mxu0 %v1879
    %2850 = vmatpush.bf16.msra.mxu0 %v1871
    %2851 = vmatpush.bf16.msra.mxu0 %v1863
    %2852 = vmatpush.bf16.msra.mxu0 %v1855
    %2853 = vmatpush.bf16.msra.mxu0 %v1847
    %2854 = vmatpush.bf16.msra.mxu0 %v1839
    %2855 = vmatpush.bf16.msra.mxu0 %v1831
    %2856 = vmatmul.bf16.gmra.mxu0 %v899
    %v2857 = vpop.f32.mrf.mxu0
    %v2858 = vadd.f32 %v2829, %v2857
    %v2859 = vpop.f32.mrf.mxu0
    %v2860 = vadd.f32 %v2831, %v2859
    %2861 = vmatmul.bf16.gmra.mxu0 %v903
    %v2862 = vpop.f32.mrf.mxu0
    %v2863 = vadd.f32 %v2834, %v2862
    %v2864 = vpop.f32.mrf.mxu0
    %v2865 = vadd.f32 %v2836, %v2864
    %2866 = vmatmul.bf16.gmra.mxu0 %v907
    %v2867 = vpop.f32.mrf.mxu0
    %v2868 = vadd.f32 %v2839, %v2867
    %v2869 = vpop.f32.mrf.mxu0
    %v2870 = vadd.f32 %v2841, %v2869
    %2871 = vmatmul.bf16.gmra.mxu0 %v911
    %v2872 = vpop.f32.mrf.mxu0
    %v2873 = vadd.f32 %v2844, %v2872
    %v2874 = vpop.f32.mrf.mxu0
    %v2875 = vadd.f32 %v2846, %v2874
    %2876 = vdwg.mxu0
    %2877 = vmatpush.bf16.msra.mxu0 %v1951
    %2878 = vmatpush.bf16.msra.mxu0 %v1943
    %2879 = vmatpush.bf16.msra.mxu0 %v1935
    %2880 = vmatpush.bf16.msra.mxu0 %v1927
    %2881 = vmatpush.bf16.msra.mxu0 %v1919
    %2882 = vmatpush.bf16.msra.mxu0 %v1911
    %2883 = vmatpush.bf16.msra.mxu0 %v1903
    %2884 = vmatpush.bf16.msra.mxu0 %v1895
    %2885 = vmatmul.bf16.gmra.mxu0 %v900
    %v2886 = vpop.f32.mrf.mxu0
    %v2887 = vadd.f32 %v2858, %v2886
    %v2888 = vpop.f32.mrf.mxu0
    %v2889 = vadd.f32 %v2860, %v2888
    %2890 = vmatmul.bf16.gmra.mxu0 %v904
    %v2891 = vpop.f32.mrf.mxu0
    %v2892 = vadd.f32 %v2863, %v2891
    %v2893 = vpop.f32.mrf.mxu0
    %v2894 = vadd.f32 %v2865, %v2893
    %2895 = vmatmul.bf16.gmra.mxu0 %v908
    %v2896 = vpop.f32.mrf.mxu0
    %v2897 = vadd.f32 %v2868, %v2896
    %v2898 = vpop.f32.mrf.mxu0
    %v2899 = vadd.f32 %v2870, %v2898
    %2900 = vmatmul.bf16.gmra.mxu0 %v912
    %v2901 = vpop.f32.mrf.mxu0
    %v2902 = vadd.f32 %v2873, %v2901
    %v2903 = vpop.f32.mrf.mxu0
    %v2904 = vadd.f32 %v2875, %v2903
    %2905 = vdwg.mxu0
    %2906 = vmatpush.bf16.msra.mxu0 %v1760
    %2907 = vmatpush.bf16.msra.mxu0 %v1752
    %2908 = vmatpush.bf16.msra.mxu0 %v1744
    %2909 = vmatpush.bf16.msra.mxu0 %v1736
    %2910 = vmatpush.bf16.msra.mxu0 %v1728
    %2911 = vmatpush.bf16.msra.mxu0 %v1720
    %2912 = vmatpush.bf16.msra.mxu0 %v1712
    %2913 = vmatpush.bf16.msra.mxu0 %v1704
    %2914 = vmatmul.bf16.gmra.mxu0 %v897
    %v2915 = vpop.f32.mrf.mxu0
    %v2916 = vadd.f32 %v920, %v2915
    %v2917 = vpop.f32.mrf.mxu0
    %v2918 = vadd.f32 %v920, %v2917
    %2919 = vmatmul.bf16.gmra.mxu0 %v901
    %v2920 = vpop.f32.mrf.mxu0
    %v2921 = vadd.f32 %v920, %v2920
    %v2922 = vpop.f32.mrf.mxu0
    %v2923 = vadd.f32 %v920, %v2922
    %2924 = vmatmul.bf16.gmra.mxu0 %v905
    %v2925 = vpop.f32.mrf.mxu0
    %v2926 = vadd.f32 %v920, %v2925
    %v2927 = vpop.f32.mrf.mxu0
    %v2928 = vadd.f32 %v920, %v2927
    %2929 = vmatmul.bf16.gmra.mxu0 %v909
    %v2930 = vpop.f32.mrf.mxu0
    %v2931 = vadd.f32 %v920, %v2930
    %v2932 = vpop.f32.mrf.mxu0
    %v2933 = vadd.f32 %v920, %v2932
    %2934 = vdwg.mxu0
    %2935 = vmatpush.bf16.msra.mxu0 %v1824
    %2936 = vmatpush.bf16.msra.mxu0 %v1816
    %2937 = vmatpush.bf16.msra.mxu0 %v1808
    %2938 = vmatpush.bf16.msra.mxu0 %v1800
    %2939 = vmatpush.bf16.msra.mxu0 %v1792
    %2940 = vmatpush.bf16.msra.mxu0 %v1784
    %2941 = vmatpush.bf16.msra.mxu0 %v1776
    %2942 = vmatpush.bf16.msra.mxu0 %v1768
    %2943 = vmatmul.bf16.gmra.mxu0 %v898
    %v2944 = vpop.f32.mrf.mxu0
    %v2945 = vadd.f32 %v2916, %v2944
    %v2946 = vpop.f32.mrf.mxu0
    %v2947 = vadd.f32 %v2918, %v2946
    %2948 = vmatmul.bf16.gmra.mxu0 %v902
    %v2949 = vpop.f32.mrf.mxu0
    %v2950 = vadd.f32 %v2921, %v2949
    %v2951 = vpop.f32.mrf.mxu0
    %v2952 = vadd.f32 %v2923, %v2951
    %2953 = vmatmul.bf16.gmra.mxu0 %v906
    %v2954 = vpop.f32.mrf.mxu0
    %v2955 = vadd.f32 %v2926, %v2954
    %v2956 = vpop.f32.mrf.mxu0
    %v2957 = vadd.f32 %v2928, %v2956
    %2958 = vmatmul.bf16.gmra.mxu0 %v910
    %v2959 = vpop.f32.mrf.mxu0
    %v2960 = vadd.f32 %v2931, %v2959
    %v2961 = vpop.f32.mrf.mxu0
    %v2962 = vadd.f32 %v2933, %v2961
    %2963 = vdwg.mxu0
    %2964 = vmatpush.bf16.msra.mxu0 %v1888
    %2965 = vmatpush.bf16.msra.mxu0 %v1880
    %2966 = vmatpush.bf16.msra.mxu0 %v1872
    %2967 = vmatpush.bf16.msra.mxu0 %v1864
    %2968 = vmatpush.bf16.msra.mxu0 %v1856
    %2969 = vmatpush.bf16.msra.mxu0 %v1848
    %2970 = vmatpush.bf16.msra.mxu0 %v1840
    %2971 = vmatpush.bf16.msra.mxu0 %v1832
    %2972 = vmatmul.bf16.gmra.mxu0 %v899
    %v2973 = vpop.f32.mrf.mxu0
    %v2974 = vadd.f32 %v2945, %v2973
    %v2975 = vpop.f32.mrf.mxu0
    %v2976 = vadd.f32 %v2947, %v2975
    %2977 = vmatmul.bf16.gmra.mxu0 %v903
    %v2978 = vpop.f32.mrf.mxu0
    %v2979 = vadd.f32 %v2950, %v2978
    %v2980 = vpop.f32.mrf.mxu0
    %v2981 = vadd.f32 %v2952, %v2980
    %2982 = vmatmul.bf16.gmra.mxu0 %v907
    %v2983 = vpop.f32.mrf.mxu0
    %v2984 = vadd.f32 %v2955, %v2983
    %v2985 = vpop.f32.mrf.mxu0
    %v2986 = vadd.f32 %v2957, %v2985
    %2987 = vmatmul.bf16.gmra.mxu0 %v911
    %v2988 = vpop.f32.mrf.mxu0
    %v2989 = vadd.f32 %v2960, %v2988
    %v2990 = vpop.f32.mrf.mxu0
    %v2991 = vadd.f32 %v2962, %v2990
    %2992 = vdwg.mxu0
    %2993 = vmatpush.bf16.msra.mxu0 %v1952
    %2994 = vmatpush.bf16.msra.mxu0 %v1944
    %2995 = vmatpush.bf16.msra.mxu0 %v1936
    %2996 = vmatpush.bf16.msra.mxu0 %v1928
    %2997 = vmatpush.bf16.msra.mxu0 %v1920
    %2998 = vmatpush.bf16.msra.mxu0 %v1912
    %2999 = vmatpush.bf16.msra.mxu0 %v1904
    %3000 = vmatpush.bf16.msra.mxu0 %v1896
    %3001 = vmatmul.bf16.gmra.mxu0 %v900
    %v3002 = vpop.f32.mrf.mxu0
    %v3003 = vadd.f32 %v2974, %v3002
    %v3004 = vpop.f32.mrf.mxu0
    %v3005 = vadd.f32 %v2976, %v3004
    %3006 = vmatmul.bf16.gmra.mxu0 %v904
    %v3007 = vpop.f32.mrf.mxu0
    %v3008 = vadd.f32 %v2979, %v3007
    %v3009 = vpop.f32.mrf.mxu0
    %v3010 = vadd.f32 %v2981, %v3009
    %3011 = vmatmul.bf16.gmra.mxu0 %v908
    %v3012 = vpop.f32.mrf.mxu0
    %v3013 = vadd.f32 %v2984, %v3012
    %v3014 = vpop.f32.mrf.mxu0
    %v3015 = vadd.f32 %v2986, %v3014
    %3016 = vmatmul.bf16.gmra.mxu0 %v912
    %v3017 = vpop.f32.mrf.mxu0
    %v3018 = vadd.f32 %v2989, %v3017
    %v3019 = vpop.f32.mrf.mxu0
    %v3020 = vadd.f32 %v2991, %v3019
    %3021 = vdwg.mxu0
    %3022 = vmatpush.bf16.msra.mxu0 %v1761
    %3023 = vmatpush.bf16.msra.mxu0 %v1753
    %3024 = vmatpush.bf16.msra.mxu0 %v1745
    %3025 = vmatpush.bf16.msra.mxu0 %v1737
    %3026 = vmatpush.bf16.msra.mxu0 %v1729
    %3027 = vmatpush.bf16.msra.mxu0 %v1721
    %3028 = vmatpush.bf16.msra.mxu0 %v1713
    %3029 = vmatpush.bf16.msra.mxu0 %v1705
    %3030 = vmatmul.bf16.gmra.mxu0 %v897
    %v3031 = vpop.f32.mrf.mxu0
    %v3032 = vadd.f32 %v921, %v3031
    %v3033 = vpop.f32.mrf.mxu0
    %v3034 = vadd.f32 %v921, %v3033
    %3035 = vmatmul.bf16.gmra.mxu0 %v901
    %v3036 = vpop.f32.mrf.mxu0
    %v3037 = vadd.f32 %v921, %v3036
    %v3038 = vpop.f32.mrf.mxu0
    %v3039 = vadd.f32 %v921, %v3038
    %3040 = vmatmul.bf16.gmra.mxu0 %v905
    %v3041 = vpop.f32.mrf.mxu0
    %v3042 = vadd.f32 %v921, %v3041
    %v3043 = vpop.f32.mrf.mxu0
    %v3044 = vadd.f32 %v921, %v3043
    %3045 = vmatmul.bf16.gmra.mxu0 %v909
    %v3046 = vpop.f32.mrf.mxu0
    %v3047 = vadd.f32 %v921, %v3046
    %v3048 = vpop.f32.mrf.mxu0
    %v3049 = vadd.f32 %v921, %v3048
    %3050 = vdwg.mxu0
    %3051 = vmatpush.bf16.msra.mxu0 %v1825
    %3052 = vmatpush.bf16.msra.mxu0 %v1817
    %3053 = vmatpush.bf16.msra.mxu0 %v1809
    %3054 = vmatpush.bf16.msra.mxu0 %v1801
    %3055 = vmatpush.bf16.msra.mxu0 %v1793
    %3056 = vmatpush.bf16.msra.mxu0 %v1785
    %3057 = vmatpush.bf16.msra.mxu0 %v1777
    %3058 = vmatpush.bf16.msra.mxu0 %v1769
    %3059 = vmatmul.bf16.gmra.mxu0 %v898
    %v3060 = vpop.f32.mrf.mxu0
    %v3061 = vadd.f32 %v3032, %v3060
    %v3062 = vpop.f32.mrf.mxu0
    %v3063 = vadd.f32 %v3034, %v3062
    %3064 = vmatmul.bf16.gmra.mxu0 %v902
    %v3065 = vpop.f32.mrf.mxu0
    %v3066 = vadd.f32 %v3037, %v3065
    %v3067 = vpop.f32.mrf.mxu0
    %v3068 = vadd.f32 %v3039, %v3067
    %3069 = vmatmul.bf16.gmra.mxu0 %v906
    %v3070 = vpop.f32.mrf.mxu0
    %v3071 = vadd.f32 %v3042, %v3070
    %v3072 = vpop.f32.mrf.mxu0
    %v3073 = vadd.f32 %v3044, %v3072
    %3074 = vmatmul.bf16.gmra.mxu0 %v910
    %v3075 = vpop.f32.mrf.mxu0
    %v3076 = vadd.f32 %v3047, %v3075
    %v3077 = vpop.f32.mrf.mxu0
    %v3078 = vadd.f32 %v3049, %v3077
    %3079 = vdwg.mxu0
    %3080 = vmatpush.bf16.msra.mxu0 %v1889
    %3081 = vmatpush.bf16.msra.mxu0 %v1881
    %3082 = vmatpush.bf16.msra.mxu0 %v1873
    %3083 = vmatpush.bf16.msra.mxu0 %v1865
    %3084 = vmatpush.bf16.msra.mxu0 %v1857
    %3085 = vmatpush.bf16.msra.mxu0 %v1849
    %3086 = vmatpush.bf16.msra.mxu0 %v1841
    %3087 = vmatpush.bf16.msra.mxu0 %v1833
    %3088 = vmatmul.bf16.gmra.mxu0 %v899
    %v3089 = vpop.f32.mrf.mxu0
    %v3090 = vadd.f32 %v3061, %v3089
    %v3091 = vpop.f32.mrf.mxu0
    %v3092 = vadd.f32 %v3063, %v3091
    %3093 = vmatmul.bf16.gmra.mxu0 %v903
    %v3094 = vpop.f32.mrf.mxu0
    %v3095 = vadd.f32 %v3066, %v3094
    %v3096 = vpop.f32.mrf.mxu0
    %v3097 = vadd.f32 %v3068, %v3096
    %3098 = vmatmul.bf16.gmra.mxu0 %v907
    %v3099 = vpop.f32.mrf.mxu0
    %v3100 = vadd.f32 %v3071, %v3099
    %v3101 = vpop.f32.mrf.mxu0
    %v3102 = vadd.f32 %v3073, %v3101
    %3103 = vmatmul.bf16.gmra.mxu0 %v911
    %v3104 = vpop.f32.mrf.mxu0
    %v3105 = vadd.f32 %v3076, %v3104
    %v3106 = vpop.f32.mrf.mxu0
    %v3107 = vadd.f32 %v3078, %v3106
    %3108 = vdwg.mxu0
    %3109 = vmatpush.bf16.msra.mxu0 %v1953
    %3110 = vmatpush.bf16.msra.mxu0 %v1945
    %3111 = vmatpush.bf16.msra.mxu0 %v1937
    %3112 = vmatpush.bf16.msra.mxu0 %v1929
    %3113 = vmatpush.bf16.msra.mxu0 %v1921
    %3114 = vmatpush.bf16.msra.mxu0 %v1913
    %3115 = vmatpush.bf16.msra.mxu0 %v1905
    %3116 = vmatpush.bf16.msra.mxu0 %v1897
    %3117 = vmatmul.bf16.gmra.mxu0 %v900
    %v3118 = vpop.f32.mrf.mxu0
    %v3119 = vadd.f32 %v3090, %v3118
    %v3120 = vpop.f32.mrf.mxu0
    %v3121 = vadd.f32 %v3092, %v3120
    %3122 = vmatmul.bf16.gmra.mxu0 %v904
    %v3123 = vpop.f32.mrf.mxu0
    %v3124 = vadd.f32 %v3095, %v3123
    %v3125 = vpop.f32.mrf.mxu0
    %v3126 = vadd.f32 %v3097, %v3125
    %3127 = vmatmul.bf16.gmra.mxu0 %v908
    %v3128 = vpop.f32.mrf.mxu0
    %v3129 = vadd.f32 %v3100, %v3128
    %v3130 = vpop.f32.mrf.mxu0
    %v3131 = vadd.f32 %v3102, %v3130
    %3132 = vmatmul.bf16.gmra.mxu0 %v912
    %v3133 = vpop.f32.mrf.mxu0
    %v3134 = vadd.f32 %v3105, %v3133
    %v3135 = vpop.f32.mrf.mxu0
    %v3136 = vadd.f32 %v3107, %v3135
    %3137 = vdwg.mxu0
    %v3138 = vmul.f32 %v2307, 0.5
    %v3139 = vmul.f32 %v2423, 0.5
    %v3140 = vmul.f32 %v2539, 0.5
    %v3141 = vmul.f32 %v2655, 0.5
    %v3142 = vmul.f32 %v2771, 0.5
    %v3143 = vmul.f32 %v2887, 0.5
    %v3144 = vmul.f32 %v3003, 0.5
    %v3145 = vmul.f32 %v3119, 0.5
    %v3146 = vmul.f32 %v2309, 0.5
    %v3147 = vmul.f32 %v2425, 0.5
    %v3148 = vmul.f32 %v2541, 0.5
    %v3149 = vmul.f32 %v2657, 0.5
    %v3150 = vmul.f32 %v2773, 0.5
    %v3151 = vmul.f32 %v2889, 0.5
    %v3152 = vmul.f32 %v3005, 0.5
    %v3153 = vmul.f32 %v3121, 0.5
    %v3154 = vmul.f32 %v2312, 0.5
    %v3155 = vmul.f32 %v2428, 0.5
    %v3156 = vmul.f32 %v2544, 0.5
    %v3157 = vmul.f32 %v2660, 0.5
    %v3158 = vmul.f32 %v2776, 0.5
    %v3159 = vmul.f32 %v2892, 0.5
    %v3160 = vmul.f32 %v3008, 0.5
    %v3161 = vmul.f32 %v3124, 0.5
    %v3162 = vmul.f32 %v2314, 0.5
    %v3163 = vmul.f32 %v2430, 0.5
    %v3164 = vmul.f32 %v2546, 0.5
    %v3165 = vmul.f32 %v2662, 0.5
    %v3166 = vmul.f32 %v2778, 0.5
    %v3167 = vmul.f32 %v2894, 0.5
    %v3168 = vmul.f32 %v3010, 0.5
    %v3169 = vmul.f32 %v3126, 0.5
    %v3170 = vmul.f32 %v2317, 0.5
    %v3171 = vmul.f32 %v2433, 0.5
    %v3172 = vmul.f32 %v2549, 0.5
    %v3173 = vmul.f32 %v2665, 0.5
    %v3174 = vmul.f32 %v2781, 0.5
    %v3175 = vmul.f32 %v2897, 0.5
    %v3176 = vmul.f32 %v3013, 0.5
    %v3177 = vmul.f32 %v3129, 0.5
    %v3178 = vmul.f32 %v2319, 0.5
    %v3179 = vmul.f32 %v2435, 0.5
    %v3180 = vmul.f32 %v2551, 0.5
    %v3181 = vmul.f32 %v2667, 0.5
    %v3182 = vmul.f32 %v2783, 0.5
    %v3183 = vmul.f32 %v2899, 0.5
    %v3184 = vmul.f32 %v3015, 0.5
    %v3185 = vmul.f32 %v3131, 0.5
    %v3186 = vmul.f32 %v2322, 0.5
    %v3187 = vmul.f32 %v2438, 0.5
    %v3188 = vmul.f32 %v2554, 0.5
    %v3189 = vmul.f32 %v2670, 0.5
    %v3190 = vmul.f32 %v2786, 0.5
    %v3191 = vmul.f32 %v2902, 0.5
    %v3192 = vmul.f32 %v3018, 0.5
    %v3193 = vmul.f32 %v3134, 0.5
    %v3194 = vmul.f32 %v2324, 0.5
    %v3195 = vmul.f32 %v2440, 0.5
    %v3196 = vmul.f32 %v2556, 0.5
    %v3197 = vmul.f32 %v2672, 0.5
    %v3198 = vmul.f32 %v2788, 0.5
    %v3199 = vmul.f32 %v2904, 0.5
    %v3200 = vmul.f32 %v3020, 0.5
    %v3201 = vmul.f32 %v3136, 0.5
    %v3202 = vtanh.pop %v3138
    %v3203 = vtanh.pop %v3139
    %v3204 = vtanh.pop %v3140
    %v3205 = vtanh.pop %v3141
    %v3206 = vtanh.pop %v3142
    %v3207 = vtanh.pop %v3143
    %v3208 = vtanh.pop %v3144
    %v3209 = vtanh.pop %v3145
    %v3210 = vtanh.pop %v3146
    %v3211 = vtanh.pop %v3147
    %v3212 = vtanh.pop %v3148
    %v3213 = vtanh.pop %v3149
    %v3214 = vtanh.pop %v3150
    %v3215 = vtanh.pop %v3151
    %v3216 = vtanh.pop %v3152
    %v3217 = vtanh.pop %v3153
    %v3218 = vtanh.pop %v3154
    %v3219 = vtanh.pop %v3155
    %v3220 = vtanh.pop %v3156
    %v3221 = vtanh.pop %v3157
    %v3222 = vtanh.pop %v3158
    %v3223 = vtanh.pop %v3159
    %v3224 = vtanh.pop %v3160
    %v3225 = vtanh.pop %v3161
    %v3226 = vtanh.pop %v3162
    %v3227 = vtanh.pop %v3163
    %v3228 = vtanh.pop %v3164
    %v3229 = vtanh.pop %v3165
    %v3230 = vtanh.pop %v3166
    %v3231 = vtanh.pop %v3167
    %v3232 = vtanh.pop %v3168
    %v3233 = vtanh.pop %v3169
    %v3234 = vtanh.pop %v3170
    %v3235 = vtanh.pop %v3171
    %v3236 = vtanh.pop %v3172
    %v3237 = vtanh.pop %v3173
    %v3238 = vtanh.pop %v3174
    %v3239 = vtanh.pop %v3175
    %v3240 = vtanh.pop %v3176
    %v3241 = vtanh.pop %v3177
    %v3242 = vtanh.pop %v3178
    %v3243 = vtanh.pop %v3179
    %v3244 = vtanh.pop %v3180
    %v3245 = vtanh.pop %v3181
    %v3246 = vtanh.pop %v3182
    %v3247 = vtanh.pop %v3183
    %v3248 = vtanh.pop %v3184
    %v3249 = vtanh.pop %v3185
    %v3250 = vtanh.pop %v3186
    %v3251 = vtanh.pop %v3187
    %v3252 = vtanh.pop %v3188
    %v3253 = vtanh.pop %v3189
    %v3254 = vtanh.pop %v3190
    %v3255 = vtanh.pop %v3191
    %v3256 = vtanh.pop %v3192
    %v3257 = vtanh.pop %v3193
    %v3258 = vtanh.pop %v3194
    %v3259 = vtanh.pop %v3195
    %v3260 = vtanh.pop %v3196
    %v3261 = vtanh.pop %v3197
    %v3262 = vtanh.pop %v3198
    %v3263 = vtanh.pop %v3199
    %v3264 = vtanh.pop %v3200
    %v3265 = vtanh.pop %v3201
    %v3266 = vmul.f32 %v3202, 0.5
    %v3267 = vmul.f32 %v3203, 0.5
    %v3268 = vmul.f32 %v3204, 0.5
    %v3269 = vmul.f32 %v3205, 0.5
    %v3270 = vmul.f32 %v3206, 0.5
    %v3271 = vmul.f32 %v3207, 0.5
    %v3272 = vmul.f32 %v3208, 0.5
    %v3273 = vmul.f32 %v3209, 0.5
    %v3274 = vmul.f32 %v3210, 0.5
    %v3275 = vmul.f32 %v3211, 0.5
    %v3276 = vmul.f32 %v3212, 0.5
    %v3277 = vmul.f32 %v3213, 0.5
    %v3278 = vmul.f32 %v3214, 0.5
    %v3279 = vmul.f32 %v3215, 0.5
    %v3280 = vmul.f32 %v3216, 0.5
    %v3281 = vmul.f32 %v3217, 0.5
    %v3282 = vmul.f32 %v3218, 0.5
    %v3283 = vmul.f32 %v3219, 0.5
    %v3284 = vmul.f32 %v3220, 0.5
    %v3285 = vmul.f32 %v3221, 0.5
    %v3286 = vmul.f32 %v3222, 0.5
    %v3287 = vmul.f32 %v3223, 0.5
    %v3288 = vmul.f32 %v3224, 0.5
    %v3289 = vmul.f32 %v3225, 0.5
    %v3290 = vmul.f32 %v3226, 0.5
    %v3291 = vmul.f32 %v3227, 0.5
    %v3292 = vmul.f32 %v3228, 0.5
    %v3293 = vmul.f32 %v3229, 0.5
    %v3294 = vmul.f32 %v3230, 0.5
    %v3295 = vmul.f32 %v3231, 0.5
    %v3296 = vmul.f32 %v3232, 0.5
    %v3297 = vmul.f32 %v3233, 0.5
    %v3298 = vmul.f32 %v3234, 0.5
    %v3299 = vmul.f32 %v3235, 0.5
    %v3300 = vmul.f32 %v3236, 0.5
    %v3301 = vmul.f32 %v3237, 0.5
    %v3302 = vmul.f32 %v3238, 0.5
    %v3303 = vmul.f32 %v3239, 0.5
    %v3304 = vmul.f32 %v3240, 0.5
    %v3305 = vmul.f32 %v3241, 0.5
    %v3306 = vmul.f32 %v3242, 0.5
    %v3307 = vmul.f32 %v3243, 0.5
    %v3308 = vmul.f32 %v3244, 0.5
    %v3309 = vmul.f32 %v3245, 0.5
    %v3310 = vmul.f32 %v3246, 0.5
    %v3311 = vmul.f32 %v3247, 0.5
    %v3312 = vmul.f32 %v3248, 0.5
    %v3313 = vmul.f32 %v3249, 0.5
    %v3314 = vmul.f32 %v3250, 0.5
    %v3315 = vmul.f32 %v3251, 0.5
    %v3316 = vmul.f32 %v3252, 0.5
    %v3317 = vmul.f32 %v3253, 0.5
    %v3318 = vmul.f32 %v3254, 0.5
    %v3319 = vmul.f32 %v3255, 0.5
    %v3320 = vmul.f32 %v3256, 0.5
    %v3321 = vmul.f32 %v3257, 0.5
    %v3322 = vmul.f32 %v3258, 0.5
    %v3323 = vmul.f32 %v3259, 0.5
    %v3324 = vmul.f32 %v3260, 0.5
    %v3325 = vmul.f32 %v3261, 0.5
    %v3326 = vmul.f32 %v3262, 0.5
    %v3327 = vmul.f32 %v3263, 0.5
    %v3328 = vmul.f32 %v3264, 0.5
    %v3329 = vmul.f32 %v3265, 0.5
    %v3330 = vadd.f32 %v3266, 0.5
    %v3331 = vadd.f32 %v3267, 0.5
    %v3332 = vadd.f32 %v3268, 0.5
    %v3333 = vadd.f32 %v3269, 0.5
    %v3334 = vadd.f32 %v3270, 0.5
    %v3335 = vadd.f32 %v3271, 0.5
    %v3336 = vadd.f32 %v3272, 0.5
    %v3337 = vadd.f32 %v3273, 0.5
    %v3338 = vadd.f32 %v3274, 0.5
    %v3339 = vadd.f32 %v3275, 0.5
    %v3340 = vadd.f32 %v3276, 0.5
    %v3341 = vadd.f32 %v3277, 0.5
    %v3342 = vadd.f32 %v3278, 0.5
    %v3343 = vadd.f32 %v3279, 0.5
    %v3344 = vadd.f32 %v3280, 0.5
    %v3345 = vadd.f32 %v3281, 0.5
    %v3346 = vadd.f32 %v3282, 0.5
    %v3347 = vadd.f32 %v3283, 0.5
    %v3348 = vadd.f32 %v3284, 0.5
    %v3349 = vadd.f32 %v3285, 0.5
    %v3350 = vadd.f32 %v3286, 0.5
    %v3351 = vadd.f32 %v3287, 0.5
    %v3352 = vadd.f32 %v3288, 0.5
    %v3353 = vadd.f32 %v3289, 0.5
    %v3354 = vadd.f32 %v3290, 0.5
    %v3355 = vadd.f32 %v3291, 0.5
    %v3356 = vadd.f32 %v3292, 0.5
    %v3357 = vadd.f32 %v3293, 0.5
    %v3358 = vadd.f32 %v3294, 0.5
    %v3359 = vadd.f32 %v3295, 0.5
    %v3360 = vadd.f32 %v3296, 0.5
    %v3361 = vadd.f32 %v3297, 0.5
    %v3362 = vadd.f32 %v3298, 0.5
    %v3363 = vadd.f32 %v3299, 0.5
    %v3364 = vadd.f32 %v3300, 0.5
    %v3365 = vadd.f32 %v3301, 0.5
    %v3366 = vadd.f32 %v3302, 0.5
    %v3367 = vadd.f32 %v3303, 0.5
    %v3368 = vadd.f32 %v3304, 0.5
    %v3369 = vadd.f32 %v3305, 0.5
    %v3370 = vadd.f32 %v3306, 0.5
    %v3371 = vadd.f32 %v3307, 0.5
    %v3372 = vadd.f32 %v3308, 0.5
    %v3373 = vadd.f32 %v3309, 0.5
    %v3374 = vadd.f32 %v3310, 0.5
    %v3375 = vadd.f32 %v3311, 0.5
    %v3376 = vadd.f32 %v3312, 0.5
    %v3377 = vadd.f32 %v3313, 0.5
    %v3378 = vadd.f32 %v3314, 0.5
    %v3379 = vadd.f32 %v3315, 0.5
    %v3380 = vadd.f32 %v3316, 0.5
    %v3381 = vadd.f32 %v3317, 0.5
    %v3382 = vadd.f32 %v3318, 0.5
    %v3383 = vadd.f32 %v3319, 0.5
    %v3384 = vadd.f32 %v3320, 0.5
    %v3385 = vadd.f32 %v3321, 0.5
    %v3386 = vadd.f32 %v3322, 0.5
    %v3387 = vadd.f32 %v3323, 0.5
    %v3388 = vadd.f32 %v3324, 0.5
    %v3389 = vadd.f32 %v3325, 0.5
    %v3390 = vadd.f32 %v3326, 0.5
    %v3391 = vadd.f32 %v3327, 0.5
    %v3392 = vadd.f32 %v3328, 0.5
    %v3393 = vadd.f32 %v3329, 0.5
    %v3394 = vpack.c.bf16 %v3338, %v3330
    %v3395 = vpack.c.bf16 %v3339, %v3331
    %v3396 = vpack.c.bf16 %v3340, %v3332
    %v3397 = vpack.c.bf16 %v3341, %v3333
    %v3398 = vpack.c.bf16 %v3342, %v3334
    %v3399 = vpack.c.bf16 %v3343, %v3335
    %v3400 = vpack.c.bf16 %v3344, %v3336
    %v3401 = vpack.c.bf16 %v3345, %v3337
    %v3402 = vpack.c.bf16 %v3354, %v3346
    %v3403 = vpack.c.bf16 %v3355, %v3347
    %v3404 = vpack.c.bf16 %v3356, %v3348
    %v3405 = vpack.c.bf16 %v3357, %v3349
    %v3406 = vpack.c.bf16 %v3358, %v3350
    %v3407 = vpack.c.bf16 %v3359, %v3351
    %v3408 = vpack.c.bf16 %v3360, %v3352
    %v3409 = vpack.c.bf16 %v3361, %v3353
    %v3410 = vpack.c.bf16 %v3370, %v3362
    %v3411 = vpack.c.bf16 %v3371, %v3363
    %v3412 = vpack.c.bf16 %v3372, %v3364
    %v3413 = vpack.c.bf16 %v3373, %v3365
    %v3414 = vpack.c.bf16 %v3374, %v3366
    %v3415 = vpack.c.bf16 %v3375, %v3367
    %v3416 = vpack.c.bf16 %v3376, %v3368
    %v3417 = vpack.c.bf16 %v3377, %v3369
    %v3418 = vpack.c.bf16 %v3386, %v3378
    %v3419 = vpack.c.bf16 %v3387, %v3379
    %v3420 = vpack.c.bf16 %v3388, %v3380
    %v3421 = vpack.c.bf16 %v3389, %v3381
    %v3422 = vpack.c.bf16 %v3390, %v3382
    %v3423 = vpack.c.bf16 %v3391, %v3383
    %v3424 = vpack.c.bf16 %v3392, %v3384
    %v3425 = vpack.c.bf16 %v3393, %v3385
    %v3427 = vperm.slane %v467, 0
    %v3557 = vunpack.c.l.b16 %v321
    %v3558 = vunpack.c.l.b16 %v322
    %v3559 = vunpack.c.l.b16 %v323
    %v3560 = vunpack.c.l.b16 %v324
    %v3561 = vunpack.c.l.b16 %v325
    %v3562 = vunpack.c.l.b16 %v326
    %v3563 = vunpack.c.l.b16 %v327
    %v3564 = vunpack.c.l.b16 %v328
    %v3565 = vunpack.c.l.b16 %v329
    %v3566 = vunpack.c.l.b16 %v330
    %v3567 = vunpack.c.l.b16 %v331
    %v3568 = vunpack.c.l.b16 %v332
    %v3569 = vunpack.c.l.b16 %v333
    %v3570 = vunpack.c.l.b16 %v334
    %v3571 = vunpack.c.l.b16 %v335
    %v3572 = vunpack.c.l.b16 %v336
    %v3573 = vunpack.c.l.b16 %v337
    %v3574 = vunpack.c.l.b16 %v338
    %v3575 = vunpack.c.l.b16 %v339
    %v3576 = vunpack.c.l.b16 %v340
    %v3577 = vunpack.c.l.b16 %v341
    %v3578 = vunpack.c.l.b16 %v342
    %v3579 = vunpack.c.l.b16 %v343
    %v3580 = vunpack.c.l.b16 %v344
    %v3581 = vunpack.c.l.b16 %v345
    %v3582 = vunpack.c.l.b16 %v346
    %v3583 = vunpack.c.l.b16 %v347
    %v3584 = vunpack.c.l.b16 %v348
    %v3585 = vunpack.c.l.b16 %v349
    %v3586 = vunpack.c.l.b16 %v350
    %v3587 = vunpack.c.l.b16 %v351
    %v3588 = vunpack.c.l.b16 %v352
    %v3589 = vunpack.c.l.b16 %v353
    %v3590 = vunpack.c.l.b16 %v354
    %v3591 = vunpack.c.l.b16 %v355
    %v3592 = vunpack.c.l.b16 %v356
    %v3593 = vunpack.c.l.b16 %v357
    %v3594 = vunpack.c.l.b16 %v358
    %v3595 = vunpack.c.l.b16 %v359
    %v3596 = vunpack.c.l.b16 %v360
    %v3597 = vunpack.c.l.b16 %v361
    %v3598 = vunpack.c.l.b16 %v362
    %v3599 = vunpack.c.l.b16 %v363
    %v3600 = vunpack.c.l.b16 %v364
    %v3601 = vunpack.c.l.b16 %v365
    %v3602 = vunpack.c.l.b16 %v366
    %v3603 = vunpack.c.l.b16 %v367
    %v3604 = vunpack.c.l.b16 %v368
    %v3605 = vunpack.c.l.b16 %v369
    %v3606 = vunpack.c.l.b16 %v370
    %v3607 = vunpack.c.l.b16 %v371
    %v3608 = vunpack.c.l.b16 %v372
    %v3609 = vunpack.c.l.b16 %v373
    %v3610 = vunpack.c.l.b16 %v374
    %v3611 = vunpack.c.l.b16 %v375
    %v3612 = vunpack.c.l.b16 %v376
    %v3613 = vunpack.c.l.b16 %v377
    %v3614 = vunpack.c.l.b16 %v378
    %v3615 = vunpack.c.l.b16 %v379
    %v3616 = vunpack.c.l.b16 %v380
    %v3617 = vunpack.c.l.b16 %v381
    %v3618 = vunpack.c.l.b16 %v382
    %v3619 = vunpack.c.l.b16 %v383
    %v3620 = vunpack.c.l.b16 %v384
    %v3621 = vunpack.c.l.b16 %v385
    %v3622 = vunpack.c.l.b16 %v386
    %v3623 = vunpack.c.l.b16 %v387
    %v3624 = vunpack.c.l.b16 %v388
    %v3625 = vunpack.c.l.b16 %v389
    %v3626 = vunpack.c.l.b16 %v390
    %v3627 = vunpack.c.l.b16 %v391
    %v3628 = vunpack.c.l.b16 %v392
    %v3629 = vunpack.c.l.b16 %v393
    %v3630 = vunpack.c.l.b16 %v394
    %v3631 = vunpack.c.l.b16 %v395
    %v3632 = vunpack.c.l.b16 %v396
    %v3633 = vunpack.c.l.b16 %v397
    %v3634 = vunpack.c.l.b16 %v398
    %v3635 = vunpack.c.l.b16 %v399
    %v3636 = vunpack.c.l.b16 %v400
    %v3637 = vunpack.c.l.b16 %v401
    %v3638 = vunpack.c.l.b16 %v402
    %v3639 = vunpack.c.l.b16 %v403
    %v3640 = vunpack.c.l.b16 %v404
    %v3641 = vunpack.c.l.b16 %v405
    %v3642 = vunpack.c.l.b16 %v406
    %v3643 = vunpack.c.l.b16 %v407
    %v3644 = vunpack.c.l.b16 %v408
    %v3645 = vunpack.c.l.b16 %v409
    %v3646 = vunpack.c.l.b16 %v410
    %v3647 = vunpack.c.l.b16 %v411
    %v3648 = vunpack.c.l.b16 %v412
    %v3649 = vunpack.c.l.b16 %v413
    %v3650 = vunpack.c.l.b16 %v414
    %v3651 = vunpack.c.l.b16 %v415
    %v3652 = vunpack.c.l.b16 %v416
    %v3653 = vunpack.c.l.b16 %v417
    %v3654 = vunpack.c.l.b16 %v418
    %v3655 = vunpack.c.l.b16 %v419
    %v3656 = vunpack.c.l.b16 %v420
    %v3657 = vunpack.c.l.b16 %v421
    %v3658 = vunpack.c.l.b16 %v422
    %v3659 = vunpack.c.l.b16 %v423
    %v3660 = vunpack.c.l.b16 %v424
    %v3661 = vunpack.c.l.b16 %v425
    %v3662 = vunpack.c.l.b16 %v426
    %v3663 = vunpack.c.l.b16 %v427
    %v3664 = vunpack.c.l.b16 %v428
    %v3665 = vunpack.c.l.b16 %v429
    %v3666 = vunpack.c.l.b16 %v430
    %v3667 = vunpack.c.l.b16 %v431
    %v3668 = vunpack.c.l.b16 %v432
    %v3669 = vunpack.c.l.b16 %v433
    %v3670 = vunpack.c.l.b16 %v434
    %v3671 = vunpack.c.l.b16 %v435
    %v3672 = vunpack.c.l.b16 %v436
    %v3673 = vunpack.c.l.b16 %v437
    %v3674 = vunpack.c.l.b16 %v438
    %v3675 = vunpack.c.l.b16 %v439
    %v3676 = vunpack.c.l.b16 %v440
    %v3677 = vunpack.c.l.b16 %v441
    %v3678 = vunpack.c.l.b16 %v442
    %v3679 = vunpack.c.l.b16 %v443
    %v3680 = vunpack.c.l.b16 %v444
    %v3681 = vunpack.c.l.b16 %v445
    %v3682 = vunpack.c.l.b16 %v446
    %v3683 = vunpack.c.l.b16 %v447
    %v3684 = vunpack.c.l.b16 %v448
    %v3685 = vpack.c.b16 %v3558, %v3557
    %v3686 = vpack.c.b16 %v3560, %v3559
    %v3687 = vpack.c.b16 %v3562, %v3561
    %v3688 = vpack.c.b16 %v3564, %v3563
    %v3689 = vpack.c.b16 %v3566, %v3565
    %v3690 = vpack.c.b16 %v3568, %v3567
    %v3691 = vpack.c.b16 %v3570, %v3569
    %v3692 = vpack.c.b16 %v3572, %v3571
    %v3693 = vpack.c.b16 %v3574, %v3573
    %v3694 = vpack.c.b16 %v3576, %v3575
    %v3695 = vpack.c.b16 %v3578, %v3577
    %v3696 = vpack.c.b16 %v3580, %v3579
    %v3697 = vpack.c.b16 %v3582, %v3581
    %v3698 = vpack.c.b16 %v3584, %v3583
    %v3699 = vpack.c.b16 %v3586, %v3585
    %v3700 = vpack.c.b16 %v3588, %v3587
    %v3701 = vpack.c.b16 %v3590, %v3589
    %v3702 = vpack.c.b16 %v3592, %v3591
    %v3703 = vpack.c.b16 %v3594, %v3593
    %v3704 = vpack.c.b16 %v3596, %v3595
    %v3705 = vpack.c.b16 %v3598, %v3597
    %v3706 = vpack.c.b16 %v3600, %v3599
    %v3707 = vpack.c.b16 %v3602, %v3601
    %v3708 = vpack.c.b16 %v3604, %v3603
    %v3709 = vpack.c.b16 %v3606, %v3605
    %v3710 = vpack.c.b16 %v3608, %v3607
    %v3711 = vpack.c.b16 %v3610, %v3609
    %v3712 = vpack.c.b16 %v3612, %v3611
    %v3713 = vpack.c.b16 %v3614, %v3613
    %v3714 = vpack.c.b16 %v3616, %v3615
    %v3715 = vpack.c.b16 %v3618, %v3617
    %v3716 = vpack.c.b16 %v3620, %v3619
    %v3717 = vpack.c.b16 %v3622, %v3621
    %v3718 = vpack.c.b16 %v3624, %v3623
    %v3719 = vpack.c.b16 %v3626, %v3625
    %v3720 = vpack.c.b16 %v3628, %v3627
    %v3721 = vpack.c.b16 %v3630, %v3629
    %v3722 = vpack.c.b16 %v3632, %v3631
    %v3723 = vpack.c.b16 %v3634, %v3633
    %v3724 = vpack.c.b16 %v3636, %v3635
    %v3725 = vpack.c.b16 %v3638, %v3637
    %v3726 = vpack.c.b16 %v3640, %v3639
    %v3727 = vpack.c.b16 %v3642, %v3641
    %v3728 = vpack.c.b16 %v3644, %v3643
    %v3729 = vpack.c.b16 %v3646, %v3645
    %v3730 = vpack.c.b16 %v3648, %v3647
    %v3731 = vpack.c.b16 %v3650, %v3649
    %v3732 = vpack.c.b16 %v3652, %v3651
    %v3733 = vpack.c.b16 %v3654, %v3653
    %v3734 = vpack.c.b16 %v3656, %v3655
    %v3735 = vpack.c.b16 %v3658, %v3657
    %v3736 = vpack.c.b16 %v3660, %v3659
    %v3737 = vpack.c.b16 %v3662, %v3661
    %v3738 = vpack.c.b16 %v3664, %v3663
    %v3739 = vpack.c.b16 %v3666, %v3665
    %v3740 = vpack.c.b16 %v3668, %v3667
    %v3741 = vpack.c.b16 %v3670, %v3669
    %v3742 = vpack.c.b16 %v3672, %v3671
    %v3743 = vpack.c.b16 %v3674, %v3673
    %v3744 = vpack.c.b16 %v3676, %v3675
    %v3745 = vpack.c.b16 %v3678, %v3677
    %v3746 = vpack.c.b16 %v3680, %v3679
    %v3747 = vpack.c.b16 %v3682, %v3681
    %v3748 = vpack.c.b16 %v3684, %v3683
    %3813 = vmatpush.bf16.msra.mxu0 %v3692
    %3814 = vmatpush.bf16.msra.mxu0 %v3691
    %3815 = vmatpush.bf16.msra.mxu0 %v3690
    %3816 = vmatpush.bf16.msra.mxu0 %v3689
    %3817 = vmatpush.bf16.msra.mxu0 %v3688
    %3818 = vmatpush.bf16.msra.mxu0 %v3687
    %3819 = vmatpush.bf16.msra.mxu0 %v3686
    %3820 = vmatpush.bf16.msra.mxu0 %v3685
    %3821 = vmatmul.bf16.gmra.mxu0 %v3394
    %v3822 = vpop.f32.mrf.mxu0
    %v3823 = vadd.f32 %v3427, %v3822
    %v3824 = vpop.f32.mrf.mxu0
    %v3825 = vadd.f32 %v3427, %v3824
    %3826 = vmatmul.bf16.gmra.mxu0 %v3402
    %v3827 = vpop.f32.mrf.mxu0
    %v3828 = vadd.f32 %v3427, %v3827
    %v3829 = vpop.f32.mrf.mxu0
    %v3830 = vadd.f32 %v3427, %v3829
    %3831 = vmatmul.bf16.gmra.mxu0 %v3410
    %v3832 = vpop.f32.mrf.mxu0
    %v3833 = vadd.f32 %v3427, %v3832
    %v3834 = vpop.f32.mrf.mxu0
    %v3835 = vadd.f32 %v3427, %v3834
    %3836 = vmatmul.bf16.gmra.mxu0 %v3418
    %v3837 = vpop.f32.mrf.mxu0
    %v3838 = vadd.f32 %v3427, %v3837
    %v3839 = vpop.f32.mrf.mxu0
    %v3840 = vadd.f32 %v3427, %v3839
    %3841 = vdwg.mxu0
    %3842 = vmatpush.bf16.msra.mxu0 %v3700
    %3843 = vmatpush.bf16.msra.mxu0 %v3699
    %3844 = vmatpush.bf16.msra.mxu0 %v3698
    %3845 = vmatpush.bf16.msra.mxu0 %v3697
    %3846 = vmatpush.bf16.msra.mxu0 %v3696
    %3847 = vmatpush.bf16.msra.mxu0 %v3695
    %3848 = vmatpush.bf16.msra.mxu0 %v3694
    %3849 = vmatpush.bf16.msra.mxu0 %v3693
    %3850 = vmatmul.bf16.gmra.mxu0 %v3395
    %v3851 = vpop.f32.mrf.mxu0
    %v3852 = vadd.f32 %v3823, %v3851
    %v3853 = vpop.f32.mrf.mxu0
    %v3854 = vadd.f32 %v3825, %v3853
    %3855 = vmatmul.bf16.gmra.mxu0 %v3403
    %v3856 = vpop.f32.mrf.mxu0
    %v3857 = vadd.f32 %v3828, %v3856
    %v3858 = vpop.f32.mrf.mxu0
    %v3859 = vadd.f32 %v3830, %v3858
    %3860 = vmatmul.bf16.gmra.mxu0 %v3411
    %v3861 = vpop.f32.mrf.mxu0
    %v3862 = vadd.f32 %v3833, %v3861
    %v3863 = vpop.f32.mrf.mxu0
    %v3864 = vadd.f32 %v3835, %v3863
    %3865 = vmatmul.bf16.gmra.mxu0 %v3419
    %v3866 = vpop.f32.mrf.mxu0
    %v3867 = vadd.f32 %v3838, %v3866
    %v3868 = vpop.f32.mrf.mxu0
    %v3869 = vadd.f32 %v3840, %v3868
    %3870 = vdwg.mxu0
    %3871 = vmatpush.bf16.msra.mxu0 %v3708
    %3872 = vmatpush.bf16.msra.mxu0 %v3707
    %3873 = vmatpush.bf16.msra.mxu0 %v3706
    %3874 = vmatpush.bf16.msra.mxu0 %v3705
    %3875 = vmatpush.bf16.msra.mxu0 %v3704
    %3876 = vmatpush.bf16.msra.mxu0 %v3703
    %3877 = vmatpush.bf16.msra.mxu0 %v3702
    %3878 = vmatpush.bf16.msra.mxu0 %v3701
    %3879 = vmatmul.bf16.gmra.mxu0 %v3396
    %v3880 = vpop.f32.mrf.mxu0
    %v3881 = vadd.f32 %v3852, %v3880
    %v3882 = vpop.f32.mrf.mxu0
    %v3883 = vadd.f32 %v3854, %v3882
    %3884 = vmatmul.bf16.gmra.mxu0 %v3404
    %v3885 = vpop.f32.mrf.mxu0
    %v3886 = vadd.f32 %v3857, %v3885
    %v3887 = vpop.f32.mrf.mxu0
    %v3888 = vadd.f32 %v3859, %v3887
    %3889 = vmatmul.bf16.gmra.mxu0 %v3412
    %v3890 = vpop.f32.mrf.mxu0
    %v3891 = vadd.f32 %v3862, %v3890
    %v3892 = vpop.f32.mrf.mxu0
    %v3893 = vadd.f32 %v3864, %v3892
    %3894 = vmatmul.bf16.gmra.mxu0 %v3420
    %v3895 = vpop.f32.mrf.mxu0
    %v3896 = vadd.f32 %v3867, %v3895
    %v3897 = vpop.f32.mrf.mxu0
    %v3898 = vadd.f32 %v3869, %v3897
    %3899 = vdwg.mxu0
    %3900 = vmatpush.bf16.msra.mxu0 %v3716
    %3901 = vmatpush.bf16.msra.mxu0 %v3715
    %3902 = vmatpush.bf16.msra.mxu0 %v3714
    %3903 = vmatpush.bf16.msra.mxu0 %v3713
    %3904 = vmatpush.bf16.msra.mxu0 %v3712
    %3905 = vmatpush.bf16.msra.mxu0 %v3711
    %3906 = vmatpush.bf16.msra.mxu0 %v3710
    %3907 = vmatpush.bf16.msra.mxu0 %v3709
    %3908 = vmatmul.bf16.gmra.mxu0 %v3397
    %v3909 = vpop.f32.mrf.mxu0
    %v3910 = vadd.f32 %v3881, %v3909
    %v3911 = vpop.f32.mrf.mxu0
    %v3912 = vadd.f32 %v3883, %v3911
    %3913 = vmatmul.bf16.gmra.mxu0 %v3405
    %v3914 = vpop.f32.mrf.mxu0
    %v3915 = vadd.f32 %v3886, %v3914
    %v3916 = vpop.f32.mrf.mxu0
    %v3917 = vadd.f32 %v3888, %v3916
    %3918 = vmatmul.bf16.gmra.mxu0 %v3413
    %v3919 = vpop.f32.mrf.mxu0
    %v3920 = vadd.f32 %v3891, %v3919
    %v3921 = vpop.f32.mrf.mxu0
    %v3922 = vadd.f32 %v3893, %v3921
    %3923 = vmatmul.bf16.gmra.mxu0 %v3421
    %v3924 = vpop.f32.mrf.mxu0
    %v3925 = vadd.f32 %v3896, %v3924
    %v3926 = vpop.f32.mrf.mxu0
    %v3927 = vadd.f32 %v3898, %v3926
    %3928 = vdwg.mxu0
    %3929 = vmatpush.bf16.msra.mxu0 %v3724
    %3930 = vmatpush.bf16.msra.mxu0 %v3723
    %3931 = vmatpush.bf16.msra.mxu0 %v3722
    %3932 = vmatpush.bf16.msra.mxu0 %v3721
    %3933 = vmatpush.bf16.msra.mxu0 %v3720
    %3934 = vmatpush.bf16.msra.mxu0 %v3719
    %3935 = vmatpush.bf16.msra.mxu0 %v3718
    %3936 = vmatpush.bf16.msra.mxu0 %v3717
    %3937 = vmatmul.bf16.gmra.mxu0 %v3398
    %v3938 = vpop.f32.mrf.mxu0
    %v3939 = vadd.f32 %v3910, %v3938
    %v3940 = vpop.f32.mrf.mxu0
    %v3941 = vadd.f32 %v3912, %v3940
    %3942 = vmatmul.bf16.gmra.mxu0 %v3406
    %v3943 = vpop.f32.mrf.mxu0
    %v3944 = vadd.f32 %v3915, %v3943
    %v3945 = vpop.f32.mrf.mxu0
    %v3946 = vadd.f32 %v3917, %v3945
    %3947 = vmatmul.bf16.gmra.mxu0 %v3414
    %v3948 = vpop.f32.mrf.mxu0
    %v3949 = vadd.f32 %v3920, %v3948
    %v3950 = vpop.f32.mrf.mxu0
    %v3951 = vadd.f32 %v3922, %v3950
    %3952 = vmatmul.bf16.gmra.mxu0 %v3422
    %v3953 = vpop.f32.mrf.mxu0
    %v3954 = vadd.f32 %v3925, %v3953
    %v3955 = vpop.f32.mrf.mxu0
    %v3956 = vadd.f32 %v3927, %v3955
    %3957 = vdwg.mxu0
    %3958 = vmatpush.bf16.msra.mxu0 %v3732
    %3959 = vmatpush.bf16.msra.mxu0 %v3731
    %3960 = vmatpush.bf16.msra.mxu0 %v3730
    %3961 = vmatpush.bf16.msra.mxu0 %v3729
    %3962 = vmatpush.bf16.msra.mxu0 %v3728
    %3963 = vmatpush.bf16.msra.mxu0 %v3727
    %3964 = vmatpush.bf16.msra.mxu0 %v3726
    %3965 = vmatpush.bf16.msra.mxu0 %v3725
    %3966 = vmatmul.bf16.gmra.mxu0 %v3399
    %v3967 = vpop.f32.mrf.mxu0
    %v3968 = vadd.f32 %v3939, %v3967
    %v3969 = vpop.f32.mrf.mxu0
    %v3970 = vadd.f32 %v3941, %v3969
    %3971 = vmatmul.bf16.gmra.mxu0 %v3407
    %v3972 = vpop.f32.mrf.mxu0
    %v3973 = vadd.f32 %v3944, %v3972
    %v3974 = vpop.f32.mrf.mxu0
    %v3975 = vadd.f32 %v3946, %v3974
    %3976 = vmatmul.bf16.gmra.mxu0 %v3415
    %v3977 = vpop.f32.mrf.mxu0
    %v3978 = vadd.f32 %v3949, %v3977
    %v3979 = vpop.f32.mrf.mxu0
    %v3980 = vadd.f32 %v3951, %v3979
    %3981 = vmatmul.bf16.gmra.mxu0 %v3423
    %v3982 = vpop.f32.mrf.mxu0
    %v3983 = vadd.f32 %v3954, %v3982
    %v3984 = vpop.f32.mrf.mxu0
    %v3985 = vadd.f32 %v3956, %v3984
    %3986 = vdwg.mxu0
    %3987 = vmatpush.bf16.msra.mxu0 %v3740
    %3988 = vmatpush.bf16.msra.mxu0 %v3739
    %3989 = vmatpush.bf16.msra.mxu0 %v3738
    %3990 = vmatpush.bf16.msra.mxu0 %v3737
    %3991 = vmatpush.bf16.msra.mxu0 %v3736
    %3992 = vmatpush.bf16.msra.mxu0 %v3735
    %3993 = vmatpush.bf16.msra.mxu0 %v3734
    %3994 = vmatpush.bf16.msra.mxu0 %v3733
    %3995 = vmatmul.bf16.gmra.mxu0 %v3400
    %v3996 = vpop.f32.mrf.mxu0
    %v3997 = vadd.f32 %v3968, %v3996
    %v3998 = vpop.f32.mrf.mxu0
    %v3999 = vadd.f32 %v3970, %v3998
    %4000 = vmatmul.bf16.gmra.mxu0 %v3408
    %v4001 = vpop.f32.mrf.mxu0
    %v4002 = vadd.f32 %v3973, %v4001
    %v4003 = vpop.f32.mrf.mxu0
    %v4004 = vadd.f32 %v3975, %v4003
    %4005 = vmatmul.bf16.gmra.mxu0 %v3416
    %v4006 = vpop.f32.mrf.mxu0
    %v4007 = vadd.f32 %v3978, %v4006
    %v4008 = vpop.f32.mrf.mxu0
    %v4009 = vadd.f32 %v3980, %v4008
    %4010 = vmatmul.bf16.gmra.mxu0 %v3424
    %v4011 = vpop.f32.mrf.mxu0
    %v4012 = vadd.f32 %v3983, %v4011
    %v4013 = vpop.f32.mrf.mxu0
    %v4014 = vadd.f32 %v3985, %v4013
    %4015 = vdwg.mxu0
    %4016 = vmatpush.bf16.msra.mxu0 %v3748
    %4017 = vmatpush.bf16.msra.mxu0 %v3747
    %4018 = vmatpush.bf16.msra.mxu0 %v3746
    %4019 = vmatpush.bf16.msra.mxu0 %v3745
    %4020 = vmatpush.bf16.msra.mxu0 %v3744
    %4021 = vmatpush.bf16.msra.mxu0 %v3743
    %4022 = vmatpush.bf16.msra.mxu0 %v3742
    %4023 = vmatpush.bf16.msra.mxu0 %v3741
    %4024 = vmatmul.bf16.gmra.mxu0 %v3401
    %v4025 = vpop.f32.mrf.mxu0
    %v4026 = vadd.f32 %v3997, %v4025
    %v4027 = vpop.f32.mrf.mxu0
    %v4028 = vadd.f32 %v3999, %v4027
    %4029 = vmatmul.bf16.gmra.mxu0 %v3409
    %v4030 = vpop.f32.mrf.mxu0
    %v4031 = vadd.f32 %v4002, %v4030
    %v4032 = vpop.f32.mrf.mxu0
    %v4033 = vadd.f32 %v4004, %v4032
    %4034 = vmatmul.bf16.gmra.mxu0 %v3417
    %v4035 = vpop.f32.mrf.mxu0
    %v4036 = vadd.f32 %v4007, %v4035
    %v4037 = vpop.f32.mrf.mxu0
    %v4038 = vadd.f32 %v4009, %v4037
    %4039 = vmatmul.bf16.gmra.mxu0 %v3425
    %v4040 = vpop.f32.mrf.mxu0
    %v4041 = vadd.f32 %v4012, %v4040
    %v4042 = vpop.f32.mrf.mxu0
    %v4043 = vadd.f32 %v4014, %v4042
    %4044 = vdwg.mxu0
    %v4045 = vmax.f32 %v4026, 0.0
    %v4046 = vmax.f32 %v4028, 0.0
    %v4047 = vmax.f32 %v4031, 0.0
    %v4048 = vmax.f32 %v4033, 0.0
    %v4049 = vmax.f32 %v4036, 0.0
    %v4050 = vmax.f32 %v4038, 0.0
    %v4051 = vmax.f32 %v4041, 0.0
    %v4052 = vmax.f32 %v4043, 0.0
    %v4053 = vpack.c.bf16 %v4046, %v4045
    %v4054 = vpack.c.bf16 %v4048, %v4047
    %v4055 = vpack.c.bf16 %v4050, %v4049
    %v4056 = vpack.c.bf16 %v4052, %v4051
    %v4057 = vstv %s468
    %v4074 = vunpack.c.l.b16 %v449
    %v4075 = vunpack.c.l.b16 %v450
    %v4076 = vunpack.c.l.b16 %v451
    %v4077 = vunpack.c.l.b16 %v452
    %v4078 = vunpack.c.l.b16 %v453
    %v4079 = vunpack.c.l.b16 %v454
    %v4080 = vunpack.c.l.b16 %v455
    %v4081 = vunpack.c.l.b16 %v456
    %v4082 = vunpack.c.l.b16 %v457
    %v4083 = vunpack.c.l.b16 %v458
    %v4084 = vunpack.c.l.b16 %v459
    %v4085 = vunpack.c.l.b16 %v460
    %v4086 = vunpack.c.l.b16 %v461
    %v4087 = vunpack.c.l.b16 %v462
    %v4088 = vunpack.c.l.b16 %v463
    %v4089 = vunpack.c.l.b16 %v464
    %v4090 = vpack.c.b16 %v4075, %v4074
    %v4091 = vpack.c.b16 %v4077, %v4076
    %v4092 = vpack.c.b16 %v4079, %v4078
    %v4093 = vpack.c.b16 %v4081, %v4080
    %v4094 = vpack.c.b16 %v4083, %v4082
    %v4095 = vpack.c.b16 %v4085, %v4084
    %v4096 = vpack.c.b16 %v4087, %v4086
    %v4097 = vpack.c.b16 %v4089, %v4088
    %4106 = vmatpush.bf16.msra.mxu0 %v4097
    %4107 = vmatpush.bf16.msra.mxu0 %v4096
    %4108 = vmatpush.bf16.msra.mxu0 %v4095
    %4109 = vmatpush.bf16.msra.mxu0 %v4094
    %4110 = vmatpush.bf16.msra.mxu0 %v4093
    %4111 = vmatpush.bf16.msra.mxu0 %v4092
    %4112 = vmatpush.bf16.msra.mxu0 %v4091
    %4113 = vmatpush.bf16.msra.mxu0 %v4090
    %4114 = vmatmul.bf16.gmra.mxu0 %v4053
    %v4115 = vpop.f32.mrf.mxu0
    %v4116 = vadd.f32 %v4057, %v4115
    %v4117 = vpop.f32.mrf.mxu0
    %v4118 = vadd.f32 %v4057, %v4117
    %4119 = vmatmul.bf16.gmra.mxu0 %v4054
    %v4120 = vpop.f32.mrf.mxu0
    %v4121 = vadd.f32 %v4057, %v4120
    %v4122 = vpop.f32.mrf.mxu0
    %v4123 = vadd.f32 %v4057, %v4122
    %4124 = vmatmul.bf16.gmra.mxu0 %v4055
    %v4125 = vpop.f32.mrf.mxu0
    %v4126 = vadd.f32 %v4057, %v4125
    %v4127 = vpop.f32.mrf.mxu0
    %v4128 = vadd.f32 %v4057, %v4127
    %4129 = vmatmul.bf16.gmra.mxu0 %v4056
    %v4130 = vpop.f32.mrf.mxu0
    %v4131 = vadd.f32 %v4057, %v4130
    %v4132 = vpop.f32.mrf.mxu0
    %v4133 = vadd.f32 %v4057, %v4132
    %4134 = vdwg.mxu0
    %vm4135 = vcmask 7168
    %4136 = vst.msk [vmem:[#allocation3] sm:$0xff] %vm4135, %v4116
    %4137 = vst.msk [vmem:[#allocation3 + $0x8] sm:$0xff] %vm4135, %v4118
    %4138 = vst.msk [vmem:[#allocation3 + $0x10] sm:$0xff] %vm4135, %v4121
    %4139 = vst.msk [vmem:[#allocation3 + $0x18] sm:$0xff] %vm4135, %v4123
    %4140 = vst.msk [vmem:[#allocation3 + $0x20] sm:$0xff] %vm4135, %v4126
    %4141 = vst.msk [vmem:[#allocation3 + $0x28] sm:$0xff] %vm4135, %v4128
    %4142 = vst.msk [vmem:[#allocation3 + $0x30] sm:$0xff] %vm4135, %v4131
    %4143 = vst.msk [vmem:[#allocation3 + $0x38] sm:$0xff] %vm4135, %v4133
    %v4144 = vld [vmem:[%s0 + $0x20] sm:$0x1]
    %v4145 = vld [vmem:[%s0 + $0x21] sm:$0x1]
    %v4146 = vld [vmem:[%s0 + $0x22] sm:$0x1]
    %v4147 = vld [vmem:[%s0 + $0x23] sm:$0x1]
    %v4148 = vld [vmem:[%s0 + $0x24] sm:$0x1]
    %v4149 = vld [vmem:[%s0 + $0x25] sm:$0x1]
    %v4150 = vld [vmem:[%s0 + $0x26] sm:$0x1]
    %v4151 = vld [vmem:[%s0 + $0x27] sm:$0x1]
    %v4152 = vld [vmem:[%s0 + $0x28] sm:$0x1]
    %v4153 = vld [vmem:[%s0 + $0x29] sm:$0x1]
    %v4154 = vld [vmem:[%s0 + $0x2a] sm:$0x1]
    %v4155 = vld [vmem:[%s0 + $0x2b] sm:$0x1]
    %v4156 = vld [vmem:[%s0 + $0x2c] sm:$0x1]
    %v4157 = vld [vmem:[%s0 + $0x2d] sm:$0x1]
    %v4158 = vld [vmem:[%s0 + $0x2e] sm:$0x1]
    %v4159 = vld [vmem:[%s0 + $0x2f] sm:$0x1]
    %v4160 = vld [vmem:[%s0 + $0x30] sm:$0x1]
    %v4161 = vld [vmem:[%s0 + $0x31] sm:$0x1]
    %v4162 = vld [vmem:[%s0 + $0x32] sm:$0x1]
    %v4163 = vld [vmem:[%s0 + $0x33] sm:$0x1]
    %v4164 = vld [vmem:[%s0 + $0x34] sm:$0x1]
    %v4165 = vld [vmem:[%s0 + $0x35] sm:$0x1]
    %v4166 = vld [vmem:[%s0 + $0x36] sm:$0x1]
    %v4167 = vld [vmem:[%s0 + $0x37] sm:$0x1]
    %v4168 = vld [vmem:[%s0 + $0x38] sm:$0x1]
    %v4169 = vld [vmem:[%s0 + $0x39] sm:$0x1]
    %v4170 = vld [vmem:[%s0 + $0x3a] sm:$0x1]
    %v4171 = vld [vmem:[%s0 + $0x3b] sm:$0x1]
    %v4172 = vld [vmem:[%s0 + $0x3c] sm:$0x1]
    %v4173 = vld [vmem:[%s0 + $0x3d] sm:$0x1]
    %v4174 = vld [vmem:[%s0 + $0x3e] sm:$0x1]
    %v4175 = vld [vmem:[%s0 + $0x3f] sm:$0x1]
    %4177 = vst [vmem:[#allocation1] ss:$9 sm:$0xff] %v4144
    %s4179 = scalar_lea.vmem [#allocation1], 1
    %4180 = vst [vmem:[%s4179] ss:$9 sm:$0xff] %v4145
    %s4182 = scalar_lea.vmem [#allocation1], 2
    %4183 = vst [vmem:[%s4182] ss:$9 sm:$0xff] %v4146
    %s4185 = scalar_lea.vmem [#allocation1], 3
    %4186 = vst [vmem:[%s4185] ss:$9 sm:$0xff] %v4147
    %s4188 = scalar_lea.vmem [#allocation1], 4
    %4189 = vst [vmem:[%s4188] ss:$9 sm:$0xff] %v4148
    %s4191 = scalar_lea.vmem [#allocation1], 5
    %4192 = vst [vmem:[%s4191] ss:$9 sm:$0xff] %v4149
    %s4194 = scalar_lea.vmem [#allocation1], 6
    %4195 = vst [vmem:[%s4194] ss:$9 sm:$0xff] %v4150
    %s4197 = scalar_lea.vmem [#allocation1], 7
    %4198 = vst [vmem:[%s4197] ss:$9 sm:$0xff] %v4151
    %v4199 = vld [vmem:[#allocation1] sm:$0xff]
    %4201 = vst [vmem:[#allocation1] ss:$9 sm:$0xff] %v4152
    %4203 = vst [vmem:[%s4179] ss:$9 sm:$0xff] %v4153
    %4205 = vst [vmem:[%s4182] ss:$9 sm:$0xff] %v4154
    %4207 = vst [vmem:[%s4185] ss:$9 sm:$0xff] %v4155
    %4209 = vst [vmem:[%s4188] ss:$9 sm:$0xff] %v4156
    %4211 = vst [vmem:[%s4191] ss:$9 sm:$0xff] %v4157
    %4213 = vst [vmem:[%s4194] ss:$9 sm:$0xff] %v4158
    %4215 = vst [vmem:[%s4197] ss:$9 sm:$0xff] %v4159
    %v4216 = vld [vmem:[#allocation1] sm:$0xff]
    %4218 = vst [vmem:[#allocation1] ss:$9 sm:$0xff] %v4160
    %4220 = vst [vmem:[%s4179] ss:$9 sm:$0xff] %v4161
    %4222 = vst [vmem:[%s4182] ss:$9 sm:$0xff] %v4162
    %4224 = vst [vmem:[%s4185] ss:$9 sm:$0xff] %v4163
    %4226 = vst [vmem:[%s4188] ss:$9 sm:$0xff] %v4164
    %4228 = vst [vmem:[%s4191] ss:$9 sm:$0xff] %v4165
    %4230 = vst [vmem:[%s4194] ss:$9 sm:$0xff] %v4166
    %4232 = vst [vmem:[%s4197] ss:$9 sm:$0xff] %v4167
    %v4233 = vld [vmem:[#allocation1] sm:$0xff]
    %4235 = vst [vmem:[#allocation1] ss:$9 sm:$0xff] %v4168
    %4237 = vst [vmem:[%s4179] ss:$9 sm:$0xff] %v4169
    %4239 = vst [vmem:[%s4182] ss:$9 sm:$0xff] %v4170
    %4241 = vst [vmem:[%s4185] ss:$9 sm:$0xff] %v4171
    %4243 = vst [vmem:[%s4188] ss:$9 sm:$0xff] %v4172
    %4245 = vst [vmem:[%s4191] ss:$9 sm:$0xff] %v4173
    %4247 = vst [vmem:[%s4194] ss:$9 sm:$0xff] %v4174
    %4249 = vst [vmem:[%s4197] ss:$9 sm:$0xff] %v4175
    %v4250 = vld [vmem:[#allocation1] sm:$0xff]
    %4255 = vmatpush.bf16.msra.mxu0 %v713
    %4256 = vmatpush.bf16.msra.mxu0 %v709
    %4257 = vmatpush.bf16.msra.mxu0 %v705
    %4258 = vmatpush.bf16.msra.mxu0 %v701
    %4259 = vmatpush.bf16.msra.mxu0 %v697
    %4260 = vmatpush.bf16.msra.mxu0 %v693
    %4261 = vmatpush.bf16.msra.mxu0 %v689
    %4262 = vmatpush.bf16.msra.mxu0 %v685
    %4263 = vmatmul.bf16.gmra.mxu0 %v4199
    %v4264 = vpop.f32.mrf.mxu0
    %v4265 = vadd.f32 %v502, %v4264
    %v4266 = vpop.f32.mrf.mxu0
    %v4267 = vadd.f32 %v502, %v4266
    %4268 = vmatmul.bf16.gmra.mxu0 %v4216
    %v4269 = vpop.f32.mrf.mxu0
    %v4270 = vadd.f32 %v502, %v4269
    %v4271 = vpop.f32.mrf.mxu0
    %v4272 = vadd.f32 %v502, %v4271
    %4273 = vmatmul.bf16.gmra.mxu0 %v4233
    %v4274 = vpop.f32.mrf.mxu0
    %v4275 = vadd.f32 %v502, %v4274
    %v4276 = vpop.f32.mrf.mxu0
    %v4277 = vadd.f32 %v502, %v4276
    %4278 = vmatmul.bf16.gmra.mxu0 %v4250
    %v4279 = vpop.f32.mrf.mxu0
    %v4280 = vadd.f32 %v502, %v4279
    %v4281 = vpop.f32.mrf.mxu0
    %v4282 = vadd.f32 %v502, %v4281
    %4283 = vdwg.mxu0
    %4284 = vmatpush.bf16.msra.mxu0 %v714
    %4285 = vmatpush.bf16.msra.mxu0 %v710
    %4286 = vmatpush.bf16.msra.mxu0 %v706
    %4287 = vmatpush.bf16.msra.mxu0 %v702
    %4288 = vmatpush.bf16.msra.mxu0 %v698
    %4289 = vmatpush.bf16.msra.mxu0 %v694
    %4290 = vmatpush.bf16.msra.mxu0 %v690
    %4291 = vmatpush.bf16.msra.mxu0 %v686
    %4292 = vmatmul.bf16.gmra.mxu0 %v4199
    %v4293 = vpop.f32.mrf.mxu0
    %v4294 = vadd.f32 %v503, %v4293
    %v4295 = vpop.f32.mrf.mxu0
    %v4296 = vadd.f32 %v503, %v4295
    %4297 = vmatmul.bf16.gmra.mxu0 %v4216
    %v4298 = vpop.f32.mrf.mxu0
    %v4299 = vadd.f32 %v503, %v4298
    %v4300 = vpop.f32.mrf.mxu0
    %v4301 = vadd.f32 %v503, %v4300
    %4302 = vmatmul.bf16.gmra.mxu0 %v4233
    %v4303 = vpop.f32.mrf.mxu0
    %v4304 = vadd.f32 %v503, %v4303
    %v4305 = vpop.f32.mrf.mxu0
    %v4306 = vadd.f32 %v503, %v4305
    %4307 = vmatmul.bf16.gmra.mxu0 %v4250
    %v4308 = vpop.f32.mrf.mxu0
    %v4309 = vadd.f32 %v503, %v4308
    %v4310 = vpop.f32.mrf.mxu0
    %v4311 = vadd.f32 %v503, %v4310
    %4312 = vdwg.mxu0
    %4313 = vmatpush.bf16.msra.mxu0 %v715
    %4314 = vmatpush.bf16.msra.mxu0 %v711
    %4315 = vmatpush.bf16.msra.mxu0 %v707
    %4316 = vmatpush.bf16.msra.mxu0 %v703
    %4317 = vmatpush.bf16.msra.mxu0 %v699
    %4318 = vmatpush.bf16.msra.mxu0 %v695
    %4319 = vmatpush.bf16.msra.mxu0 %v691
    %4320 = vmatpush.bf16.msra.mxu0 %v687
    %4321 = vmatmul.bf16.gmra.mxu0 %v4199
    %v4322 = vpop.f32.mrf.mxu0
    %v4323 = vadd.f32 %v504, %v4322
    %v4324 = vpop.f32.mrf.mxu0
    %v4325 = vadd.f32 %v504, %v4324
    %4326 = vmatmul.bf16.gmra.mxu0 %v4216
    %v4327 = vpop.f32.mrf.mxu0
    %v4328 = vadd.f32 %v504, %v4327
    %v4329 = vpop.f32.mrf.mxu0
    %v4330 = vadd.f32 %v504, %v4329
    %4331 = vmatmul.bf16.gmra.mxu0 %v4233
    %v4332 = vpop.f32.mrf.mxu0
    %v4333 = vadd.f32 %v504, %v4332
    %v4334 = vpop.f32.mrf.mxu0
    %v4335 = vadd.f32 %v504, %v4334
    %4336 = vmatmul.bf16.gmra.mxu0 %v4250
    %v4337 = vpop.f32.mrf.mxu0
    %v4338 = vadd.f32 %v504, %v4337
    %v4339 = vpop.f32.mrf.mxu0
    %v4340 = vadd.f32 %v504, %v4339
    %4341 = vdwg.mxu0
    %4342 = vmatpush.bf16.msra.mxu0 %v716
    %4343 = vmatpush.bf16.msra.mxu0 %v712
    %4344 = vmatpush.bf16.msra.mxu0 %v708
    %4345 = vmatpush.bf16.msra.mxu0 %v704
    %4346 = vmatpush.bf16.msra.mxu0 %v700
    %4347 = vmatpush.bf16.msra.mxu0 %v696
    %4348 = vmatpush.bf16.msra.mxu0 %v692
    %4349 = vmatpush.bf16.msra.mxu0 %v688
    %4350 = vmatmul.bf16.gmra.mxu0 %v4199
    %v4351 = vpop.f32.mrf.mxu0
    %v4352 = vadd.f32 %v505, %v4351
    %v4353 = vpop.f32.mrf.mxu0
    %v4354 = vadd.f32 %v505, %v4353
    %4355 = vmatmul.bf16.gmra.mxu0 %v4216
    %v4356 = vpop.f32.mrf.mxu0
    %v4357 = vadd.f32 %v505, %v4356
    %v4358 = vpop.f32.mrf.mxu0
    %v4359 = vadd.f32 %v505, %v4358
    %4360 = vmatmul.bf16.gmra.mxu0 %v4233
    %v4361 = vpop.f32.mrf.mxu0
    %v4362 = vadd.f32 %v505, %v4361
    %v4363 = vpop.f32.mrf.mxu0
    %v4364 = vadd.f32 %v505, %v4363
    %4365 = vmatmul.bf16.gmra.mxu0 %v4250
    %v4366 = vpop.f32.mrf.mxu0
    %v4367 = vadd.f32 %v505, %v4366
    %v4368 = vpop.f32.mrf.mxu0
    %v4369 = vadd.f32 %v505, %v4368
    %4370 = vdwg.mxu0
    %v4371 = vmax.f32 %v4265, 0.0
    %v4372 = vmax.f32 %v4294, 0.0
    %v4373 = vmax.f32 %v4323, 0.0
    %v4374 = vmax.f32 %v4352, 0.0
    %v4375 = vmax.f32 %v4267, 0.0
    %v4376 = vmax.f32 %v4296, 0.0
    %v4377 = vmax.f32 %v4325, 0.0
    %v4378 = vmax.f32 %v4354, 0.0
    %v4379 = vmax.f32 %v4270, 0.0
    %v4380 = vmax.f32 %v4299, 0.0
    %v4381 = vmax.f32 %v4328, 0.0
    %v4382 = vmax.f32 %v4357, 0.0
    %v4383 = vmax.f32 %v4272, 0.0
    %v4384 = vmax.f32 %v4301, 0.0
    %v4385 = vmax.f32 %v4330, 0.0
    %v4386 = vmax.f32 %v4359, 0.0
    %v4387 = vmax.f32 %v4275, 0.0
    %v4388 = vmax.f32 %v4304, 0.0
    %v4389 = vmax.f32 %v4333, 0.0
    %v4390 = vmax.f32 %v4362, 0.0
    %v4391 = vmax.f32 %v4277, 0.0
    %v4392 = vmax.f32 %v4306, 0.0
    %v4393 = vmax.f32 %v4335, 0.0
    %v4394 = vmax.f32 %v4364, 0.0
    %v4395 = vmax.f32 %v4280, 0.0
    %v4396 = vmax.f32 %v4309, 0.0
    %v4397 = vmax.f32 %v4338, 0.0
    %v4398 = vmax.f32 %v4367, 0.0
    %v4399 = vmax.f32 %v4282, 0.0
    %v4400 = vmax.f32 %v4311, 0.0
    %v4401 = vmax.f32 %v4340, 0.0
    %v4402 = vmax.f32 %v4369, 0.0
    %v4403 = vpack.c.bf16 %v4375, %v4371
    %v4404 = vpack.c.bf16 %v4376, %v4372
    %v4405 = vpack.c.bf16 %v4377, %v4373
    %v4406 = vpack.c.bf16 %v4378, %v4374
    %v4407 = vpack.c.bf16 %v4383, %v4379
    %v4408 = vpack.c.bf16 %v4384, %v4380
    %v4409 = vpack.c.bf16 %v4385, %v4381
    %v4410 = vpack.c.bf16 %v4386, %v4382
    %v4411 = vpack.c.bf16 %v4391, %v4387
    %v4412 = vpack.c.bf16 %v4392, %v4388
    %v4413 = vpack.c.bf16 %v4393, %v4389
    %v4414 = vpack.c.bf16 %v4394, %v4390
    %v4415 = vpack.c.bf16 %v4399, %v4395
    %v4416 = vpack.c.bf16 %v4400, %v4396
    %v4417 = vpack.c.bf16 %v4401, %v4397
    %v4418 = vpack.c.bf16 %v4402, %v4398
    %4419 = vmatpush.bf16.msra.mxu0 %v1754
    %4420 = vmatpush.bf16.msra.mxu0 %v1746
    %4421 = vmatpush.bf16.msra.mxu0 %v1738
    %4422 = vmatpush.bf16.msra.mxu0 %v1730
    %4423 = vmatpush.bf16.msra.mxu0 %v1722
    %4424 = vmatpush.bf16.msra.mxu0 %v1714
    %4425 = vmatpush.bf16.msra.mxu0 %v1706
    %4426 = vmatpush.bf16.msra.mxu0 %v1698
    %4427 = vmatmul.bf16.gmra.mxu0 %v4403
    %v4428 = vpop.f32.mrf.mxu0
    %v4429 = vadd.f32 %v914, %v4428
    %v4430 = vpop.f32.mrf.mxu0
    %v4431 = vadd.f32 %v914, %v4430
    %4432 = vmatmul.bf16.gmra.mxu0 %v4407
    %v4433 = vpop.f32.mrf.mxu0
    %v4434 = vadd.f32 %v914, %v4433
    %v4435 = vpop.f32.mrf.mxu0
    %v4436 = vadd.f32 %v914, %v4435
    %4437 = vmatmul.bf16.gmra.mxu0 %v4411
    %v4438 = vpop.f32.mrf.mxu0
    %v4439 = vadd.f32 %v914, %v4438
    %v4440 = vpop.f32.mrf.mxu0
    %v4441 = vadd.f32 %v914, %v4440
    %4442 = vmatmul.bf16.gmra.mxu0 %v4415
    %v4443 = vpop.f32.mrf.mxu0
    %v4444 = vadd.f32 %v914, %v4443
    %v4445 = vpop.f32.mrf.mxu0
    %v4446 = vadd.f32 %v914, %v4445
    %4447 = vdwg.mxu0
    %4448 = vmatpush.bf16.msra.mxu0 %v1818
    %4449 = vmatpush.bf16.msra.mxu0 %v1810
    %4450 = vmatpush.bf16.msra.mxu0 %v1802
    %4451 = vmatpush.bf16.msra.mxu0 %v1794
    %4452 = vmatpush.bf16.msra.mxu0 %v1786
    %4453 = vmatpush.bf16.msra.mxu0 %v1778
    %4454 = vmatpush.bf16.msra.mxu0 %v1770
    %4455 = vmatpush.bf16.msra.mxu0 %v1762
    %4456 = vmatmul.bf16.gmra.mxu0 %v4404
    %v4457 = vpop.f32.mrf.mxu0
    %v4458 = vadd.f32 %v4429, %v4457
    %v4459 = vpop.f32.mrf.mxu0
    %v4460 = vadd.f32 %v4431, %v4459
    %4461 = vmatmul.bf16.gmra.mxu0 %v4408
    %v4462 = vpop.f32.mrf.mxu0
    %v4463 = vadd.f32 %v4434, %v4462
    %v4464 = vpop.f32.mrf.mxu0
    %v4465 = vadd.f32 %v4436, %v4464
    %4466 = vmatmul.bf16.gmra.mxu0 %v4412
    %v4467 = vpop.f32.mrf.mxu0
    %v4468 = vadd.f32 %v4439, %v4467
    %v4469 = vpop.f32.mrf.mxu0
    %v4470 = vadd.f32 %v4441, %v4469
    %4471 = vmatmul.bf16.gmra.mxu0 %v4416
    %v4472 = vpop.f32.mrf.mxu0
    %v4473 = vadd.f32 %v4444, %v4472
    %v4474 = vpop.f32.mrf.mxu0
    %v4475 = vadd.f32 %v4446, %v4474
    %4476 = vdwg.mxu0
    %4477 = vmatpush.bf16.msra.mxu0 %v1882
    %4478 = vmatpush.bf16.msra.mxu0 %v1874
    %4479 = vmatpush.bf16.msra.mxu0 %v1866
    %4480 = vmatpush.bf16.msra.mxu0 %v1858
    %4481 = vmatpush.bf16.msra.mxu0 %v1850
    %4482 = vmatpush.bf16.msra.mxu0 %v1842
    %4483 = vmatpush.bf16.msra.mxu0 %v1834
    %4484 = vmatpush.bf16.msra.mxu0 %v1826
    %4485 = vmatmul.bf16.gmra.mxu0 %v4405
    %v4486 = vpop.f32.mrf.mxu0
    %v4487 = vadd.f32 %v4458, %v4486
    %v4488 = vpop.f32.mrf.mxu0
    %v4489 = vadd.f32 %v4460, %v4488
    %4490 = vmatmul.bf16.gmra.mxu0 %v4409
    %v4491 = vpop.f32.mrf.mxu0
    %v4492 = vadd.f32 %v4463, %v4491
    %v4493 = vpop.f32.mrf.mxu0
    %v4494 = vadd.f32 %v4465, %v4493
    %4495 = vmatmul.bf16.gmra.mxu0 %v4413
    %v4496 = vpop.f32.mrf.mxu0
    %v4497 = vadd.f32 %v4468, %v4496
    %v4498 = vpop.f32.mrf.mxu0
    %v4499 = vadd.f32 %v4470, %v4498
    %4500 = vmatmul.bf16.gmra.mxu0 %v4417
    %v4501 = vpop.f32.mrf.mxu0
    %v4502 = vadd.f32 %v4473, %v4501
    %v4503 = vpop.f32.mrf.mxu0
    %v4504 = vadd.f32 %v4475, %v4503
    %4505 = vdwg.mxu0
    %4506 = vmatpush.bf16.msra.mxu0 %v1946
    %4507 = vmatpush.bf16.msra.mxu0 %v1938
    %4508 = vmatpush.bf16.msra.mxu0 %v1930
    %4509 = vmatpush.bf16.msra.mxu0 %v1922
    %4510 = vmatpush.bf16.msra.mxu0 %v1914
    %4511 = vmatpush.bf16.msra.mxu0 %v1906
    %4512 = vmatpush.bf16.msra.mxu0 %v1898
    %4513 = vmatpush.bf16.msra.mxu0 %v1890
    %4514 = vmatmul.bf16.gmra.mxu0 %v4406
    %v4515 = vpop.f32.mrf.mxu0
    %v4516 = vadd.f32 %v4487, %v4515
    %v4517 = vpop.f32.mrf.mxu0
    %v4518 = vadd.f32 %v4489, %v4517
    %4519 = vmatmul.bf16.gmra.mxu0 %v4410
    %v4520 = vpop.f32.mrf.mxu0
    %v4521 = vadd.f32 %v4492, %v4520
    %v4522 = vpop.f32.mrf.mxu0
    %v4523 = vadd.f32 %v4494, %v4522
    %4524 = vmatmul.bf16.gmra.mxu0 %v4414
    %v4525 = vpop.f32.mrf.mxu0
    %v4526 = vadd.f32 %v4497, %v4525
    %v4527 = vpop.f32.mrf.mxu0
    %v4528 = vadd.f32 %v4499, %v4527
    %4529 = vmatmul.bf16.gmra.mxu0 %v4418
    %v4530 = vpop.f32.mrf.mxu0
    %v4531 = vadd.f32 %v4502, %v4530
    %v4532 = vpop.f32.mrf.mxu0
    %v4533 = vadd.f32 %v4504, %v4532
    %4534 = vdwg.mxu0
    %4535 = vmatpush.bf16.msra.mxu0 %v1755
    %4536 = vmatpush.bf16.msra.mxu0 %v1747
    %4537 = vmatpush.bf16.msra.mxu0 %v1739
    %4538 = vmatpush.bf16.msra.mxu0 %v1731
    %4539 = vmatpush.bf16.msra.mxu0 %v1723
    %4540 = vmatpush.bf16.msra.mxu0 %v1715
    %4541 = vmatpush.bf16.msra.mxu0 %v1707
    %4542 = vmatpush.bf16.msra.mxu0 %v1699
    %4543 = vmatmul.bf16.gmra.mxu0 %v4403
    %v4544 = vpop.f32.mrf.mxu0
    %v4545 = vadd.f32 %v915, %v4544
    %v4546 = vpop.f32.mrf.mxu0
    %v4547 = vadd.f32 %v915, %v4546
    %4548 = vmatmul.bf16.gmra.mxu0 %v4407
    %v4549 = vpop.f32.mrf.mxu0
    %v4550 = vadd.f32 %v915, %v4549
    %v4551 = vpop.f32.mrf.mxu0
    %v4552 = vadd.f32 %v915, %v4551
    %4553 = vmatmul.bf16.gmra.mxu0 %v4411
    %v4554 = vpop.f32.mrf.mxu0
    %v4555 = vadd.f32 %v915, %v4554
    %v4556 = vpop.f32.mrf.mxu0
    %v4557 = vadd.f32 %v915, %v4556
    %4558 = vmatmul.bf16.gmra.mxu0 %v4415
    %v4559 = vpop.f32.mrf.mxu0
    %v4560 = vadd.f32 %v915, %v4559
    %v4561 = vpop.f32.mrf.mxu0
    %v4562 = vadd.f32 %v915, %v4561
    %4563 = vdwg.mxu0
    %4564 = vmatpush.bf16.msra.mxu0 %v1819
    %4565 = vmatpush.bf16.msra.mxu0 %v1811
    %4566 = vmatpush.bf16.msra.mxu0 %v1803
    %4567 = vmatpush.bf16.msra.mxu0 %v1795
    %4568 = vmatpush.bf16.msra.mxu0 %v1787
    %4569 = vmatpush.bf16.msra.mxu0 %v1779
    %4570 = vmatpush.bf16.msra.mxu0 %v1771
    %4571 = vmatpush.bf16.msra.mxu0 %v1763
    %4572 = vmatmul.bf16.gmra.mxu0 %v4404
    %v4573 = vpop.f32.mrf.mxu0
    %v4574 = vadd.f32 %v4545, %v4573
    %v4575 = vpop.f32.mrf.mxu0
    %v4576 = vadd.f32 %v4547, %v4575
    %4577 = vmatmul.bf16.gmra.mxu0 %v4408
    %v4578 = vpop.f32.mrf.mxu0
    %v4579 = vadd.f32 %v4550, %v4578
    %v4580 = vpop.f32.mrf.mxu0
    %v4581 = vadd.f32 %v4552, %v4580
    %4582 = vmatmul.bf16.gmra.mxu0 %v4412
    %v4583 = vpop.f32.mrf.mxu0
    %v4584 = vadd.f32 %v4555, %v4583
    %v4585 = vpop.f32.mrf.mxu0
    %v4586 = vadd.f32 %v4557, %v4585
    %4587 = vmatmul.bf16.gmra.mxu0 %v4416
    %v4588 = vpop.f32.mrf.mxu0
    %v4589 = vadd.f32 %v4560, %v4588
    %v4590 = vpop.f32.mrf.mxu0
    %v4591 = vadd.f32 %v4562, %v4590
    %4592 = vdwg.mxu0
    %4593 = vmatpush.bf16.msra.mxu0 %v1883
    %4594 = vmatpush.bf16.msra.mxu0 %v1875
    %4595 = vmatpush.bf16.msra.mxu0 %v1867
    %4596 = vmatpush.bf16.msra.mxu0 %v1859
    %4597 = vmatpush.bf16.msra.mxu0 %v1851
    %4598 = vmatpush.bf16.msra.mxu0 %v1843
    %4599 = vmatpush.bf16.msra.mxu0 %v1835
    %4600 = vmatpush.bf16.msra.mxu0 %v1827
    %4601 = vmatmul.bf16.gmra.mxu0 %v4405
    %v4602 = vpop.f32.mrf.mxu0
    %v4603 = vadd.f32 %v4574, %v4602
    %v4604 = vpop.f32.mrf.mxu0
    %v4605 = vadd.f32 %v4576, %v4604
    %4606 = vmatmul.bf16.gmra.mxu0 %v4409
    %v4607 = vpop.f32.mrf.mxu0
    %v4608 = vadd.f32 %v4579, %v4607
    %v4609 = vpop.f32.mrf.mxu0
    %v4610 = vadd.f32 %v4581, %v4609
    %4611 = vmatmul.bf16.gmra.mxu0 %v4413
    %v4612 = vpop.f32.mrf.mxu0
    %v4613 = vadd.f32 %v4584, %v4612
    %v4614 = vpop.f32.mrf.mxu0
    %v4615 = vadd.f32 %v4586, %v4614
    %4616 = vmatmul.bf16.gmra.mxu0 %v4417
    %v4617 = vpop.f32.mrf.mxu0
    %v4618 = vadd.f32 %v4589, %v4617
    %v4619 = vpop.f32.mrf.mxu0
    %v4620 = vadd.f32 %v4591, %v4619
    %4621 = vdwg.mxu0
    %4622 = vmatpush.bf16.msra.mxu0 %v1947
    %4623 = vmatpush.bf16.msra.mxu0 %v1939
    %4624 = vmatpush.bf16.msra.mxu0 %v1931
    %4625 = vmatpush.bf16.msra.mxu0 %v1923
    %4626 = vmatpush.bf16.msra.mxu0 %v1915
    %4627 = vmatpush.bf16.msra.mxu0 %v1907
    %4628 = vmatpush.bf16.msra.mxu0 %v1899
    %4629 = vmatpush.bf16.msra.mxu0 %v1891
    %4630 = vmatmul.bf16.gmra.mxu0 %v4406
    %v4631 = vpop.f32.mrf.mxu0
    %v4632 = vadd.f32 %v4603, %v4631
    %v4633 = vpop.f32.mrf.mxu0
    %v4634 = vadd.f32 %v4605, %v4633
    %4635 = vmatmul.bf16.gmra.mxu0 %v4410
    %v4636 = vpop.f32.mrf.mxu0
    %v4637 = vadd.f32 %v4608, %v4636
    %v4638 = vpop.f32.mrf.mxu0
    %v4639 = vadd.f32 %v4610, %v4638
    %4640 = vmatmul.bf16.gmra.mxu0 %v4414
    %v4641 = vpop.f32.mrf.mxu0
    %v4642 = vadd.f32 %v4613, %v4641
    %v4643 = vpop.f32.mrf.mxu0
    %v4644 = vadd.f32 %v4615, %v4643
    %4645 = vmatmul.bf16.gmra.mxu0 %v4418
    %v4646 = vpop.f32.mrf.mxu0
    %v4647 = vadd.f32 %v4618, %v4646
    %v4648 = vpop.f32.mrf.mxu0
    %v4649 = vadd.f32 %v4620, %v4648
    %4650 = vdwg.mxu0
    %4651 = vmatpush.bf16.msra.mxu0 %v1756
    %4652 = vmatpush.bf16.msra.mxu0 %v1748
    %4653 = vmatpush.bf16.msra.mxu0 %v1740
    %4654 = vmatpush.bf16.msra.mxu0 %v1732
    %4655 = vmatpush.bf16.msra.mxu0 %v1724
    %4656 = vmatpush.bf16.msra.mxu0 %v1716
    %4657 = vmatpush.bf16.msra.mxu0 %v1708
    %4658 = vmatpush.bf16.msra.mxu0 %v1700
    %4659 = vmatmul.bf16.gmra.mxu0 %v4403
    %v4660 = vpop.f32.mrf.mxu0
    %v4661 = vadd.f32 %v916, %v4660
    %v4662 = vpop.f32.mrf.mxu0
    %v4663 = vadd.f32 %v916, %v4662
    %4664 = vmatmul.bf16.gmra.mxu0 %v4407
    %v4665 = vpop.f32.mrf.mxu0
    %v4666 = vadd.f32 %v916, %v4665
    %v4667 = vpop.f32.mrf.mxu0
    %v4668 = vadd.f32 %v916, %v4667
    %4669 = vmatmul.bf16.gmra.mxu0 %v4411
    %v4670 = vpop.f32.mrf.mxu0
    %v4671 = vadd.f32 %v916, %v4670
    %v4672 = vpop.f32.mrf.mxu0
    %v4673 = vadd.f32 %v916, %v4672
    %4674 = vmatmul.bf16.gmra.mxu0 %v4415
    %v4675 = vpop.f32.mrf.mxu0
    %v4676 = vadd.f32 %v916, %v4675
    %v4677 = vpop.f32.mrf.mxu0
    %v4678 = vadd.f32 %v916, %v4677
    %4679 = vdwg.mxu0
    %4680 = vmatpush.bf16.msra.mxu0 %v1820
    %4681 = vmatpush.bf16.msra.mxu0 %v1812
    %4682 = vmatpush.bf16.msra.mxu0 %v1804
    %4683 = vmatpush.bf16.msra.mxu0 %v1796
    %4684 = vmatpush.bf16.msra.mxu0 %v1788
    %4685 = vmatpush.bf16.msra.mxu0 %v1780
    %4686 = vmatpush.bf16.msra.mxu0 %v1772
    %4687 = vmatpush.bf16.msra.mxu0 %v1764
    %4688 = vmatmul.bf16.gmra.mxu0 %v4404
    %v4689 = vpop.f32.mrf.mxu0
    %v4690 = vadd.f32 %v4661, %v4689
    %v4691 = vpop.f32.mrf.mxu0
    %v4692 = vadd.f32 %v4663, %v4691
    %4693 = vmatmul.bf16.gmra.mxu0 %v4408
    %v4694 = vpop.f32.mrf.mxu0
    %v4695 = vadd.f32 %v4666, %v4694
    %v4696 = vpop.f32.mrf.mxu0
    %v4697 = vadd.f32 %v4668, %v4696
    %4698 = vmatmul.bf16.gmra.mxu0 %v4412
    %v4699 = vpop.f32.mrf.mxu0
    %v4700 = vadd.f32 %v4671, %v4699
    %v4701 = vpop.f32.mrf.mxu0
    %v4702 = vadd.f32 %v4673, %v4701
    %4703 = vmatmul.bf16.gmra.mxu0 %v4416
    %v4704 = vpop.f32.mrf.mxu0
    %v4705 = vadd.f32 %v4676, %v4704
    %v4706 = vpop.f32.mrf.mxu0
    %v4707 = vadd.f32 %v4678, %v4706
    %4708 = vdwg.mxu0
    %4709 = vmatpush.bf16.msra.mxu0 %v1884
    %4710 = vmatpush.bf16.msra.mxu0 %v1876
    %4711 = vmatpush.bf16.msra.mxu0 %v1868
    %4712 = vmatpush.bf16.msra.mxu0 %v1860
    %4713 = vmatpush.bf16.msra.mxu0 %v1852
    %4714 = vmatpush.bf16.msra.mxu0 %v1844
    %4715 = vmatpush.bf16.msra.mxu0 %v1836
    %4716 = vmatpush.bf16.msra.mxu0 %v1828
    %4717 = vmatmul.bf16.gmra.mxu0 %v4405
    %v4718 = vpop.f32.mrf.mxu0
    %v4719 = vadd.f32 %v4690, %v4718
    %v4720 = vpop.f32.mrf.mxu0
    %v4721 = vadd.f32 %v4692, %v4720
    %4722 = vmatmul.bf16.gmra.mxu0 %v4409
    %v4723 = vpop.f32.mrf.mxu0
    %v4724 = vadd.f32 %v4695, %v4723
    %v4725 = vpop.f32.mrf.mxu0
    %v4726 = vadd.f32 %v4697, %v4725
    %4727 = vmatmul.bf16.gmra.mxu0 %v4413
    %v4728 = vpop.f32.mrf.mxu0
    %v4729 = vadd.f32 %v4700, %v4728
    %v4730 = vpop.f32.mrf.mxu0
    %v4731 = vadd.f32 %v4702, %v4730
    %4732 = vmatmul.bf16.gmra.mxu0 %v4417
    %v4733 = vpop.f32.mrf.mxu0
    %v4734 = vadd.f32 %v4705, %v4733
    %v4735 = vpop.f32.mrf.mxu0
    %v4736 = vadd.f32 %v4707, %v4735
    %4737 = vdwg.mxu0
    %4738 = vmatpush.bf16.msra.mxu0 %v1948
    %4739 = vmatpush.bf16.msra.mxu0 %v1940
    %4740 = vmatpush.bf16.msra.mxu0 %v1932
    %4741 = vmatpush.bf16.msra.mxu0 %v1924
    %4742 = vmatpush.bf16.msra.mxu0 %v1916
    %4743 = vmatpush.bf16.msra.mxu0 %v1908
    %4744 = vmatpush.bf16.msra.mxu0 %v1900
    %4745 = vmatpush.bf16.msra.mxu0 %v1892
    %4746 = vmatmul.bf16.gmra.mxu0 %v4406
    %v4747 = vpop.f32.mrf.mxu0
    %v4748 = vadd.f32 %v4719, %v4747
    %v4749 = vpop.f32.mrf.mxu0
    %v4750 = vadd.f32 %v4721, %v4749
    %4751 = vmatmul.bf16.gmra.mxu0 %v4410
    %v4752 = vpop.f32.mrf.mxu0
    %v4753 = vadd.f32 %v4724, %v4752
    %v4754 = vpop.f32.mrf.mxu0
    %v4755 = vadd.f32 %v4726, %v4754
    %4756 = vmatmul.bf16.gmra.mxu0 %v4414
    %v4757 = vpop.f32.mrf.mxu0
    %v4758 = vadd.f32 %v4729, %v4757
    %v4759 = vpop.f32.mrf.mxu0
    %v4760 = vadd.f32 %v4731, %v4759
    %4761 = vmatmul.bf16.gmra.mxu0 %v4418
    %v4762 = vpop.f32.mrf.mxu0
    %v4763 = vadd.f32 %v4734, %v4762
    %v4764 = vpop.f32.mrf.mxu0
    %v4765 = vadd.f32 %v4736, %v4764
    %4766 = vdwg.mxu0
    %4767 = vmatpush.bf16.msra.mxu0 %v1757
    %4768 = vmatpush.bf16.msra.mxu0 %v1749
    %4769 = vmatpush.bf16.msra.mxu0 %v1741
    %4770 = vmatpush.bf16.msra.mxu0 %v1733
    %4771 = vmatpush.bf16.msra.mxu0 %v1725
    %4772 = vmatpush.bf16.msra.mxu0 %v1717
    %4773 = vmatpush.bf16.msra.mxu0 %v1709
    %4774 = vmatpush.bf16.msra.mxu0 %v1701
    %4775 = vmatmul.bf16.gmra.mxu0 %v4403
    %v4776 = vpop.f32.mrf.mxu0
    %v4777 = vadd.f32 %v917, %v4776
    %v4778 = vpop.f32.mrf.mxu0
    %v4779 = vadd.f32 %v917, %v4778
    %4780 = vmatmul.bf16.gmra.mxu0 %v4407
    %v4781 = vpop.f32.mrf.mxu0
    %v4782 = vadd.f32 %v917, %v4781
    %v4783 = vpop.f32.mrf.mxu0
    %v4784 = vadd.f32 %v917, %v4783
    %4785 = vmatmul.bf16.gmra.mxu0 %v4411
    %v4786 = vpop.f32.mrf.mxu0
    %v4787 = vadd.f32 %v917, %v4786
    %v4788 = vpop.f32.mrf.mxu0
    %v4789 = vadd.f32 %v917, %v4788
    %4790 = vmatmul.bf16.gmra.mxu0 %v4415
    %v4791 = vpop.f32.mrf.mxu0
    %v4792 = vadd.f32 %v917, %v4791
    %v4793 = vpop.f32.mrf.mxu0
    %v4794 = vadd.f32 %v917, %v4793
    %4795 = vdwg.mxu0
    %4796 = vmatpush.bf16.msra.mxu0 %v1821
    %4797 = vmatpush.bf16.msra.mxu0 %v1813
    %4798 = vmatpush.bf16.msra.mxu0 %v1805
    %4799 = vmatpush.bf16.msra.mxu0 %v1797
    %4800 = vmatpush.bf16.msra.mxu0 %v1789
    %4801 = vmatpush.bf16.msra.mxu0 %v1781
    %4802 = vmatpush.bf16.msra.mxu0 %v1773
    %4803 = vmatpush.bf16.msra.mxu0 %v1765
    %4804 = vmatmul.bf16.gmra.mxu0 %v4404
    %v4805 = vpop.f32.mrf.mxu0
    %v4806 = vadd.f32 %v4777, %v4805
    %v4807 = vpop.f32.mrf.mxu0
    %v4808 = vadd.f32 %v4779, %v4807
    %4809 = vmatmul.bf16.gmra.mxu0 %v4408
    %v4810 = vpop.f32.mrf.mxu0
    %v4811 = vadd.f32 %v4782, %v4810
    %v4812 = vpop.f32.mrf.mxu0
    %v4813 = vadd.f32 %v4784, %v4812
    %4814 = vmatmul.bf16.gmra.mxu0 %v4412
    %v4815 = vpop.f32.mrf.mxu0
    %v4816 = vadd.f32 %v4787, %v4815
    %v4817 = vpop.f32.mrf.mxu0
    %v4818 = vadd.f32 %v4789, %v4817
    %4819 = vmatmul.bf16.gmra.mxu0 %v4416
    %v4820 = vpop.f32.mrf.mxu0
    %v4821 = vadd.f32 %v4792, %v4820
    %v4822 = vpop.f32.mrf.mxu0
    %v4823 = vadd.f32 %v4794, %v4822
    %4824 = vdwg.mxu0
    %4825 = vmatpush.bf16.msra.mxu0 %v1885
    %4826 = vmatpush.bf16.msra.mxu0 %v1877
    %4827 = vmatpush.bf16.msra.mxu0 %v1869
    %4828 = vmatpush.bf16.msra.mxu0 %v1861
    %4829 = vmatpush.bf16.msra.mxu0 %v1853
    %4830 = vmatpush.bf16.msra.mxu0 %v1845
    %4831 = vmatpush.bf16.msra.mxu0 %v1837
    %4832 = vmatpush.bf16.msra.mxu0 %v1829
    %4833 = vmatmul.bf16.gmra.mxu0 %v4405
    %v4834 = vpop.f32.mrf.mxu0
    %v4835 = vadd.f32 %v4806, %v4834
    %v4836 = vpop.f32.mrf.mxu0
    %v4837 = vadd.f32 %v4808, %v4836
    %4838 = vmatmul.bf16.gmra.mxu0 %v4409
    %v4839 = vpop.f32.mrf.mxu0
    %v4840 = vadd.f32 %v4811, %v4839
    %v4841 = vpop.f32.mrf.mxu0
    %v4842 = vadd.f32 %v4813, %v4841
    %4843 = vmatmul.bf16.gmra.mxu0 %v4413
    %v4844 = vpop.f32.mrf.mxu0
    %v4845 = vadd.f32 %v4816, %v4844
    %v4846 = vpop.f32.mrf.mxu0
    %v4847 = vadd.f32 %v4818, %v4846
    %4848 = vmatmul.bf16.gmra.mxu0 %v4417
    %v4849 = vpop.f32.mrf.mxu0
    %v4850 = vadd.f32 %v4821, %v4849
    %v4851 = vpop.f32.mrf.mxu0
    %v4852 = vadd.f32 %v4823, %v4851
    %4853 = vdwg.mxu0
    %4854 = vmatpush.bf16.msra.mxu0 %v1949
    %4855 = vmatpush.bf16.msra.mxu0 %v1941
    %4856 = vmatpush.bf16.msra.mxu0 %v1933
    %4857 = vmatpush.bf16.msra.mxu0 %v1925
    %4858 = vmatpush.bf16.msra.mxu0 %v1917
    %4859 = vmatpush.bf16.msra.mxu0 %v1909
    %4860 = vmatpush.bf16.msra.mxu0 %v1901
    %4861 = vmatpush.bf16.msra.mxu0 %v1893
    %4862 = vmatmul.bf16.gmra.mxu0 %v4406
    %v4863 = vpop.f32.mrf.mxu0
    %v4864 = vadd.f32 %v4835, %v4863
    %v4865 = vpop.f32.mrf.mxu0
    %v4866 = vadd.f32 %v4837, %v4865
    %4867 = vmatmul.bf16.gmra.mxu0 %v4410
    %v4868 = vpop.f32.mrf.mxu0
    %v4869 = vadd.f32 %v4840, %v4868
    %v4870 = vpop.f32.mrf.mxu0
    %v4871 = vadd.f32 %v4842, %v4870
    %4872 = vmatmul.bf16.gmra.mxu0 %v4414
    %v4873 = vpop.f32.mrf.mxu0
    %v4874 = vadd.f32 %v4845, %v4873
    %v4875 = vpop.f32.mrf.mxu0
    %v4876 = vadd.f32 %v4847, %v4875
    %4877 = vmatmul.bf16.gmra.mxu0 %v4418
    %v4878 = vpop.f32.mrf.mxu0
    %v4879 = vadd.f32 %v4850, %v4878
    %v4880 = vpop.f32.mrf.mxu0
    %v4881 = vadd.f32 %v4852, %v4880
    %4882 = vdwg.mxu0
    %4883 = vmatpush.bf16.msra.mxu0 %v1758
    %4884 = vmatpush.bf16.msra.mxu0 %v1750
    %4885 = vmatpush.bf16.msra.mxu0 %v1742
    %4886 = vmatpush.bf16.msra.mxu0 %v1734
    %4887 = vmatpush.bf16.msra.mxu0 %v1726
    %4888 = vmatpush.bf16.msra.mxu0 %v1718
    %4889 = vmatpush.bf16.msra.mxu0 %v1710
    %4890 = vmatpush.bf16.msra.mxu0 %v1702
    %4891 = vmatmul.bf16.gmra.mxu0 %v4403
    %v4892 = vpop.f32.mrf.mxu0
    %v4893 = vadd.f32 %v918, %v4892
    %v4894 = vpop.f32.mrf.mxu0
    %v4895 = vadd.f32 %v918, %v4894
    %4896 = vmatmul.bf16.gmra.mxu0 %v4407
    %v4897 = vpop.f32.mrf.mxu0
    %v4898 = vadd.f32 %v918, %v4897
    %v4899 = vpop.f32.mrf.mxu0
    %v4900 = vadd.f32 %v918, %v4899
    %4901 = vmatmul.bf16.gmra.mxu0 %v4411
    %v4902 = vpop.f32.mrf.mxu0
    %v4903 = vadd.f32 %v918, %v4902
    %v4904 = vpop.f32.mrf.mxu0
    %v4905 = vadd.f32 %v918, %v4904
    %4906 = vmatmul.bf16.gmra.mxu0 %v4415
    %v4907 = vpop.f32.mrf.mxu0
    %v4908 = vadd.f32 %v918, %v4907
    %v4909 = vpop.f32.mrf.mxu0
    %v4910 = vadd.f32 %v918, %v4909
    %4911 = vdwg.mxu0
    %4912 = vmatpush.bf16.msra.mxu0 %v1822
    %4913 = vmatpush.bf16.msra.mxu0 %v1814
    %4914 = vmatpush.bf16.msra.mxu0 %v1806
    %4915 = vmatpush.bf16.msra.mxu0 %v1798
    %4916 = vmatpush.bf16.msra.mxu0 %v1790
    %4917 = vmatpush.bf16.msra.mxu0 %v1782
    %4918 = vmatpush.bf16.msra.mxu0 %v1774
    %4919 = vmatpush.bf16.msra.mxu0 %v1766
    %4920 = vmatmul.bf16.gmra.mxu0 %v4404
    %v4921 = vpop.f32.mrf.mxu0
    %v4922 = vadd.f32 %v4893, %v4921
    %v4923 = vpop.f32.mrf.mxu0
    %v4924 = vadd.f32 %v4895, %v4923
    %4925 = vmatmul.bf16.gmra.mxu0 %v4408
    %v4926 = vpop.f32.mrf.mxu0
    %v4927 = vadd.f32 %v4898, %v4926
    %v4928 = vpop.f32.mrf.mxu0
    %v4929 = vadd.f32 %v4900, %v4928
    %4930 = vmatmul.bf16.gmra.mxu0 %v4412
    %v4931 = vpop.f32.mrf.mxu0
    %v4932 = vadd.f32 %v4903, %v4931
    %v4933 = vpop.f32.mrf.mxu0
    %v4934 = vadd.f32 %v4905, %v4933
    %4935 = vmatmul.bf16.gmra.mxu0 %v4416
    %v4936 = vpop.f32.mrf.mxu0
    %v4937 = vadd.f32 %v4908, %v4936
    %v4938 = vpop.f32.mrf.mxu0
    %v4939 = vadd.f32 %v4910, %v4938
    %4940 = vdwg.mxu0
    %4941 = vmatpush.bf16.msra.mxu0 %v1886
    %4942 = vmatpush.bf16.msra.mxu0 %v1878
    %4943 = vmatpush.bf16.msra.mxu0 %v1870
    %4944 = vmatpush.bf16.msra.mxu0 %v1862
    %4945 = vmatpush.bf16.msra.mxu0 %v1854
    %4946 = vmatpush.bf16.msra.mxu0 %v1846
    %4947 = vmatpush.bf16.msra.mxu0 %v1838
    %4948 = vmatpush.bf16.msra.mxu0 %v1830
    %4949 = vmatmul.bf16.gmra.mxu0 %v4405
    %v4950 = vpop.f32.mrf.mxu0
    %v4951 = vadd.f32 %v4922, %v4950
    %v4952 = vpop.f32.mrf.mxu0
    %v4953 = vadd.f32 %v4924, %v4952
    %4954 = vmatmul.bf16.gmra.mxu0 %v4409
    %v4955 = vpop.f32.mrf.mxu0
    %v4956 = vadd.f32 %v4927, %v4955
    %v4957 = vpop.f32.mrf.mxu0
    %v4958 = vadd.f32 %v4929, %v4957
    %4959 = vmatmul.bf16.gmra.mxu0 %v4413
    %v4960 = vpop.f32.mrf.mxu0
    %v4961 = vadd.f32 %v4932, %v4960
    %v4962 = vpop.f32.mrf.mxu0
    %v4963 = vadd.f32 %v4934, %v4962
    %4964 = vmatmul.bf16.gmra.mxu0 %v4417
    %v4965 = vpop.f32.mrf.mxu0
    %v4966 = vadd.f32 %v4937, %v4965
    %v4967 = vpop.f32.mrf.mxu0
    %v4968 = vadd.f32 %v4939, %v4967
    %4969 = vdwg.mxu0
    %4970 = vmatpush.bf16.msra.mxu0 %v1950
    %4971 = vmatpush.bf16.msra.mxu0 %v1942
    %4972 = vmatpush.bf16.msra.mxu0 %v1934
    %4973 = vmatpush.bf16.msra.mxu0 %v1926
    %4974 = vmatpush.bf16.msra.mxu0 %v1918
    %4975 = vmatpush.bf16.msra.mxu0 %v1910
    %4976 = vmatpush.bf16.msra.mxu0 %v1902
    %4977 = vmatpush.bf16.msra.mxu0 %v1894
    %4978 = vmatmul.bf16.gmra.mxu0 %v4406
    %v4979 = vpop.f32.mrf.mxu0
    %v4980 = vadd.f32 %v4951, %v4979
    %v4981 = vpop.f32.mrf.mxu0
    %v4982 = vadd.f32 %v4953, %v4981
    %4983 = vmatmul.bf16.gmra.mxu0 %v4410
    %v4984 = vpop.f32.mrf.mxu0
    %v4985 = vadd.f32 %v4956, %v4984
    %v4986 = vpop.f32.mrf.mxu0
    %v4987 = vadd.f32 %v4958, %v4986
    %4988 = vmatmul.bf16.gmra.mxu0 %v4414
    %v4989 = vpop.f32.mrf.mxu0
    %v4990 = vadd.f32 %v4961, %v4989
    %v4991 = vpop.f32.mrf.mxu0
    %v4992 = vadd.f32 %v4963, %v4991
    %4993 = vmatmul.bf16.gmra.mxu0 %v4418
    %v4994 = vpop.f32.mrf.mxu0
    %v4995 = vadd.f32 %v4966, %v4994
    %v4996 = vpop.f32.mrf.mxu0
    %v4997 = vadd.f32 %v4968, %v4996
    %4998 = vdwg.mxu0
    %4999 = vmatpush.bf16.msra.mxu0 %v1759
    %5000 = vmatpush.bf16.msra.mxu0 %v1751
    %5001 = vmatpush.bf16.msra.mxu0 %v1743
    %5002 = vmatpush.bf16.msra.mxu0 %v1735
    %5003 = vmatpush.bf16.msra.mxu0 %v1727
    %5004 = vmatpush.bf16.msra.mxu0 %v1719
    %5005 = vmatpush.bf16.msra.mxu0 %v1711
    %5006 = vmatpush.bf16.msra.mxu0 %v1703
    %5007 = vmatmul.bf16.gmra.mxu0 %v4403
    %v5008 = vpop.f32.mrf.mxu0
    %v5009 = vadd.f32 %v919, %v5008
    %v5010 = vpop.f32.mrf.mxu0
    %v5011 = vadd.f32 %v919, %v5010
    %5012 = vmatmul.bf16.gmra.mxu0 %v4407
    %v5013 = vpop.f32.mrf.mxu0
    %v5014 = vadd.f32 %v919, %v5013
    %v5015 = vpop.f32.mrf.mxu0
    %v5016 = vadd.f32 %v919, %v5015
    %5017 = vmatmul.bf16.gmra.mxu0 %v4411
    %v5018 = vpop.f32.mrf.mxu0
    %v5019 = vadd.f32 %v919, %v5018
    %v5020 = vpop.f32.mrf.mxu0
    %v5021 = vadd.f32 %v919, %v5020
    %5022 = vmatmul.bf16.gmra.mxu0 %v4415
    %v5023 = vpop.f32.mrf.mxu0
    %v5024 = vadd.f32 %v919, %v5023
    %v5025 = vpop.f32.mrf.mxu0
    %v5026 = vadd.f32 %v919, %v5025
    %5027 = vdwg.mxu0
    %5028 = vmatpush.bf16.msra.mxu0 %v1823
    %5029 = vmatpush.bf16.msra.mxu0 %v1815
    %5030 = vmatpush.bf16.msra.mxu0 %v1807
    %5031 = vmatpush.bf16.msra.mxu0 %v1799
    %5032 = vmatpush.bf16.msra.mxu0 %v1791
    %5033 = vmatpush.bf16.msra.mxu0 %v1783
    %5034 = vmatpush.bf16.msra.mxu0 %v1775
    %5035 = vmatpush.bf16.msra.mxu0 %v1767
    %5036 = vmatmul.bf16.gmra.mxu0 %v4404
    %v5037 = vpop.f32.mrf.mxu0
    %v5038 = vadd.f32 %v5009, %v5037
    %v5039 = vpop.f32.mrf.mxu0
    %v5040 = vadd.f32 %v5011, %v5039
    %5041 = vmatmul.bf16.gmra.mxu0 %v4408
    %v5042 = vpop.f32.mrf.mxu0
    %v5043 = vadd.f32 %v5014, %v5042
    %v5044 = vpop.f32.mrf.mxu0
    %v5045 = vadd.f32 %v5016, %v5044
    %5046 = vmatmul.bf16.gmra.mxu0 %v4412
    %v5047 = vpop.f32.mrf.mxu0
    %v5048 = vadd.f32 %v5019, %v5047
    %v5049 = vpop.f32.mrf.mxu0
    %v5050 = vadd.f32 %v5021, %v5049
    %5051 = vmatmul.bf16.gmra.mxu0 %v4416
    %v5052 = vpop.f32.mrf.mxu0
    %v5053 = vadd.f32 %v5024, %v5052
    %v5054 = vpop.f32.mrf.mxu0
    %v5055 = vadd.f32 %v5026, %v5054
    %5056 = vdwg.mxu0
    %5057 = vmatpush.bf16.msra.mxu0 %v1887
    %5058 = vmatpush.bf16.msra.mxu0 %v1879
    %5059 = vmatpush.bf16.msra.mxu0 %v1871
    %5060 = vmatpush.bf16.msra.mxu0 %v1863
    %5061 = vmatpush.bf16.msra.mxu0 %v1855
    %5062 = vmatpush.bf16.msra.mxu0 %v1847
    %5063 = vmatpush.bf16.msra.mxu0 %v1839
    %5064 = vmatpush.bf16.msra.mxu0 %v1831
    %5065 = vmatmul.bf16.gmra.mxu0 %v4405
    %v5066 = vpop.f32.mrf.mxu0
    %v5067 = vadd.f32 %v5038, %v5066
    %v5068 = vpop.f32.mrf.mxu0
    %v5069 = vadd.f32 %v5040, %v5068
    %5070 = vmatmul.bf16.gmra.mxu0 %v4409
    %v5071 = vpop.f32.mrf.mxu0
    %v5072 = vadd.f32 %v5043, %v5071
    %v5073 = vpop.f32.mrf.mxu0
    %v5074 = vadd.f32 %v5045, %v5073
    %5075 = vmatmul.bf16.gmra.mxu0 %v4413
    %v5076 = vpop.f32.mrf.mxu0
    %v5077 = vadd.f32 %v5048, %v5076
    %v5078 = vpop.f32.mrf.mxu0
    %v5079 = vadd.f32 %v5050, %v5078
    %5080 = vmatmul.bf16.gmra.mxu0 %v4417
    %v5081 = vpop.f32.mrf.mxu0
    %v5082 = vadd.f32 %v5053, %v5081
    %v5083 = vpop.f32.mrf.mxu0
    %v5084 = vadd.f32 %v5055, %v5083
    %5085 = vdwg.mxu0
    %5086 = vmatpush.bf16.msra.mxu0 %v1951
    %5087 = vmatpush.bf16.msra.mxu0 %v1943
    %5088 = vmatpush.bf16.msra.mxu0 %v1935
    %5089 = vmatpush.bf16.msra.mxu0 %v1927
    %5090 = vmatpush.bf16.msra.mxu0 %v1919
    %5091 = vmatpush.bf16.msra.mxu0 %v1911
    %5092 = vmatpush.bf16.msra.mxu0 %v1903
    %5093 = vmatpush.bf16.msra.mxu0 %v1895
    %5094 = vmatmul.bf16.gmra.mxu0 %v4406
    %v5095 = vpop.f32.mrf.mxu0
    %v5096 = vadd.f32 %v5067, %v5095
    %v5097 = vpop.f32.mrf.mxu0
    %v5098 = vadd.f32 %v5069, %v5097
    %5099 = vmatmul.bf16.gmra.mxu0 %v4410
    %v5100 = vpop.f32.mrf.mxu0
    %v5101 = vadd.f32 %v5072, %v5100
    %v5102 = vpop.f32.mrf.mxu0
    %v5103 = vadd.f32 %v5074, %v5102
    %5104 = vmatmul.bf16.gmra.mxu0 %v4414
    %v5105 = vpop.f32.mrf.mxu0
    %v5106 = vadd.f32 %v5077, %v5105
    %v5107 = vpop.f32.mrf.mxu0
    %v5108 = vadd.f32 %v5079, %v5107
    %5109 = vmatmul.bf16.gmra.mxu0 %v4418
    %v5110 = vpop.f32.mrf.mxu0
    %v5111 = vadd.f32 %v5082, %v5110
    %v5112 = vpop.f32.mrf.mxu0
    %v5113 = vadd.f32 %v5084, %v5112
    %5114 = vdwg.mxu0
    %5115 = vmatpush.bf16.msra.mxu0 %v1760
    %5116 = vmatpush.bf16.msra.mxu0 %v1752
    %5117 = vmatpush.bf16.msra.mxu0 %v1744
    %5118 = vmatpush.bf16.msra.mxu0 %v1736
    %5119 = vmatpush.bf16.msra.mxu0 %v1728
    %5120 = vmatpush.bf16.msra.mxu0 %v1720
    %5121 = vmatpush.bf16.msra.mxu0 %v1712
    %5122 = vmatpush.bf16.msra.mxu0 %v1704
    %5123 = vmatmul.bf16.gmra.mxu0 %v4403
    %v5124 = vpop.f32.mrf.mxu0
    %v5125 = vadd.f32 %v920, %v5124
    %v5126 = vpop.f32.mrf.mxu0
    %v5127 = vadd.f32 %v920, %v5126
    %5128 = vmatmul.bf16.gmra.mxu0 %v4407
    %v5129 = vpop.f32.mrf.mxu0
    %v5130 = vadd.f32 %v920, %v5129
    %v5131 = vpop.f32.mrf.mxu0
    %v5132 = vadd.f32 %v920, %v5131
    %5133 = vmatmul.bf16.gmra.mxu0 %v4411
    %v5134 = vpop.f32.mrf.mxu0
    %v5135 = vadd.f32 %v920, %v5134
    %v5136 = vpop.f32.mrf.mxu0
    %v5137 = vadd.f32 %v920, %v5136
    %5138 = vmatmul.bf16.gmra.mxu0 %v4415
    %v5139 = vpop.f32.mrf.mxu0
    %v5140 = vadd.f32 %v920, %v5139
    %v5141 = vpop.f32.mrf.mxu0
    %v5142 = vadd.f32 %v920, %v5141
    %5143 = vdwg.mxu0
    %5144 = vmatpush.bf16.msra.mxu0 %v1824
    %5145 = vmatpush.bf16.msra.mxu0 %v1816
    %5146 = vmatpush.bf16.msra.mxu0 %v1808
    %5147 = vmatpush.bf16.msra.mxu0 %v1800
    %5148 = vmatpush.bf16.msra.mxu0 %v1792
    %5149 = vmatpush.bf16.msra.mxu0 %v1784
    %5150 = vmatpush.bf16.msra.mxu0 %v1776
    %5151 = vmatpush.bf16.msra.mxu0 %v1768
    %5152 = vmatmul.bf16.gmra.mxu0 %v4404
    %v5153 = vpop.f32.mrf.mxu0
    %v5154 = vadd.f32 %v5125, %v5153
    %v5155 = vpop.f32.mrf.mxu0
    %v5156 = vadd.f32 %v5127, %v5155
    %5157 = vmatmul.bf16.gmra.mxu0 %v4408
    %v5158 = vpop.f32.mrf.mxu0
    %v5159 = vadd.f32 %v5130, %v5158
    %v5160 = vpop.f32.mrf.mxu0
    %v5161 = vadd.f32 %v5132, %v5160
    %5162 = vmatmul.bf16.gmra.mxu0 %v4412
    %v5163 = vpop.f32.mrf.mxu0
    %v5164 = vadd.f32 %v5135, %v5163
    %v5165 = vpop.f32.mrf.mxu0
    %v5166 = vadd.f32 %v5137, %v5165
    %5167 = vmatmul.bf16.gmra.mxu0 %v4416
    %v5168 = vpop.f32.mrf.mxu0
    %v5169 = vadd.f32 %v5140, %v5168
    %v5170 = vpop.f32.mrf.mxu0
    %v5171 = vadd.f32 %v5142, %v5170
    %5172 = vdwg.mxu0
    %5173 = vmatpush.bf16.msra.mxu0 %v1888
    %5174 = vmatpush.bf16.msra.mxu0 %v1880
    %5175 = vmatpush.bf16.msra.mxu0 %v1872
    %5176 = vmatpush.bf16.msra.mxu0 %v1864
    %5177 = vmatpush.bf16.msra.mxu0 %v1856
    %5178 = vmatpush.bf16.msra.mxu0 %v1848
    %5179 = vmatpush.bf16.msra.mxu0 %v1840
    %5180 = vmatpush.bf16.msra.mxu0 %v1832
    %5181 = vmatmul.bf16.gmra.mxu0 %v4405
    %v5182 = vpop.f32.mrf.mxu0
    %v5183 = vadd.f32 %v5154, %v5182
    %v5184 = vpop.f32.mrf.mxu0
    %v5185 = vadd.f32 %v5156, %v5184
    %5186 = vmatmul.bf16.gmra.mxu0 %v4409
    %v5187 = vpop.f32.mrf.mxu0
    %v5188 = vadd.f32 %v5159, %v5187
    %v5189 = vpop.f32.mrf.mxu0
    %v5190 = vadd.f32 %v5161, %v5189
    %5191 = vmatmul.bf16.gmra.mxu0 %v4413
    %v5192 = vpop.f32.mrf.mxu0
    %v5193 = vadd.f32 %v5164, %v5192
    %v5194 = vpop.f32.mrf.mxu0
    %v5195 = vadd.f32 %v5166, %v5194
    %5196 = vmatmul.bf16.gmra.mxu0 %v4417
    %v5197 = vpop.f32.mrf.mxu0
    %v5198 = vadd.f32 %v5169, %v5197
    %v5199 = vpop.f32.mrf.mxu0
    %v5200 = vadd.f32 %v5171, %v5199
    %5201 = vdwg.mxu0
    %5202 = vmatpush.bf16.msra.mxu0 %v1952
    %5203 = vmatpush.bf16.msra.mxu0 %v1944
    %5204 = vmatpush.bf16.msra.mxu0 %v1936
    %5205 = vmatpush.bf16.msra.mxu0 %v1928
    %5206 = vmatpush.bf16.msra.mxu0 %v1920
    %5207 = vmatpush.bf16.msra.mxu0 %v1912
    %5208 = vmatpush.bf16.msra.mxu0 %v1904
    %5209 = vmatpush.bf16.msra.mxu0 %v1896
    %5210 = vmatmul.bf16.gmra.mxu0 %v4406
    %v5211 = vpop.f32.mrf.mxu0
    %v5212 = vadd.f32 %v5183, %v5211
    %v5213 = vpop.f32.mrf.mxu0
    %v5214 = vadd.f32 %v5185, %v5213
    %5215 = vmatmul.bf16.gmra.mxu0 %v4410
    %v5216 = vpop.f32.mrf.mxu0
    %v5217 = vadd.f32 %v5188, %v5216
    %v5218 = vpop.f32.mrf.mxu0
    %v5219 = vadd.f32 %v5190, %v5218
    %5220 = vmatmul.bf16.gmra.mxu0 %v4414
    %v5221 = vpop.f32.mrf.mxu0
    %v5222 = vadd.f32 %v5193, %v5221
    %v5223 = vpop.f32.mrf.mxu0
    %v5224 = vadd.f32 %v5195, %v5223
    %5225 = vmatmul.bf16.gmra.mxu0 %v4418
    %v5226 = vpop.f32.mrf.mxu0
    %v5227 = vadd.f32 %v5198, %v5226
    %v5228 = vpop.f32.mrf.mxu0
    %v5229 = vadd.f32 %v5200, %v5228
    %5230 = vdwg.mxu0
    %5231 = vmatpush.bf16.msra.mxu0 %v1761
    %5232 = vmatpush.bf16.msra.mxu0 %v1753
    %5233 = vmatpush.bf16.msra.mxu0 %v1745
    %5234 = vmatpush.bf16.msra.mxu0 %v1737
    %5235 = vmatpush.bf16.msra.mxu0 %v1729
    %5236 = vmatpush.bf16.msra.mxu0 %v1721
    %5237 = vmatpush.bf16.msra.mxu0 %v1713
    %5238 = vmatpush.bf16.msra.mxu0 %v1705
    %5239 = vmatmul.bf16.gmra.mxu0 %v4403
    %v5240 = vpop.f32.mrf.mxu0
    %v5241 = vadd.f32 %v921, %v5240
    %v5242 = vpop.f32.mrf.mxu0
    %v5243 = vadd.f32 %v921, %v5242
    %5244 = vmatmul.bf16.gmra.mxu0 %v4407
    %v5245 = vpop.f32.mrf.mxu0
    %v5246 = vadd.f32 %v921, %v5245
    %v5247 = vpop.f32.mrf.mxu0
    %v5248 = vadd.f32 %v921, %v5247
    %5249 = vmatmul.bf16.gmra.mxu0 %v4411
    %v5250 = vpop.f32.mrf.mxu0
    %v5251 = vadd.f32 %v921, %v5250
    %v5252 = vpop.f32.mrf.mxu0
    %v5253 = vadd.f32 %v921, %v5252
    %5254 = vmatmul.bf16.gmra.mxu0 %v4415
    %v5255 = vpop.f32.mrf.mxu0
    %v5256 = vadd.f32 %v921, %v5255
    %v5257 = vpop.f32.mrf.mxu0
    %v5258 = vadd.f32 %v921, %v5257
    %5259 = vdwg.mxu0
    %5260 = vmatpush.bf16.msra.mxu0 %v1825
    %5261 = vmatpush.bf16.msra.mxu0 %v1817
    %5262 = vmatpush.bf16.msra.mxu0 %v1809
    %5263 = vmatpush.bf16.msra.mxu0 %v1801
    %5264 = vmatpush.bf16.msra.mxu0 %v1793
    %5265 = vmatpush.bf16.msra.mxu0 %v1785
    %5266 = vmatpush.bf16.msra.mxu0 %v1777
    %5267 = vmatpush.bf16.msra.mxu0 %v1769
    %5268 = vmatmul.bf16.gmra.mxu0 %v4404
    %v5269 = vpop.f32.mrf.mxu0
    %v5270 = vadd.f32 %v5241, %v5269
    %v5271 = vpop.f32.mrf.mxu0
    %v5272 = vadd.f32 %v5243, %v5271
    %5273 = vmatmul.bf16.gmra.mxu0 %v4408
    %v5274 = vpop.f32.mrf.mxu0
    %v5275 = vadd.f32 %v5246, %v5274
    %v5276 = vpop.f32.mrf.mxu0
    %v5277 = vadd.f32 %v5248, %v5276
    %5278 = vmatmul.bf16.gmra.mxu0 %v4412
    %v5279 = vpop.f32.mrf.mxu0
    %v5280 = vadd.f32 %v5251, %v5279
    %v5281 = vpop.f32.mrf.mxu0
    %v5282 = vadd.f32 %v5253, %v5281
    %5283 = vmatmul.bf16.gmra.mxu0 %v4416
    %v5284 = vpop.f32.mrf.mxu0
    %v5285 = vadd.f32 %v5256, %v5284
    %v5286 = vpop.f32.mrf.mxu0
    %v5287 = vadd.f32 %v5258, %v5286
    %5288 = vdwg.mxu0
    %5289 = vmatpush.bf16.msra.mxu0 %v1889
    %5290 = vmatpush.bf16.msra.mxu0 %v1881
    %5291 = vmatpush.bf16.msra.mxu0 %v1873
    %5292 = vmatpush.bf16.msra.mxu0 %v1865
    %5293 = vmatpush.bf16.msra.mxu0 %v1857
    %5294 = vmatpush.bf16.msra.mxu0 %v1849
    %5295 = vmatpush.bf16.msra.mxu0 %v1841
    %5296 = vmatpush.bf16.msra.mxu0 %v1833
    %5297 = vmatmul.bf16.gmra.mxu0 %v4405
    %v5298 = vpop.f32.mrf.mxu0
    %v5299 = vadd.f32 %v5270, %v5298
    %v5300 = vpop.f32.mrf.mxu0
    %v5301 = vadd.f32 %v5272, %v5300
    %5302 = vmatmul.bf16.gmra.mxu0 %v4409
    %v5303 = vpop.f32.mrf.mxu0
    %v5304 = vadd.f32 %v5275, %v5303
    %v5305 = vpop.f32.mrf.mxu0
    %v5306 = vadd.f32 %v5277, %v5305
    %5307 = vmatmul.bf16.gmra.mxu0 %v4413
    %v5308 = vpop.f32.mrf.mxu0
    %v5309 = vadd.f32 %v5280, %v5308
    %v5310 = vpop.f32.mrf.mxu0
    %v5311 = vadd.f32 %v5282, %v5310
    %5312 = vmatmul.bf16.gmra.mxu0 %v4417
    %v5313 = vpop.f32.mrf.mxu0
    %v5314 = vadd.f32 %v5285, %v5313
    %v5315 = vpop.f32.mrf.mxu0
    %v5316 = vadd.f32 %v5287, %v5315
    %5317 = vdwg.mxu0
    %5318 = vmatpush.bf16.msra.mxu0 %v1953
    %5319 = vmatpush.bf16.msra.mxu0 %v1945
    %5320 = vmatpush.bf16.msra.mxu0 %v1937
    %5321 = vmatpush.bf16.msra.mxu0 %v1929
    %5322 = vmatpush.bf16.msra.mxu0 %v1921
    %5323 = vmatpush.bf16.msra.mxu0 %v1913
    %5324 = vmatpush.bf16.msra.mxu0 %v1905
    %5325 = vmatpush.bf16.msra.mxu0 %v1897
    %5326 = vmatmul.bf16.gmra.mxu0 %v4406
    %v5327 = vpop.f32.mrf.mxu0
    %v5328 = vadd.f32 %v5299, %v5327
    %v5329 = vpop.f32.mrf.mxu0
    %v5330 = vadd.f32 %v5301, %v5329
    %5331 = vmatmul.bf16.gmra.mxu0 %v4410
    %v5332 = vpop.f32.mrf.mxu0
    %v5333 = vadd.f32 %v5304, %v5332
    %v5334 = vpop.f32.mrf.mxu0
    %v5335 = vadd.f32 %v5306, %v5334
    %5336 = vmatmul.bf16.gmra.mxu0 %v4414
    %v5337 = vpop.f32.mrf.mxu0
    %v5338 = vadd.f32 %v5309, %v5337
    %v5339 = vpop.f32.mrf.mxu0
    %v5340 = vadd.f32 %v5311, %v5339
    %5341 = vmatmul.bf16.gmra.mxu0 %v4418
    %v5342 = vpop.f32.mrf.mxu0
    %v5343 = vadd.f32 %v5314, %v5342
    %v5344 = vpop.f32.mrf.mxu0
    %v5345 = vadd.f32 %v5316, %v5344
    %5346 = vdwg.mxu0
    %v5347 = vmul.f32 %v4516, 0.5
    %v5348 = vmul.f32 %v4632, 0.5
    %v5349 = vmul.f32 %v4748, 0.5
    %v5350 = vmul.f32 %v4864, 0.5
    %v5351 = vmul.f32 %v4980, 0.5
    %v5352 = vmul.f32 %v5096, 0.5
    %v5353 = vmul.f32 %v5212, 0.5
    %v5354 = vmul.f32 %v5328, 0.5
    %v5355 = vmul.f32 %v4518, 0.5
    %v5356 = vmul.f32 %v4634, 0.5
    %v5357 = vmul.f32 %v4750, 0.5
    %v5358 = vmul.f32 %v4866, 0.5
    %v5359 = vmul.f32 %v4982, 0.5
    %v5360 = vmul.f32 %v5098, 0.5
    %v5361 = vmul.f32 %v5214, 0.5
    %v5362 = vmul.f32 %v5330, 0.5
    %v5363 = vmul.f32 %v4521, 0.5
    %v5364 = vmul.f32 %v4637, 0.5
    %v5365 = vmul.f32 %v4753, 0.5
    %v5366 = vmul.f32 %v4869, 0.5
    %v5367 = vmul.f32 %v4985, 0.5
    %v5368 = vmul.f32 %v5101, 0.5
    %v5369 = vmul.f32 %v5217, 0.5
    %v5370 = vmul.f32 %v5333, 0.5
    %v5371 = vmul.f32 %v4523, 0.5
    %v5372 = vmul.f32 %v4639, 0.5
    %v5373 = vmul.f32 %v4755, 0.5
    %v5374 = vmul.f32 %v4871, 0.5
    %v5375 = vmul.f32 %v4987, 0.5
    %v5376 = vmul.f32 %v5103, 0.5
    %v5377 = vmul.f32 %v5219, 0.5
    %v5378 = vmul.f32 %v5335, 0.5
    %v5379 = vmul.f32 %v4526, 0.5
    %v5380 = vmul.f32 %v4642, 0.5
    %v5381 = vmul.f32 %v4758, 0.5
    %v5382 = vmul.f32 %v4874, 0.5
    %v5383 = vmul.f32 %v4990, 0.5
    %v5384 = vmul.f32 %v5106, 0.5
    %v5385 = vmul.f32 %v5222, 0.5
    %v5386 = vmul.f32 %v5338, 0.5
    %v5387 = vmul.f32 %v4528, 0.5
    %v5388 = vmul.f32 %v4644, 0.5
    %v5389 = vmul.f32 %v4760, 0.5
    %v5390 = vmul.f32 %v4876, 0.5
    %v5391 = vmul.f32 %v4992, 0.5
    %v5392 = vmul.f32 %v5108, 0.5
    %v5393 = vmul.f32 %v5224, 0.5
    %v5394 = vmul.f32 %v5340, 0.5
    %v5395 = vmul.f32 %v4531, 0.5
    %v5396 = vmul.f32 %v4647, 0.5
    %v5397 = vmul.f32 %v4763, 0.5
    %v5398 = vmul.f32 %v4879, 0.5
    %v5399 = vmul.f32 %v4995, 0.5
    %v5400 = vmul.f32 %v5111, 0.5
    %v5401 = vmul.f32 %v5227, 0.5
    %v5402 = vmul.f32 %v5343, 0.5
    %v5403 = vmul.f32 %v4533, 0.5
    %v5404 = vmul.f32 %v4649, 0.5
    %v5405 = vmul.f32 %v4765, 0.5
    %v5406 = vmul.f32 %v4881, 0.5
    %v5407 = vmul.f32 %v4997, 0.5
    %v5408 = vmul.f32 %v5113, 0.5
    %v5409 = vmul.f32 %v5229, 0.5
    %v5410 = vmul.f32 %v5345, 0.5
    %v5411 = vtanh.pop %v5347
    %v5412 = vtanh.pop %v5348
    %v5413 = vtanh.pop %v5349
    %v5414 = vtanh.pop %v5350
    %v5415 = vtanh.pop %v5351
    %v5416 = vtanh.pop %v5352
    %v5417 = vtanh.pop %v5353
    %v5418 = vtanh.pop %v5354
    %v5419 = vtanh.pop %v5355
    %v5420 = vtanh.pop %v5356
    %v5421 = vtanh.pop %v5357
    %v5422 = vtanh.pop %v5358
    %v5423 = vtanh.pop %v5359
    %v5424 = vtanh.pop %v5360
    %v5425 = vtanh.pop %v5361
    %v5426 = vtanh.pop %v5362
    %v5427 = vtanh.pop %v5363
    %v5428 = vtanh.pop %v5364
    %v5429 = vtanh.pop %v5365
    %v5430 = vtanh.pop %v5366
    %v5431 = vtanh.pop %v5367
    %v5432 = vtanh.pop %v5368
    %v5433 = vtanh.pop %v5369
    %v5434 = vtanh.pop %v5370
    %v5435 = vtanh.pop %v5371
    %v5436 = vtanh.pop %v5372
    %v5437 = vtanh.pop %v5373
    %v5438 = vtanh.pop %v5374
    %v5439 = vtanh.pop %v5375
    %v5440 = vtanh.pop %v5376
    %v5441 = vtanh.pop %v5377
    %v5442 = vtanh.pop %v5378
    %v5443 = vtanh.pop %v5379
    %v5444 = vtanh.pop %v5380
    %v5445 = vtanh.pop %v5381
    %v5446 = vtanh.pop %v5382
    %v5447 = vtanh.pop %v5383
    %v5448 = vtanh.pop %v5384
    %v5449 = vtanh.pop %v5385
    %v5450 = vtanh.pop %v5386
    %v5451 = vtanh.pop %v5387
    %v5452 = vtanh.pop %v5388
    %v5453 = vtanh.pop %v5389
    %v5454 = vtanh.pop %v5390
    %v5455 = vtanh.pop %v5391
    %v5456 = vtanh.pop %v5392
    %v5457 = vtanh.pop %v5393
    %v5458 = vtanh.pop %v5394
    %v5459 = vtanh.pop %v5395
    %v5460 = vtanh.pop %v5396
    %v5461 = vtanh.pop %v5397
    %v5462 = vtanh.pop %v5398
    %v5463 = vtanh.pop %v5399
    %v5464 = vtanh.pop %v5400
    %v5465 = vtanh.pop %v5401
    %v5466 = vtanh.pop %v5402
    %v5467 = vtanh.pop %v5403
    %v5468 = vtanh.pop %v5404
    %v5469 = vtanh.pop %v5405
    %v5470 = vtanh.pop %v5406
    %v5471 = vtanh.pop %v5407
    %v5472 = vtanh.pop %v5408
    %v5473 = vtanh.pop %v5409
    %v5474 = vtanh.pop %v5410
    %v5475 = vmul.f32 %v5411, 0.5
    %v5476 = vmul.f32 %v5412, 0.5
    %v5477 = vmul.f32 %v5413, 0.5
    %v5478 = vmul.f32 %v5414, 0.5
    %v5479 = vmul.f32 %v5415, 0.5
    %v5480 = vmul.f32 %v5416, 0.5
    %v5481 = vmul.f32 %v5417, 0.5
    %v5482 = vmul.f32 %v5418, 0.5
    %v5483 = vmul.f32 %v5419, 0.5
    %v5484 = vmul.f32 %v5420, 0.5
    %v5485 = vmul.f32 %v5421, 0.5
    %v5486 = vmul.f32 %v5422, 0.5
    %v5487 = vmul.f32 %v5423, 0.5
    %v5488 = vmul.f32 %v5424, 0.5
    %v5489 = vmul.f32 %v5425, 0.5
    %v5490 = vmul.f32 %v5426, 0.5
    %v5491 = vmul.f32 %v5427, 0.5
    %v5492 = vmul.f32 %v5428, 0.5
    %v5493 = vmul.f32 %v5429, 0.5
    %v5494 = vmul.f32 %v5430, 0.5
    %v5495 = vmul.f32 %v5431, 0.5
    %v5496 = vmul.f32 %v5432, 0.5
    %v5497 = vmul.f32 %v5433, 0.5
    %v5498 = vmul.f32 %v5434, 0.5
    %v5499 = vmul.f32 %v5435, 0.5
    %v5500 = vmul.f32 %v5436, 0.5
    %v5501 = vmul.f32 %v5437, 0.5
    %v5502 = vmul.f32 %v5438, 0.5
    %v5503 = vmul.f32 %v5439, 0.5
    %v5504 = vmul.f32 %v5440, 0.5
    %v5505 = vmul.f32 %v5441, 0.5
    %v5506 = vmul.f32 %v5442, 0.5
    %v5507 = vmul.f32 %v5443, 0.5
    %v5508 = vmul.f32 %v5444, 0.5
    %v5509 = vmul.f32 %v5445, 0.5
    %v5510 = vmul.f32 %v5446, 0.5
    %v5511 = vmul.f32 %v5447, 0.5
    %v5512 = vmul.f32 %v5448, 0.5
    %v5513 = vmul.f32 %v5449, 0.5
    %v5514 = vmul.f32 %v5450, 0.5
    %v5515 = vmul.f32 %v5451, 0.5
    %v5516 = vmul.f32 %v5452, 0.5
    %v5517 = vmul.f32 %v5453, 0.5
    %v5518 = vmul.f32 %v5454, 0.5
    %v5519 = vmul.f32 %v5455, 0.5
    %v5520 = vmul.f32 %v5456, 0.5
    %v5521 = vmul.f32 %v5457, 0.5
    %v5522 = vmul.f32 %v5458, 0.5
    %v5523 = vmul.f32 %v5459, 0.5
    %v5524 = vmul.f32 %v5460, 0.5
    %v5525 = vmul.f32 %v5461, 0.5
    %v5526 = vmul.f32 %v5462, 0.5
    %v5527 = vmul.f32 %v5463, 0.5
    %v5528 = vmul.f32 %v5464, 0.5
    %v5529 = vmul.f32 %v5465, 0.5
    %v5530 = vmul.f32 %v5466, 0.5
    %v5531 = vmul.f32 %v5467, 0.5
    %v5532 = vmul.f32 %v5468, 0.5
    %v5533 = vmul.f32 %v5469, 0.5
    %v5534 = vmul.f32 %v5470, 0.5
    %v5535 = vmul.f32 %v5471, 0.5
    %v5536 = vmul.f32 %v5472, 0.5
    %v5537 = vmul.f32 %v5473, 0.5
    %v5538 = vmul.f32 %v5474, 0.5
    %v5539 = vadd.f32 %v5475, 0.5
    %v5540 = vadd.f32 %v5476, 0.5
    %v5541 = vadd.f32 %v5477, 0.5
    %v5542 = vadd.f32 %v5478, 0.5
    %v5543 = vadd.f32 %v5479, 0.5
    %v5544 = vadd.f32 %v5480, 0.5
    %v5545 = vadd.f32 %v5481, 0.5
    %v5546 = vadd.f32 %v5482, 0.5
    %v5547 = vadd.f32 %v5483, 0.5
    %v5548 = vadd.f32 %v5484, 0.5
    %v5549 = vadd.f32 %v5485, 0.5
    %v5550 = vadd.f32 %v5486, 0.5
    %v5551 = vadd.f32 %v5487, 0.5
    %v5552 = vadd.f32 %v5488, 0.5
    %v5553 = vadd.f32 %v5489, 0.5
    %v5554 = vadd.f32 %v5490, 0.5
    %v5555 = vadd.f32 %v5491, 0.5
    %v5556 = vadd.f32 %v5492, 0.5
    %v5557 = vadd.f32 %v5493, 0.5
    %v5558 = vadd.f32 %v5494, 0.5
    %v5559 = vadd.f32 %v5495, 0.5
    %v5560 = vadd.f32 %v5496, 0.5
    %v5561 = vadd.f32 %v5497, 0.5
    %v5562 = vadd.f32 %v5498, 0.5
    %v5563 = vadd.f32 %v5499, 0.5
    %v5564 = vadd.f32 %v5500, 0.5
    %v5565 = vadd.f32 %v5501, 0.5
    %v5566 = vadd.f32 %v5502, 0.5
    %v5567 = vadd.f32 %v5503, 0.5
    %v5568 = vadd.f32 %v5504, 0.5
    %v5569 = vadd.f32 %v5505, 0.5
    %v5570 = vadd.f32 %v5506, 0.5
    %v5571 = vadd.f32 %v5507, 0.5
    %v5572 = vadd.f32 %v5508, 0.5
    %v5573 = vadd.f32 %v5509, 0.5
    %v5574 = vadd.f32 %v5510, 0.5
    %v5575 = vadd.f32 %v5511, 0.5
    %v5576 = vadd.f32 %v5512, 0.5
    %v5577 = vadd.f32 %v5513, 0.5
    %v5578 = vadd.f32 %v5514, 0.5
    %v5579 = vadd.f32 %v5515, 0.5
    %v5580 = vadd.f32 %v5516, 0.5
    %v5581 = vadd.f32 %v5517, 0.5
    %v5582 = vadd.f32 %v5518, 0.5
    %v5583 = vadd.f32 %v5519, 0.5
    %v5584 = vadd.f32 %v5520, 0.5
    %v5585 = vadd.f32 %v5521, 0.5
    %v5586 = vadd.f32 %v5522, 0.5
    %v5587 = vadd.f32 %v5523, 0.5
    %v5588 = vadd.f32 %v5524, 0.5
    %v5589 = vadd.f32 %v5525, 0.5
    %v5590 = vadd.f32 %v5526, 0.5
    %v5591 = vadd.f32 %v5527, 0.5
    %v5592 = vadd.f32 %v5528, 0.5
    %v5593 = vadd.f32 %v5529, 0.5
    %v5594 = vadd.f32 %v5530, 0.5
    %v5595 = vadd.f32 %v5531, 0.5
    %v5596 = vadd.f32 %v5532, 0.5
    %v5597 = vadd.f32 %v5533, 0.5
    %v5598 = vadd.f32 %v5534, 0.5
    %v5599 = vadd.f32 %v5535, 0.5
    %v5600 = vadd.f32 %v5536, 0.5
    %v5601 = vadd.f32 %v5537, 0.5
    %v5602 = vadd.f32 %v5538, 0.5
    %v5603 = vpack.c.bf16 %v5547, %v5539
    %v5604 = vpack.c.bf16 %v5548, %v5540
    %v5605 = vpack.c.bf16 %v5549, %v5541
    %v5606 = vpack.c.bf16 %v5550, %v5542
    %v5607 = vpack.c.bf16 %v5551, %v5543
    %v5608 = vpack.c.bf16 %v5552, %v5544
    %v5609 = vpack.c.bf16 %v5553, %v5545
    %v5610 = vpack.c.bf16 %v5554, %v5546
    %v5611 = vpack.c.bf16 %v5563, %v5555
    %v5612 = vpack.c.bf16 %v5564, %v5556
    %v5613 = vpack.c.bf16 %v5565, %v5557
    %v5614 = vpack.c.bf16 %v5566, %v5558
    %v5615 = vpack.c.bf16 %v5567, %v5559
    %v5616 = vpack.c.bf16 %v5568, %v5560
    %v5617 = vpack.c.bf16 %v5569, %v5561
    %v5618 = vpack.c.bf16 %v5570, %v5562
    %v5619 = vpack.c.bf16 %v5579, %v5571
    %v5620 = vpack.c.bf16 %v5580, %v5572
    %v5621 = vpack.c.bf16 %v5581, %v5573
    %v5622 = vpack.c.bf16 %v5582, %v5574
    %v5623 = vpack.c.bf16 %v5583, %v5575
    %v5624 = vpack.c.bf16 %v5584, %v5576
    %v5625 = vpack.c.bf16 %v5585, %v5577
    %v5626 = vpack.c.bf16 %v5586, %v5578
    %v5627 = vpack.c.bf16 %v5595, %v5587
    %v5628 = vpack.c.bf16 %v5596, %v5588
    %v5629 = vpack.c.bf16 %v5597, %v5589
    %v5630 = vpack.c.bf16 %v5598, %v5590
    %v5631 = vpack.c.bf16 %v5599, %v5591
    %v5632 = vpack.c.bf16 %v5600, %v5592
    %v5633 = vpack.c.bf16 %v5601, %v5593
    %v5634 = vpack.c.bf16 %v5602, %v5594
    %5635 = vmatpush.bf16.msra.mxu0 %v3692
    %5636 = vmatpush.bf16.msra.mxu0 %v3691
    %5637 = vmatpush.bf16.msra.mxu0 %v3690
    %5638 = vmatpush.bf16.msra.mxu0 %v3689
    %5639 = vmatpush.bf16.msra.mxu0 %v3688
    %5640 = vmatpush.bf16.msra.mxu0 %v3687
    %5641 = vmatpush.bf16.msra.mxu0 %v3686
    %5642 = vmatpush.bf16.msra.mxu0 %v3685
    %5643 = vmatmul.bf16.gmra.mxu0 %v5603
    %v5644 = vpop.f32.mrf.mxu0
    %v5645 = vadd.f32 %v3427, %v5644
    %v5646 = vpop.f32.mrf.mxu0
    %v5647 = vadd.f32 %v3427, %v5646
    %5648 = vmatmul.bf16.gmra.mxu0 %v5611
    %v5649 = vpop.f32.mrf.mxu0
    %v5650 = vadd.f32 %v3427, %v5649
    %v5651 = vpop.f32.mrf.mxu0
    %v5652 = vadd.f32 %v3427, %v5651
    %5653 = vmatmul.bf16.gmra.mxu0 %v5619
    %v5654 = vpop.f32.mrf.mxu0
    %v5655 = vadd.f32 %v3427, %v5654
    %v5656 = vpop.f32.mrf.mxu0
    %v5657 = vadd.f32 %v3427, %v5656
    %5658 = vmatmul.bf16.gmra.mxu0 %v5627
    %v5659 = vpop.f32.mrf.mxu0
    %v5660 = vadd.f32 %v3427, %v5659
    %v5661 = vpop.f32.mrf.mxu0
    %v5662 = vadd.f32 %v3427, %v5661
    %5663 = vdwg.mxu0
    %5664 = vmatpush.bf16.msra.mxu0 %v3700
    %5665 = vmatpush.bf16.msra.mxu0 %v3699
    %5666 = vmatpush.bf16.msra.mxu0 %v3698
    %5667 = vmatpush.bf16.msra.mxu0 %v3697
    %5668 = vmatpush.bf16.msra.mxu0 %v3696
    %5669 = vmatpush.bf16.msra.mxu0 %v3695
    %5670 = vmatpush.bf16.msra.mxu0 %v3694
    %5671 = vmatpush.bf16.msra.mxu0 %v3693
    %5672 = vmatmul.bf16.gmra.mxu0 %v5604
    %v5673 = vpop.f32.mrf.mxu0
    %v5674 = vadd.f32 %v5645, %v5673
    %v5675 = vpop.f32.mrf.mxu0
    %v5676 = vadd.f32 %v5647, %v5675
    %5677 = vmatmul.bf16.gmra.mxu0 %v5612
    %v5678 = vpop.f32.mrf.mxu0
    %v5679 = vadd.f32 %v5650, %v5678
    %v5680 = vpop.f32.mrf.mxu0
    %v5681 = vadd.f32 %v5652, %v5680
    %5682 = vmatmul.bf16.gmra.mxu0 %v5620
    %v5683 = vpop.f32.mrf.mxu0
    %v5684 = vadd.f32 %v5655, %v5683
    %v5685 = vpop.f32.mrf.mxu0
    %v5686 = vadd.f32 %v5657, %v5685
    %5687 = vmatmul.bf16.gmra.mxu0 %v5628
    %v5688 = vpop.f32.mrf.mxu0
    %v5689 = vadd.f32 %v5660, %v5688
    %v5690 = vpop.f32.mrf.mxu0
    %v5691 = vadd.f32 %v5662, %v5690
    %5692 = vdwg.mxu0
    %5693 = vmatpush.bf16.msra.mxu0 %v3708
    %5694 = vmatpush.bf16.msra.mxu0 %v3707
    %5695 = vmatpush.bf16.msra.mxu0 %v3706
    %5696 = vmatpush.bf16.msra.mxu0 %v3705
    %5697 = vmatpush.bf16.msra.mxu0 %v3704
    %5698 = vmatpush.bf16.msra.mxu0 %v3703
    %5699 = vmatpush.bf16.msra.mxu0 %v3702
    %5700 = vmatpush.bf16.msra.mxu0 %v3701
    %5701 = vmatmul.bf16.gmra.mxu0 %v5605
    %v5702 = vpop.f32.mrf.mxu0
    %v5703 = vadd.f32 %v5674, %v5702
    %v5704 = vpop.f32.mrf.mxu0
    %v5705 = vadd.f32 %v5676, %v5704
    %5706 = vmatmul.bf16.gmra.mxu0 %v5613
    %v5707 = vpop.f32.mrf.mxu0
    %v5708 = vadd.f32 %v5679, %v5707
    %v5709 = vpop.f32.mrf.mxu0
    %v5710 = vadd.f32 %v5681, %v5709
    %5711 = vmatmul.bf16.gmra.mxu0 %v5621
    %v5712 = vpop.f32.mrf.mxu0
    %v5713 = vadd.f32 %v5684, %v5712
    %v5714 = vpop.f32.mrf.mxu0
    %v5715 = vadd.f32 %v5686, %v5714
    %5716 = vmatmul.bf16.gmra.mxu0 %v5629
    %v5717 = vpop.f32.mrf.mxu0
    %v5718 = vadd.f32 %v5689, %v5717
    %v5719 = vpop.f32.mrf.mxu0
    %v5720 = vadd.f32 %v5691, %v5719
    %5721 = vdwg.mxu0
    %5722 = vmatpush.bf16.msra.mxu0 %v3716
    %5723 = vmatpush.bf16.msra.mxu0 %v3715
    %5724 = vmatpush.bf16.msra.mxu0 %v3714
    %5725 = vmatpush.bf16.msra.mxu0 %v3713
    %5726 = vmatpush.bf16.msra.mxu0 %v3712
    %5727 = vmatpush.bf16.msra.mxu0 %v3711
    %5728 = vmatpush.bf16.msra.mxu0 %v3710
    %5729 = vmatpush.bf16.msra.mxu0 %v3709
    %5730 = vmatmul.bf16.gmra.mxu0 %v5606
    %v5731 = vpop.f32.mrf.mxu0
    %v5732 = vadd.f32 %v5703, %v5731
    %v5733 = vpop.f32.mrf.mxu0
    %v5734 = vadd.f32 %v5705, %v5733
    %5735 = vmatmul.bf16.gmra.mxu0 %v5614
    %v5736 = vpop.f32.mrf.mxu0
    %v5737 = vadd.f32 %v5708, %v5736
    %v5738 = vpop.f32.mrf.mxu0
    %v5739 = vadd.f32 %v5710, %v5738
    %5740 = vmatmul.bf16.gmra.mxu0 %v5622
    %v5741 = vpop.f32.mrf.mxu0
    %v5742 = vadd.f32 %v5713, %v5741
    %v5743 = vpop.f32.mrf.mxu0
    %v5744 = vadd.f32 %v5715, %v5743
    %5745 = vmatmul.bf16.gmra.mxu0 %v5630
    %v5746 = vpop.f32.mrf.mxu0
    %v5747 = vadd.f32 %v5718, %v5746
    %v5748 = vpop.f32.mrf.mxu0
    %v5749 = vadd.f32 %v5720, %v5748
    %5750 = vdwg.mxu0
    %5751 = vmatpush.bf16.msra.mxu0 %v3724
    %5752 = vmatpush.bf16.msra.mxu0 %v3723
    %5753 = vmatpush.bf16.msra.mxu0 %v3722
    %5754 = vmatpush.bf16.msra.mxu0 %v3721
    %5755 = vmatpush.bf16.msra.mxu0 %v3720
    %5756 = vmatpush.bf16.msra.mxu0 %v3719
    %5757 = vmatpush.bf16.msra.mxu0 %v3718
    %5758 = vmatpush.bf16.msra.mxu0 %v3717
    %5759 = vmatmul.bf16.gmra.mxu0 %v5607
    %v5760 = vpop.f32.mrf.mxu0
    %v5761 = vadd.f32 %v5732, %v5760
    %v5762 = vpop.f32.mrf.mxu0
    %v5763 = vadd.f32 %v5734, %v5762
    %5764 = vmatmul.bf16.gmra.mxu0 %v5615
    %v5765 = vpop.f32.mrf.mxu0
    %v5766 = vadd.f32 %v5737, %v5765
    %v5767 = vpop.f32.mrf.mxu0
    %v5768 = vadd.f32 %v5739, %v5767
    %5769 = vmatmul.bf16.gmra.mxu0 %v5623
    %v5770 = vpop.f32.mrf.mxu0
    %v5771 = vadd.f32 %v5742, %v5770
    %v5772 = vpop.f32.mrf.mxu0
    %v5773 = vadd.f32 %v5744, %v5772
    %5774 = vmatmul.bf16.gmra.mxu0 %v5631
    %v5775 = vpop.f32.mrf.mxu0
    %v5776 = vadd.f32 %v5747, %v5775
    %v5777 = vpop.f32.mrf.mxu0
    %v5778 = vadd.f32 %v5749, %v5777
    %5779 = vdwg.mxu0
    %5780 = vmatpush.bf16.msra.mxu0 %v3732
    %5781 = vmatpush.bf16.msra.mxu0 %v3731
    %5782 = vmatpush.bf16.msra.mxu0 %v3730
    %5783 = vmatpush.bf16.msra.mxu0 %v3729
    %5784 = vmatpush.bf16.msra.mxu0 %v3728
    %5785 = vmatpush.bf16.msra.mxu0 %v3727
    %5786 = vmatpush.bf16.msra.mxu0 %v3726
    %5787 = vmatpush.bf16.msra.mxu0 %v3725
    %5788 = vmatmul.bf16.gmra.mxu0 %v5608
    %v5789 = vpop.f32.mrf.mxu0
    %v5790 = vadd.f32 %v5761, %v5789
    %v5791 = vpop.f32.mrf.mxu0
    %v5792 = vadd.f32 %v5763, %v5791
    %5793 = vmatmul.bf16.gmra.mxu0 %v5616
    %v5794 = vpop.f32.mrf.mxu0
    %v5795 = vadd.f32 %v5766, %v5794
    %v5796 = vpop.f32.mrf.mxu0
    %v5797 = vadd.f32 %v5768, %v5796
    %5798 = vmatmul.bf16.gmra.mxu0 %v5624
    %v5799 = vpop.f32.mrf.mxu0
    %v5800 = vadd.f32 %v5771, %v5799
    %v5801 = vpop.f32.mrf.mxu0
    %v5802 = vadd.f32 %v5773, %v5801
    %5803 = vmatmul.bf16.gmra.mxu0 %v5632
    %v5804 = vpop.f32.mrf.mxu0
    %v5805 = vadd.f32 %v5776, %v5804
    %v5806 = vpop.f32.mrf.mxu0
    %v5807 = vadd.f32 %v5778, %v5806
    %5808 = vdwg.mxu0
    %5809 = vmatpush.bf16.msra.mxu0 %v3740
    %5810 = vmatpush.bf16.msra.mxu0 %v3739
    %5811 = vmatpush.bf16.msra.mxu0 %v3738
    %5812 = vmatpush.bf16.msra.mxu0 %v3737
    %5813 = vmatpush.bf16.msra.mxu0 %v3736
    %5814 = vmatpush.bf16.msra.mxu0 %v3735
    %5815 = vmatpush.bf16.msra.mxu0 %v3734
    %5816 = vmatpush.bf16.msra.mxu0 %v3733
    %5817 = vmatmul.bf16.gmra.mxu0 %v5609
    %v5818 = vpop.f32.mrf.mxu0
    %v5819 = vadd.f32 %v5790, %v5818
    %v5820 = vpop.f32.mrf.mxu0
    %v5821 = vadd.f32 %v5792, %v5820
    %5822 = vmatmul.bf16.gmra.mxu0 %v5617
    %v5823 = vpop.f32.mrf.mxu0
    %v5824 = vadd.f32 %v5795, %v5823
    %v5825 = vpop.f32.mrf.mxu0
    %v5826 = vadd.f32 %v5797, %v5825
    %5827 = vmatmul.bf16.gmra.mxu0 %v5625
    %v5828 = vpop.f32.mrf.mxu0
    %v5829 = vadd.f32 %v5800, %v5828
    %v5830 = vpop.f32.mrf.mxu0
    %v5831 = vadd.f32 %v5802, %v5830
    %5832 = vmatmul.bf16.gmra.mxu0 %v5633
    %v5833 = vpop.f32.mrf.mxu0
    %v5834 = vadd.f32 %v5805, %v5833
    %v5835 = vpop.f32.mrf.mxu0
    %v5836 = vadd.f32 %v5807, %v5835
    %5837 = vdwg.mxu0
    %5838 = vmatpush.bf16.msra.mxu0 %v3748
    %5839 = vmatpush.bf16.msra.mxu0 %v3747
    %5840 = vmatpush.bf16.msra.mxu0 %v3746
    %5841 = vmatpush.bf16.msra.mxu0 %v3745
    %5842 = vmatpush.bf16.msra.mxu0 %v3744
    %5843 = vmatpush.bf16.msra.mxu0 %v3743
    %5844 = vmatpush.bf16.msra.mxu0 %v3742
    %5845 = vmatpush.bf16.msra.mxu0 %v3741
    %5846 = vmatmul.bf16.gmra.mxu0 %v5610
    %v5847 = vpop.f32.mrf.mxu0
    %v5848 = vadd.f32 %v5819, %v5847
    %v5849 = vpop.f32.mrf.mxu0
    %v5850 = vadd.f32 %v5821, %v5849
    %5851 = vmatmul.bf16.gmra.mxu0 %v5618
    %v5852 = vpop.f32.mrf.mxu0
    %v5853 = vadd.f32 %v5824, %v5852
    %v5854 = vpop.f32.mrf.mxu0
    %v5855 = vadd.f32 %v5826, %v5854
    %5856 = vmatmul.bf16.gmra.mxu0 %v5626
    %v5857 = vpop.f32.mrf.mxu0
    %v5858 = vadd.f32 %v5829, %v5857
    %v5859 = vpop.f32.mrf.mxu0
    %v5860 = vadd.f32 %v5831, %v5859
    %5861 = vmatmul.bf16.gmra.mxu0 %v5634
    %v5862 = vpop.f32.mrf.mxu0
    %v5863 = vadd.f32 %v5834, %v5862
    %v5864 = vpop.f32.mrf.mxu0
    %v5865 = vadd.f32 %v5836, %v5864
    %5866 = vdwg.mxu0
    %v5867 = vmax.f32 %v5848, 0.0
    %v5868 = vmax.f32 %v5850, 0.0
    %v5869 = vmax.f32 %v5853, 0.0
    %v5870 = vmax.f32 %v5855, 0.0
    %v5871 = vmax.f32 %v5858, 0.0
    %v5872 = vmax.f32 %v5860, 0.0
    %v5873 = vmax.f32 %v5863, 0.0
    %v5874 = vmax.f32 %v5865, 0.0
    %v5875 = vpack.c.bf16 %v5868, %v5867
    %v5876 = vpack.c.bf16 %v5870, %v5869
    %v5877 = vpack.c.bf16 %v5872, %v5871
    %v5878 = vpack.c.bf16 %v5874, %v5873
    %5879 = vmatpush.bf16.msra.mxu0 %v4097
    %5880 = vmatpush.bf16.msra.mxu0 %v4096
    %5881 = vmatpush.bf16.msra.mxu0 %v4095
    %5882 = vmatpush.bf16.msra.mxu0 %v4094
    %5883 = vmatpush.bf16.msra.mxu0 %v4093
    %5884 = vmatpush.bf16.msra.mxu0 %v4092
    %5885 = vmatpush.bf16.msra.mxu0 %v4091
    %5886 = vmatpush.bf16.msra.mxu0 %v4090
    %5887 = vmatmul.bf16.gmra.mxu0 %v5875
    %v5888 = vpop.f32.mrf.mxu0
    %v5889 = vadd.f32 %v4057, %v5888
    %v5890 = vpop.f32.mrf.mxu0
    %v5891 = vadd.f32 %v4057, %v5890
    %5892 = vmatmul.bf16.gmra.mxu0 %v5876
    %v5893 = vpop.f32.mrf.mxu0
    %v5894 = vadd.f32 %v4057, %v5893
    %v5895 = vpop.f32.mrf.mxu0
    %v5896 = vadd.f32 %v4057, %v5895
    %5897 = vmatmul.bf16.gmra.mxu0 %v5877
    %v5898 = vpop.f32.mrf.mxu0
    %v5899 = vadd.f32 %v4057, %v5898
    %v5900 = vpop.f32.mrf.mxu0
    %v5901 = vadd.f32 %v4057, %v5900
    %5902 = vmatmul.bf16.gmra.mxu0 %v5878
    %v5903 = vpop.f32.mrf.mxu0
    %v5904 = vadd.f32 %v4057, %v5903
    %v5905 = vpop.f32.mrf.mxu0
    %v5906 = vadd.f32 %v4057, %v5905
    %5907 = vdwg.mxu0
    %5908 = vst.msk [vmem:[#allocation3 + $0x40] sm:$0xff] %vm4135, %v5889
    %5909 = vst.msk [vmem:[#allocation3 + $0x48] sm:$0xff] %vm4135, %v5891
    %5910 = vst.msk [vmem:[#allocation3 + $0x50] sm:$0xff] %vm4135, %v5894
    %5911 = vst.msk [vmem:[#allocation3 + $0x58] sm:$0xff] %vm4135, %v5896
    %5912 = vst.msk [vmem:[#allocation3 + $0x60] sm:$0xff] %vm4135, %v5899
    %5913 = vst.msk [vmem:[#allocation3 + $0x68] sm:$0xff] %vm4135, %v5901
    %5914 = vst.msk [vmem:[#allocation3 + $0x70] sm:$0xff] %vm4135, %v5904
    %5915 = vst.msk [vmem:[#allocation3 + $0x78] sm:$0xff] %vm4135, %v5906
    // Predicated region
    $region38: #{critic_forward.1} parent=1 // pred_check
      _
    $region39: #{critic_forward.1} parent=1 // pred_check_branch
      %5917 = sbr.rel (0) target = $region41
    $region40: #{critic_forward.1} parent=1 // pred_region
      // Predicated region
      $region42: #{critic_forward.1} parent=40 // pred_check
        _
      $region43: #{critic_forward.1} parent=40 // pred_check_branch
        %5919 = sbr.rel (0) target = $region45
      $region44: #{critic_forward.1} parent=40 // pred_region
        // Predicated region
        $region46: #{critic_forward.1} parent=44 // pred_check
          _
        $region47: #{critic_forward.1} parent=44 // pred_check_branch
          %5921 = sbr.rel target = $region49
        $region48: #{critic_forward.1} parent=44 // pred_region
          // Predicated region
          $region61: #{critic_forward.1} parent=48 // pred_check
            _
          $region62: #{critic_forward.1} parent=48 // pred_check_branch
            %5937 = sbr.rel (0) target = $region64
          $region63: #{critic_forward.1} parent=48 // pred_region
            %s5939 = ssub.s32 4, 1
            loop: start=0, step=1, limit=1
            $region65: #{critic_forward.1} parent=63 // loop_pre_header
              _
            $region66: #{critic_forward.1} parent=63 // loop_header
              %s5941 = sphi 0, %s5945
              %p5942 = scmp.ge.s32.totalorder %s5941, 1
              %s5946 = sphi [#allocation3], [#allocation3]
              %s5947 = sphi %s9, %s9
            $region67: #{critic_forward.1} parent=63 // loop_header_branch
              %5944 = sbr.rel (%p5942) target = $region71
            $region68: #{critic_forward.1} parent=63 // loop_body
              %v5948 = vld [vmem:[%s5946] sm:%s5939]
              %5949 = vst [vmem:[%s5947] sm:%s5939] %v5948
            $region69: #{critic_forward.1} parent=63 // loop_footer
              %s5945 = sadd.s32 1, %s5941
            $region70: #{critic_forward.1} parent=63 // loop_footer_branch
              %5940 = sbr.rel target = $region66
            $region71: #{critic_forward.1} parent=63 // loop_exit
              _
          $region64: #{critic_forward.1} parent=48 // pred_fallthru
            _
        $region49: #{critic_forward.1} parent=44 // pred_fallthru
          _
        // Predicated region
        $region50: #{critic_forward.1} parent=44 // pred_check
          _
        $region51: #{critic_forward.1} parent=44 // pred_check_branch
          %5923 = sbr.rel (0) target = $region53
        $region52: #{critic_forward.1} parent=44 // pred_region
          %s5925 = ssub.s32 4, 1
          loop: start=0, step=1, limit=1
          $region54: #{critic_forward.1} parent=52 // loop_pre_header
            _
          $region55: #{critic_forward.1} parent=52 // loop_header
            %s5927 = sphi 0, %s5931
            %p5928 = scmp.ge.s32.totalorder %s5927, 1
            %s5932 = sphi [#allocation3], [#allocation3]
            %s5933 = sphi %s9, %s9
          $region56: #{critic_forward.1} parent=52 // loop_header_branch
            %5930 = sbr.rel (%p5928) target = $region60
          $region57: #{critic_forward.1} parent=52 // loop_body
            %v5934 = vld [vmem:[%s5932] sm:%s5925]
            %5935 = vst [vmem:[%s5933] sm:%s5925] %v5934
          $region58: #{critic_forward.1} parent=52 // loop_footer
            %s5931 = sadd.s32 1, %s5927
          $region59: #{critic_forward.1} parent=52 // loop_footer_branch
            %5926 = sbr.rel target = $region55
          $region60: #{critic_forward.1} parent=52 // loop_exit
            _
        $region53: #{critic_forward.1} parent=44 // pred_fallthru
          _
      $region45: #{critic_forward.1} parent=40 // pred_fallthru
        _
      %5950 = vnop
    $region41: #{critic_forward.1} parent=1 // pred_fallthru
      _
    // Predicated region
    $region72: #{critic_forward.1} parent=1 // pred_check
      _
    $region73: #{critic_forward.1} parent=1 // pred_check_branch
      %5952 = sbr.rel (0) target = $region75
    $region74: #{critic_forward.1} parent=1 // pred_region
      _
    $region75: #{critic_forward.1} parent=1 // pred_fallthru
      _

</llo_original>
